<compile_context>
chip_gen: v7x
topology: tpu7x:2x2x1
jax: 0.10.0
libtpu: 0.0.40
codegen_flags: <defaults>
</compile_context>

<pallas_src>
import jax
import jax.numpy as jnp
from jax import lax
from jax.experimental import pallas as pl
from jax.experimental.pallas import tpu as pltpu

# ---- module constants (from the PyTorch source) ----
NUM_ITEMS = 3883
NUM_YEARS = 81
EMB_SIZE = 128
NUM_AGES = 7
NUM_OCCUPS = 21
NUM_USERS = 6040
NUM_ZIPS = 3439

HIDDEN = 100            # logical hidden width (nn.Linear(896, 100))
H2 = 50                 # logical second hidden width
H1_PAD = 128            # padded widths (lane / MXU friendly, zero-padded weights)
H2_PAD = 128

USER_REP_DIM = EMB_SIZE * 5      # 640
ITEM_REP_DIM = EMB_SIZE * 2      # 256
INPUT_DIM = USER_REP_DIM + ITEM_REP_DIM  # 896 (use_impression_feats=False)
NUM_CHUNKS = 7

DEFAULT_TILE_B = 2048   # 7 chunks x 2048 x 256 B x 2 buffers ~= 7.3 MiB of VMEM streams


def _round_up(n, m):
    return ((n + m - 1) // m) * m


def _choose_grid(B, max_tile=DEFAULT_TILE_B):
    """Pick (num_tiles, tile_b, padded_B): tile multiple of 256, small padding waste,
    and >= 2 grid steps whenever possible so the 'parallel' axis feeds both v7x TCs."""
    num_tiles = max(1, -(-B // max_tile))
    if num_tiles == 1 and B > 256:
        num_tiles = 2
    tb = _round_up(-(-B // num_tiles), 256)
    return num_tiles, tb, num_tiles * tb


# --------------------------------------------------------------------------
# Pallas kernel: fused 3-layer MLP with ReLU (the hot path of the simulator)
# --------------------------------------------------------------------------
def _mlp_kernel(u_user, u_gender, u_age, u_occ, u_zip, it_item, it_year,
                w1_ref, b1_ref, w2_ref, b2_ref, w3_ref, b3_ref, o_ref):
    chunks = (u_user, u_gender, u_age, u_occ, u_zip, it_item, it_year)

    # Layer 1: 7-way split matmul against static 128-row slices of the resident w1.
    # (No (tb, 896) concat buffer; identical MXU FLOPs, f32 accumulation.)
    h1 = jnp.dot(chunks[0][...], w1_ref[0:EMB_SIZE, :],
                 preferred_element_type=jnp.float32)
    for c in range(1, NUM_CHUNKS):
        h1 = h1 + jnp.dot(chunks[c][...],
                          w1_ref[c * EMB_SIZE:(c + 1) * EMB_SIZE, :],
                          preferred_element_type=jnp.float32)
    h1 = jnp.maximum(h1 + b1_ref[...], 0.0).astype(jnp.bfloat16)     # (tb, 128)

    # Layer 2: (tb,128) @ (128,128)
    h2 = jnp.dot(h1, w2_ref[...], preferred_element_type=jnp.float32) + b2_ref[...]
    h2 = jnp.maximum(h2, 0.0).astype(jnp.bfloat16)                   # (tb, 128)

    # Layer 3: contract the single real output column -> lane-dense (1, tb) logits.
    logits = lax.dot_general(w3_ref[...], h2, (((1,), (1,)), ((), ())),
                             preferred_element_type=jnp.float32)     # (1, tb)
    o_ref[0] = logits + b3_ref[0, 0]


def impression_mlp(chunks, w1, b1, w2, b2, w3, b3, tb, num_tiles):
    """chunks: 7 bf16 arrays (Bp, 128) with Bp == num_tiles*tb. Returns (num_tiles,1,tb) f32."""
    Bp = chunks[0].shape[0]
    assert Bp == num_tiles * tb

    chunk_spec = pl.BlockSpec((tb, EMB_SIZE), lambda i: (i, 0))

    def const_spec(shape):  # constant index_map -> block stays resident in VMEM
        return pl.BlockSpec(shape, lambda i: (0,) * len(shape))

    smem_spec = pl.BlockSpec(memory_space=pltpu.MemorySpace.SMEM)     # b3 scalar

    out = pl.pallas_call(
        _mlp_kernel,
        out_shape=jax.ShapeDtypeStruct((num_tiles, 1, tb), jnp.float32),
        grid=(num_tiles,),
        in_specs=[chunk_spec] * NUM_CHUNKS + [
            const_spec(w1.shape), const_spec(b1.shape),
            const_spec(w2.shape), const_spec(b2.shape),
            const_spec(w3.shape), smem_spec,
        ],
        out_specs=pl.BlockSpec((1, 1, tb), lambda i: (i, 0, 0)),
        compiler_params=pltpu.CompilerParams(
            dimension_semantics=("parallel",),        # shard batch tiles across TCs
            vmem_limit_bytes=32 * 1024 * 1024),       # >= defaults on v5e/v6e/v7x
    )(*chunks, w1, b1, w2, b2, w3, b3)
    return out


# --------------------------------------------------------------------------
# Parameter init (deterministic, synthetic — mirrors the module's __init__)
# --------------------------------------------------------------------------
def init_params(key):
    keys = jax.random.split(key, 13)
    p = {}

    def emb(k, n):  # frozen pretrained tables in the original; synthetic bf16 here
        return (0.02 * jax.random.normal(k, (n, EMB_SIZE), jnp.float32)).astype(jnp.bfloat16)

    p["item_emb"]   = emb(keys[0], NUM_ITEMS + 1)
    p["year_emb"]   = emb(keys[1], NUM_YEARS)
    p["user_emb"]   = emb(keys[2], NUM_USERS + 1)
    p["gender_emb"] = emb(keys[3], 2)
    p["age_emb"]    = emb(keys[4], NUM_AGES)
    p["occup_emb"]  = emb(keys[5], NUM_OCCUPS)
    p["zip_emb"]    = emb(keys[6], NUM_ZIPS)

    def lin(kw, kb, fan_in, fan_out, pad_in, pad_out):
        lim = 1.0 / (fan_in ** 0.5)
        w = jax.random.uniform(kw, (fan_in, fan_out), jnp.float32, -lim, lim)
        b = jax.random.uniform(kb, (fan_out,), jnp.float32, -lim, lim)
        wp = jnp.zeros((pad_in, pad_out), jnp.float32).at[:fan_in, :fan_out].set(w)
        bp = jnp.zeros((1, pad_out), jnp.float32).at[0, :fan_out].set(b)
        return wp.astype(jnp.bfloat16), bp

    p["w1"], p["b1"] = lin(keys[7],  keys[8],  INPUT_DIM, HIDDEN, INPUT_DIM, H1_PAD)
    p["w2"], p["b2"] = lin(keys[9],  keys[10], HIDDEN,    H2,     H1_PAD,    H2_PAD)

    # Layer 3 (50 -> 1): store the single output column as a (1, H2_PAD) bf16 row
    # (zero-padded past H2) and the bias as a (1,1) f32 scalar (SMEM in the kernel).
    lim3 = 1.0 / (H2 ** 0.5)
    w3 = jax.random.uniform(keys[11], (H2,), jnp.float32, -lim3, lim3)
    p["w3"] = jnp.zeros((1, H2_PAD), jnp.float32).at[0, :H2].set(w3).astype(jnp.bfloat16)
    p["b3"] = jax.random.uniform(keys[12], (1, 1), jnp.float32, -lim3, lim3)
    return p


# --------------------------------------------------------------------------
# Forward pass (glue: embedding gathers; Pallas: fused 3-layer MLP)
# --------------------------------------------------------------------------
def gather_chunks(params, user_cat, item_cat):
    # TODO(synk): fuse these gathers into the Pallas kernel (all 7 tables ~3.4 MiB bf16
    # fit resident in VMEM); kept as XLA gathers here so the kernel only streams the
    # pre-gathered (B, 128) chunks.
    return [
        params["user_emb"][user_cat[:, 0] - 1],
        params["gender_emb"][user_cat[:, 1]],
        params["age_emb"][user_cat[:, 2]],
        params["occup_emb"][user_cat[:, 3]],
        params["zip_emb"][user_cat[:, 4]],
        params["item_emb"][item_cat[:, 0] - 1],
        params["year_emb"][item_cat[:, 1]],
    ]


def impression_simulator_forward(params, user_cat, item_cat):
    B = user_cat.shape[0]
    num_tiles, tb, Bp = _choose_grid(B)
    if Bp != B:
        # Pad the tiny int32 index arrays (not the gathered chunks): index 1 is valid
        # for every table, and the resulting garbage rows are only ever sliced off.
        user_cat = jnp.pad(user_cat, ((0, Bp - B), (0, 0)), constant_values=1)
        item_cat = jnp.pad(item_cat, ((0, Bp - B), (0, 0)), constant_values=1)
    chunks = gather_chunks(params, user_cat, item_cat)          # 7 x (Bp, 128) bf16
    out = impression_mlp(chunks, params["w1"], params["b1"],
                         params["w2"], params["b2"],
                         params["w3"], params["b3"],
                         tb=tb, num_tiles=num_tiles)            # (num_tiles, 1, tb) f32
    # TODO(synk): use_impression_feats=True branch (extra scalar real feature) not wired.
    # Original module does .squeeze(); for B > 1 that is shape (B,) (matches here).
    return out.reshape(-1)[:B]


if __name__ == "__main__":
    key = jax.random.PRNGKey(0)
    pkey, ukey, ikey = jax.random.split(key, 3)
    params = init_params(pkey)

    B = 16
    uk = jax.random.split(ukey, 5)
    user_cat = jnp.stack([
        jax.random.randint(uk[0], (B,), 1, NUM_USERS + 1),   # user id (1-based)
        jax.random.randint(uk[1], (B,), 0, 2),               # gender
        jax.random.randint(uk[2], (B,), 0, NUM_AGES),        # age
        jax.random.randint(uk[3], (B,), 0, NUM_OCCUPS),      # occupation
        jax.random.randint(uk[4], (B,), 0, NUM_ZIPS),        # zip
    ], axis=1)
    ik = jax.random.split(ikey, 2)
    item_cat = jnp.stack([
        jax.random.randint(ik[0], (B,), 1, NUM_ITEMS + 1),   # item id (1-based)
        jax.random.randint(ik[1], (B,), 0, NUM_YEARS),       # year
    ], axis=1)

    out = impression_simulator_forward(params, user_cat, item_cat)
    out = jax.block_until_ready(out)
    assert out.shape == (B,), out.shape

    # sanity check against a pure-JAX reference of the same (bf16-matmul) computation
    chunks = gather_chunks(params, user_cat, item_cat)
    x = jnp.concatenate(chunks, axis=1)                                        # (B, 896) bf16
    h1 = jnp.maximum(jnp.dot(x, params["w1"],
                             preferred_element_type=jnp.float32) + params["b1"], 0.0)
    h2 = jnp.maximum(jnp.dot(h1.astype(jnp.bfloat16), params["w2"],
                             preferred_element_type=jnp.float32) + params["b2"], 0.0)
    ref = jnp.dot(h2.astype(jnp.bfloat16), params["w3"].T,
                  preferred_element_type=jnp.float32)[:, 0] + params["b3"][0, 0]
    assert jnp.allclose(out, ref, atol=5e-3, rtol=5e-3), (out, ref)

    print("KERNEL_OK")
</pallas_src>

<mosaic_0001>
module attributes {stable_mosaic.version = 11 : i64} {
  func.func @_mlp_kernel(%arg0: i32, %arg1: memref<256x128xbf16, #tpu.memory_space<vmem>>, %arg2: memref<256x128xbf16, #tpu.memory_space<vmem>>, %arg3: memref<256x128xbf16, #tpu.memory_space<vmem>>, %arg4: memref<256x128xbf16, #tpu.memory_space<vmem>>, %arg5: memref<256x128xbf16, #tpu.memory_space<vmem>>, %arg6: memref<256x128xbf16, #tpu.memory_space<vmem>>, %arg7: memref<256x128xbf16, #tpu.memory_space<vmem>>, %arg8: memref<896x128xbf16, #tpu.memory_space<vmem>>, %arg9: memref<1x128xf32, #tpu.memory_space<vmem>>, %arg10: memref<128x128xbf16, #tpu.memory_space<vmem>>, %arg11: memref<1x128xf32, #tpu.memory_space<vmem>>, %arg12: memref<1x128xbf16, #tpu.memory_space<vmem>>, %arg13: memref<1x1xf32, #tpu.memory_space<smem>>, %arg14: memref<1x1x256xf32, #tpu.memory_space<vmem>>) attributes {dimension_semantics = [#tpu.dimension_semantics<parallel>], iteration_bounds = array<i64: 1>, scalar_prefetch = 0 : i64, scratch_operands = 0 : i64, tpu.core_type = #tpu.core_type<tc>, window_params = [{transform_indices = @transform_0, window_bounds = array<i64: 256, 128>}, {transform_indices = @transform_1, window_bounds = array<i64: 256, 128>}, {transform_indices = @transform_2, window_bounds = array<i64: 256, 128>}, {transform_indices = @transform_3, window_bounds = array<i64: 256, 128>}, {transform_indices = @transform_4, window_bounds = array<i64: 256, 128>}, {transform_indices = @transform_5, window_bounds = array<i64: 256, 128>}, {transform_indices = @transform_6, window_bounds = array<i64: 256, 128>}, {pipeline_mode = #tpu.pipeline_mode<synchronous>, transform_indices = @transform_7, window_bounds = array<i64: 896, 128>}, {pipeline_mode = #tpu.pipeline_mode<synchronous>, transform_indices = @transform_8, window_bounds = array<i64: 1, 128>}, {pipeline_mode = #tpu.pipeline_mode<synchronous>, transform_indices = @transform_9, window_bounds = array<i64: 128, 128>}, {pipeline_mode = #tpu.pipeline_mode<synchronous>, transform_indices = @transform_10, window_bounds = array<i64: 1, 128>}, {pipeline_mode = #tpu.pipeline_mode<synchronous>, transform_indices = @transform_11, window_bounds = array<i64: 1, 128>}, {transform_indices = @transform_12, window_bounds = array<i64: 1, 1>}, {transform_indices = @transform_13, window_bounds = array<i64: 1, 1, 256>}]} {
    %c0 = arith.constant 0 : index
    %c0_0 = arith.constant 0 : index
    %0 = vector.load %arg1[%c0, %c0_0] : memref<256x128xbf16, #tpu.memory_space<vmem>>, vector<256x128xbf16>
    %c0_1 = arith.constant 0 : index
    %c0_2 = arith.constant 0 : index
    %1 = vector.load %arg8[%c0_1, %c0_2] : memref<896x128xbf16, #tpu.memory_space<vmem>>, vector<128x128xbf16>
    %cst = arith.constant dense<0.000000e+00> : vector<256x128xf32>
    %2 = tpu.matmul %0, %1, %cst {dimension_numbers = #tpu.dot_dimension_numbers<[1], [0], [0], [1], [0, 0, 1, 1], [], []>} : vector<256x128xbf16>, vector<128x128xbf16>, vector<256x128xf32> -> vector<256x128xf32>
    %c0_3 = arith.constant 0 : index
    %c0_4 = arith.constant 0 : index
    %3 = vector.load %arg2[%c0_3, %c0_4] : memref<256x128xbf16, #tpu.memory_space<vmem>>, vector<256x128xbf16>
    %c128 = arith.constant 128 : index
    %c0_5 = arith.constant 0 : index
    %4 = vector.load %arg8[%c128, %c0_5] : memref<896x128xbf16, #tpu.memory_space<vmem>>, vector<128x128xbf16>
    %cst_6 = arith.constant dense<0.000000e+00> : vector<256x128xf32>
    %5 = tpu.matmul %3, %4, %cst_6 {dimension_numbers = #tpu.dot_dimension_numbers<[1], [0], [0], [1], [0, 0, 1, 1], [], []>} : vector<256x128xbf16>, vector<128x128xbf16>, vector<256x128xf32> -> vector<256x128xf32>
    %6 = arith.addf %2, %5 : vector<256x128xf32>
    %c0_7 = arith.constant 0 : index
    %c0_8 = arith.constant 0 : index
    %7 = vector.load %arg3[%c0_7, %c0_8] : memref<256x128xbf16, #tpu.memory_space<vmem>>, vector<256x128xbf16>
    %c256 = arith.constant 256 : index
    %c0_9 = arith.constant 0 : index
    %8 = vector.load %arg8[%c256, %c0_9] : memref<896x128xbf16, #tpu.memory_space<vmem>>, vector<128x128xbf16>
    %cst_10 = arith.constant dense<0.000000e+00> : vector<256x128xf32>
    %9 = tpu.matmul %7, %8, %cst_10 {dimension_numbers = #tpu.dot_dimension_numbers<[1], [0], [0], [1], [0, 0, 1, 1], [], []>} : vector<256x128xbf16>, vector<128x128xbf16>, vector<256x128xf32> -> vector<256x128xf32>
    %10 = arith.addf %6, %9 : vector<256x128xf32>
    %c0_11 = arith.constant 0 : index
    %c0_12 = arith.constant 0 : index
    %11 = vector.load %arg4[%c0_11, %c0_12] : memref<256x128xbf16, #tpu.memory_space<vmem>>, vector<256x128xbf16>
    %c384 = arith.constant 384 : index
    %c0_13 = arith.constant 0 : index
    %12 = vector.load %arg8[%c384, %c0_13] : memref<896x128xbf16, #tpu.memory_space<vmem>>, vector<128x128xbf16>
    %cst_14 = arith.constant dense<0.000000e+00> : vector<256x128xf32>
    %13 = tpu.matmul %11, %12, %cst_14 {dimension_numbers = #tpu.dot_dimension_numbers<[1], [0], [0], [1], [0, 0, 1, 1], [], []>} : vector<256x128xbf16>, vector<128x128xbf16>, vector<256x128xf32> -> vector<256x128xf32>
    %14 = arith.addf %10, %13 : vector<256x128xf32>
    %c0_15 = arith.constant 0 : index
    %c0_16 = arith.constant 0 : index
    %15 = vector.load %arg5[%c0_15, %c0_16] : memref<256x128xbf16, #tpu.memory_space<vmem>>, vector<256x128xbf16>
    %c512 = arith.constant 512 : index
    %c0_17 = arith.constant 0 : index
    %16 = vector.load %arg8[%c512, %c0_17] : memref<896x128xbf16, #tpu.memory_space<vmem>>, vector<128x128xbf16>
    %cst_18 = arith.constant dense<0.000000e+00> : vector<256x128xf32>
    %17 = tpu.matmul %15, %16, %cst_18 {dimension_numbers = #tpu.dot_dimension_numbers<[1], [0], [0], [1], [0, 0, 1, 1], [], []>} : vector<256x128xbf16>, vector<128x128xbf16>, vector<256x128xf32> -> vector<256x128xf32>
    %18 = arith.addf %14, %17 : vector<256x128xf32>
    %c0_19 = arith.constant 0 : index
    %c0_20 = arith.constant 0 : index
    %19 = vector.load %arg6[%c0_19, %c0_20] : memref<256x128xbf16, #tpu.memory_space<vmem>>, vector<256x128xbf16>
    %c640 = arith.constant 640 : index
    %c0_21 = arith.constant 0 : index
    %20 = vector.load %arg8[%c640, %c0_21] : memref<896x128xbf16, #tpu.memory_space<vmem>>, vector<128x128xbf16>
    %cst_22 = arith.constant dense<0.000000e+00> : vector<256x128xf32>
    %21 = tpu.matmul %19, %20, %cst_22 {dimension_numbers = #tpu.dot_dimension_numbers<[1], [0], [0], [1], [0, 0, 1, 1], [], []>} : vector<256x128xbf16>, vector<128x128xbf16>, vector<256x128xf32> -> vector<256x128xf32>
    %22 = arith.addf %18, %21 : vector<256x128xf32>
    %c0_23 = arith.constant 0 : index
    %c0_24 = arith.constant 0 : index
    %23 = vector.load %arg7[%c0_23, %c0_24] : memref<256x128xbf16, #tpu.memory_space<vmem>>, vector<256x128xbf16>
    %c768 = arith.constant 768 : index
    %c0_25 = arith.constant 0 : index
    %24 = vector.load %arg8[%c768, %c0_25] : memref<896x128xbf16, #tpu.memory_space<vmem>>, vector<128x128xbf16>
    %cst_26 = arith.constant dense<0.000000e+00> : vector<256x128xf32>
    %25 = tpu.matmul %23, %24, %cst_26 {dimension_numbers = #tpu.dot_dimension_numbers<[1], [0], [0], [1], [0, 0, 1, 1], [], []>} : vector<256x128xbf16>, vector<128x128xbf16>, vector<256x128xf32> -> vector<256x128xf32>
    %26 = arith.addf %22, %25 : vector<256x128xf32>
    %c0_27 = arith.constant 0 : index
    %c0_28 = arith.constant 0 : index
    %27 = vector.load %arg9[%c0_27, %c0_28] : memref<1x128xf32, #tpu.memory_space<vmem>>, vector<1x128xf32>
    %28 = vector.broadcast %27 : vector<1x128xf32> to vector<256x128xf32>
    %29 = arith.addf %26, %28 : vector<256x128xf32>
    %cst_29 = arith.constant 0.000000e+00 : f32
    %30 = vector.broadcast %cst_29 : f32 to vector<256x128xf32>
    %31 = arith.maximumf %29, %30 : vector<256x128xf32>
    %32 = arith.truncf %31 : vector<256x128xf32> to vector<256x128xbf16>
    %c0_30 = arith.constant 0 : index
    %c0_31 = arith.constant 0 : index
    %33 = vector.load %arg10[%c0_30, %c0_31] : memref<128x128xbf16, #tpu.memory_space<vmem>>, vector<128x128xbf16>
    %cst_32 = arith.constant dense<0.000000e+00> : vector<256x128xf32>
    %34 = tpu.matmul %32, %33, %cst_32 {dimension_numbers = #tpu.dot_dimension_numbers<[1], [0], [0], [1], [0, 0, 1, 1], [], []>} : vector<256x128xbf16>, vector<128x128xbf16>, vector<256x128xf32> -> vector<256x128xf32>
    %c0_33 = arith.constant 0 : index
    %c0_34 = arith.constant 0 : index
    %35 = vector.load %arg11[%c0_33, %c0_34] : memref<1x128xf32, #tpu.memory_space<vmem>>, vector<1x128xf32>
    %36 = vector.broadcast %35 : vector<1x128xf32> to vector<256x128xf32>
    %37 = arith.addf %34, %36 : vector<256x128xf32>
    %cst_35 = arith.constant 0.000000e+00 : f32
    %38 = vector.broadcast %cst_35 : f32 to vector<256x128xf32>
    %39 = arith.maximumf %37, %38 : vector<256x128xf32>
    %40 = arith.truncf %39 : vector<256x128xf32> to vector<256x128xbf16>
    %c0_36 = arith.constant 0 : index
    %c0_37 = arith.constant 0 : index
    %41 = vector.load %arg12[%c0_36, %c0_37] : memref<1x128xbf16, #tpu.memory_space<vmem>>, vector<1x128xbf16>
    %cst_38 = arith.constant dense<0.000000e+00> : vector<1x256xf32>
    %42 = tpu.matmul %41, %40, %cst_38 {dimension_numbers = #tpu.dot_dimension_numbers<[1], [1], [0], [0], [0, 0, 1, 0], [], []>} : vector<1x128xbf16>, vector<256x128xbf16>, vector<1x256xf32> -> vector<1x256xf32>
    %c0_39 = arith.constant 0 : index
    %c0_40 = arith.constant 0 : index
    %43 = memref.load %arg13[%c0_39, %c0_40] : memref<1x1xf32, #tpu.memory_space<smem>>
    %44 = vector.broadcast %43 : f32 to vector<1x256xf32>
    %45 = arith.addf %42, %44 : vector<1x256xf32>
    %c0_41 = arith.constant 0 : index
    %c0_42 = arith.constant 0 : index
    %c0_43 = arith.constant 0 : index
    %46 = vector.load %arg14[%c0_41, %c0_42, %c0_43] : memref<1x1x256xf32, #tpu.memory_space<vmem>>, vector<1x1x256xf32>
    %47 = vector.shape_cast %46 : vector<1x1x256xf32> to vector<1x256xf32>
    %48 = vector.shape_cast %45 : vector<1x256xf32> to vector<1x1x256xf32>
    tpu.vector_store %arg14[%c0_41, %c0_42, %c0_43], %48 {strides = array<i32>} : memref<1x1x256xf32, #tpu.memory_space<vmem>>, vector<1x1x256xf32>,
    return
  }
  func.func @transform_0(%arg0: i32) -> (i32, i32) {
    %c0_i32 = arith.constant 0 : i32
    %c0_i32_0 = arith.constant 0 : i32
    return %arg0, %c0_i32 : i32, i32
  }
  func.func @transform_1(%arg0: i32) -> (i32, i32) {
    %c0_i32 = arith.constant 0 : i32
    %c0_i32_0 = arith.constant 0 : i32
    return %arg0, %c0_i32 : i32, i32
  }
  func.func @transform_2(%arg0: i32) -> (i32, i32) {
    %c0_i32 = arith.constant 0 : i32
    %c0_i32_0 = arith.constant 0 : i32
    return %arg0, %c0_i32 : i32, i32
  }
  func.func @transform_3(%arg0: i32) -> (i32, i32) {
    %c0_i32 = arith.constant 0 : i32
    %c0_i32_0 = arith.constant 0 : i32
    return %arg0, %c0_i32 : i32, i32
  }
  func.func @transform_4(%arg0: i32) -> (i32, i32) {
    %c0_i32 = arith.constant 0 : i32
    %c0_i32_0 = arith.constant 0 : i32
    return %arg0, %c0_i32 : i32, i32
  }
  func.func @transform_5(%arg0: i32) -> (i32, i32) {
    %c0_i32 = arith.constant 0 : i32
    %c0_i32_0 = arith.constant 0 : i32
    return %arg0, %c0_i32 : i32, i32
  }
  func.func @transform_6(%arg0: i32) -> (i32, i32) {
    %c0_i32 = arith.constant 0 : i32
    %c0_i32_0 = arith.constant 0 : i32
    return %arg0, %c0_i32 : i32, i32
  }
  func.func @transform_7(%arg0: i32) -> (i32, i32) {
    %c0_i32 = arith.constant 0 : i32
    %c0_i32_0 = arith.constant 0 : i32
    %c0_i32_1 = arith.constant 0 : i32
    return %c0_i32, %c0_i32_0 : i32, i32
  }
  func.func @transform_8(%arg0: i32) -> (i32, i32) {
    %c0_i32 = arith.constant 0 : i32
    %c0_i32_0 = arith.constant 0 : i32
    %c0_i32_1 = arith.constant 0 : i32
    return %c0_i32, %c0_i32_0 : i32, i32
  }
  func.func @transform_9(%arg0: i32) -> (i32, i32) {
    %c0_i32 = arith.constant 0 : i32
    %c0_i32_0 = arith.constant 0 : i32
    %c0_i32_1 = arith.constant 0 : i32
    return %c0_i32, %c0_i32_0 : i32, i32
  }
  func.func @transform_10(%arg0: i32) -> (i32, i32) {
    %c0_i32 = arith.constant 0 : i32
    %c0_i32_0 = arith.constant 0 : i32
    %c0_i32_1 = arith.constant 0 : i32
    return %c0_i32, %c0_i32_0 : i32, i32
  }
  func.func @transform_11(%arg0: i32) -> (i32, i32) {
    %c0_i32 = arith.constant 0 : i32
    %c0_i32_0 = arith.constant 0 : i32
    %c0_i32_1 = arith.constant 0 : i32
    return %c0_i32, %c0_i32_0 : i32, i32
  }
  func.func @transform_12(%arg0: i32) -> (i32, i32) {
    %c0_i32 = arith.constant 0 : i32
    %c0_i32_0 = arith.constant 0 : i32
    %c0_i32_1 = arith.constant 0 : i32
    return %c0_i32, %c0_i32_0 : i32, i32
  }
  func.func @transform_13(%arg0: i32) -> (i32, i32, i32) {
    %c0_i32 = arith.constant 0 : i32
    %c0_i32_0 = arith.constant 0 : i32
    %c0_i32_1 = arith.constant 0 : i32
    return %arg0, %c0_i32, %c0_i32_0 : i32, i32, i32
  }
}

</mosaic_0001>

<llo_original>
// kernel: tpu_custom_call.1
$region0: #{tpu_custom_call.1}
  #allocation0 [shape = 'u32[]', space=smem, size = 0x4, offset = 0x4, fixed_abs, tag = 'smem constant byte address 0x4 - core index']
  #allocation1 [shape = 'u32[144,128]{1,0:T(1,128)}', space=vmem, size = 0x12000, scoped, tag = 'internal scratch']
  #allocation2 [shape = 'f32[1,1]{1,0:T(1,128)S(6)}', space=smem, size = 0x200, scoped, tag = 'scoped memory for tpu_custom_call.1']
  %s0 = inlined_call_operand.hbm [shape: bf16[256,128], index: 0, kind: input, shape index: {}]
  %s1 = inlined_call_operand.hbm [shape: bf16[256,128], index: 1, kind: input, shape index: {}]
  %s2 = inlined_call_operand.hbm [shape: bf16[256,128], index: 2, kind: input, shape index: {}]
  %s3 = inlined_call_operand.hbm [shape: bf16[256,128], index: 3, kind: input, shape index: {}]
  %s4 = inlined_call_operand.hbm [shape: bf16[256,128], index: 4, kind: input, shape index: {}]
  %s5 = inlined_call_operand.hbm [shape: bf16[256,128], index: 5, kind: input, shape index: {}]
  %s6 = inlined_call_operand.hbm [shape: bf16[256,128], index: 6, kind: input, shape index: {}]
  %s7 = inlined_call_operand.hbm [shape: bf16[896,128], index: 7, kind: input, shape index: {}]
  %s8 = inlined_call_operand.vmem [shape: f32[1,128], index: 8, kind: input, shape index: {}]
  %s9 = inlined_call_operand.hbm [shape: bf16[128,128], index: 9, kind: input, shape index: {}]
  %s10 = inlined_call_operand.vmem [shape: f32[1,128], index: 10, kind: input, shape index: {}]
  %s11 = inlined_call_operand.vmem [shape: bf16[1,128], index: 11, kind: input, shape index: {}]
  %s12 = inlined_call_operand.<no memory space> [shape: f32[1,1], index: 12, kind: input, shape index: {}]
  %s13 = inlined_call_operand.hbm [shape: f32[1,1,256], index: 13, kind: output, shape index: {}]
  %s14 = sld [smem:[#allocation0]]
  $region98: #{tpu_custom_call.1} parent=0
    _
  %s16 = ssub.s32 1, %s14
  %s17 = scalar_select 0, %s16, %s14
  %18 = sst [smem:[#allocation2]] %s12
  $region1: #{tpu_custom_call.1} parent=0
    #allocation3 [shape = 'u8[65536]{0}', space=vmem, size = 0x10000, scoped, tag = 'input window, operand 0, single buffered']
    #allocation4 [shape = 's32[1]{0}', space=sflag, size = 0x4, scoped, tag = 'scoped memory for tpu_custom_call.1']
    #allocation5 [shape = 's32[1]{0}', space=sflag, size = 0x4, scoped, tag = 'scoped memory for tpu_custom_call.1']
    #allocation6 [shape = 'u8[65536]{0}', space=vmem, size = 0x10000, scoped, tag = 'input window, operand 1, single buffered']
    #allocation7 [shape = 's32[1]{0}', space=sflag, size = 0x4, scoped, tag = 'scoped memory for tpu_custom_call.1']
    #allocation8 [shape = 'u8[65536]{0}', space=vmem, size = 0x10000, scoped, tag = 'input window, operand 2, single buffered']
    #allocation9 [shape = 'u8[65536]{0}', space=vmem, size = 0x10000, scoped, tag = 'input window, operand 3, single buffered']
    #allocation10 [shape = 's32[1]{0}', space=sflag, size = 0x4, scoped, tag = 'scoped memory for tpu_custom_call.1']
    #allocation11 [shape = 'u8[65536]{0}', space=vmem, size = 0x10000, scoped, tag = 'input window, operand 4, single buffered']
    #allocation12 [shape = 'u8[65536]{0}', space=vmem, size = 0x10000, scoped, tag = 'input window, operand 5, single buffered']
    #allocation13 [shape = 's32[1]{0}', space=sflag, size = 0x4, scoped, tag = 'scoped memory for tpu_custom_call.1']
    #allocation14 [shape = 'u8[65536]{0}', space=vmem, size = 0x10000, scoped, tag = 'input window, operand 6, single buffered']
    #allocation15 [shape = 'u8[229376]{0}', space=vmem, size = 0x38000, scoped, tag = 'input window, operand 7, single buffered']
    #allocation16 [shape = 's32[1]{0}', space=sflag, size = 0x4, scoped, tag = 'scoped memory for tpu_custom_call.1']
    #allocation17 [shape = 'u8[32768]{0}', space=vmem, size = 0x8000, scoped, tag = 'input window, operand 9, single buffered']
    #allocation18 [shape = 'u8[1024]{0}', space=vmem, size = 0x400, scoped, tag = 'output window, operand 0, single buffered']
    %19 = vsyncpa [#allocation4], 0
    %20 = vsyncpa [#allocation7], 0
    %21 = vsyncpa [#allocation10], 0
    %22 = vsyncpa [#allocation13], 0
    %23 = vsyncpa [#allocation16], 0
    %24 = vsyncpa [#allocation5], 0
    // Predicated region
    $region2: #{tpu_custom_call.1} parent=1 // pred_check
      _
    $region3: #{tpu_custom_call.1} parent=1 // pred_check_branch
      %26 = sbr.rel (0) target = $region5
    $region4: #{tpu_custom_call.1} parent=1 // pred_region
      %s28 = ssub.s32 2048, 2048
      %29 = vsyncadd [#allocation4], %s28
      %s30 = sshll.u32 [#allocation3], 4
      %s31 = int_to_ptr.vmem [resolvable:$true] %s30
      %36 = dma.hbm_to_vmem [thread:$0]  %s0, 2048, %s31, [#allocation4], 64, 64, 4
    $region5: #{tpu_custom_call.1} parent=1 // pred_fallthru
      _
    // Predicated region
    $region6: #{tpu_custom_call.1} parent=1 // pred_check
      _
    $region7: #{tpu_custom_call.1} parent=1 // pred_check_branch
      %38 = sbr.rel (0) target = $region9
    $region8: #{tpu_custom_call.1} parent=1 // pred_region
      %s40 = ssub.s32 2048, 2048
      %41 = vsyncadd [#allocation7], %s40
      %s42 = sshll.u32 [#allocation6], 4
      %s43 = int_to_ptr.vmem [resolvable:$true] %s42
      %48 = dma.hbm_to_vmem [thread:$0]  %s1, 2048, %s43, [#allocation7], 64, 64, 4
    $region9: #{tpu_custom_call.1} parent=1 // pred_fallthru
      _
    // Predicated region
    $region10: #{tpu_custom_call.1} parent=1 // pred_check
      _
    $region11: #{tpu_custom_call.1} parent=1 // pred_check_branch
      %50 = sbr.rel (0) target = $region13
    $region12: #{tpu_custom_call.1} parent=1 // pred_region
      %s52 = ssub.s32 2048, 2048
      %53 = vsyncadd [#allocation7], %s52
      %s54 = sshll.u32 [#allocation8], 4
      %s55 = int_to_ptr.vmem [resolvable:$true] %s54
      %60 = dma.hbm_to_vmem [thread:$0]  %s2, 2048, %s55, [#allocation7], 64, 64, 4
    $region13: #{tpu_custom_call.1} parent=1 // pred_fallthru
      _
    // Predicated region
    $region14: #{tpu_custom_call.1} parent=1 // pred_check
      _
    $region15: #{tpu_custom_call.1} parent=1 // pred_check_branch
      %62 = sbr.rel (0) target = $region17
    $region16: #{tpu_custom_call.1} parent=1 // pred_region
      %s64 = ssub.s32 2048, 2048
      %65 = vsyncadd [#allocation10], %s64
      %s66 = sshll.u32 [#allocation9], 4
      %s67 = int_to_ptr.vmem [resolvable:$true] %s66
      %72 = dma.hbm_to_vmem [thread:$0]  %s3, 2048, %s67, [#allocation10], 64, 64, 4
    $region17: #{tpu_custom_call.1} parent=1 // pred_fallthru
      _
    // Predicated region
    $region18: #{tpu_custom_call.1} parent=1 // pred_check
      _
    $region19: #{tpu_custom_call.1} parent=1 // pred_check_branch
      %74 = sbr.rel (0) target = $region21
    $region20: #{tpu_custom_call.1} parent=1 // pred_region
      %s76 = ssub.s32 2048, 2048
      %77 = vsyncadd [#allocation10], %s76
      %s78 = sshll.u32 [#allocation11], 4
      %s79 = int_to_ptr.vmem [resolvable:$true] %s78
      %84 = dma.hbm_to_vmem [thread:$0]  %s4, 2048, %s79, [#allocation10], 64, 64, 4
    $region21: #{tpu_custom_call.1} parent=1 // pred_fallthru
      _
    // Predicated region
    $region22: #{tpu_custom_call.1} parent=1 // pred_check
      _
    $region23: #{tpu_custom_call.1} parent=1 // pred_check_branch
      %86 = sbr.rel (0) target = $region25
    $region24: #{tpu_custom_call.1} parent=1 // pred_region
      %s88 = ssub.s32 2048, 2048
      %89 = vsyncadd [#allocation13], %s88
      %s90 = sshll.u32 [#allocation12], 4
      %s91 = int_to_ptr.vmem [resolvable:$true] %s90
      %96 = dma.hbm_to_vmem [thread:$0]  %s5, 2048, %s91, [#allocation13], 64, 64, 4
    $region25: #{tpu_custom_call.1} parent=1 // pred_fallthru
      _
    // Predicated region
    $region26: #{tpu_custom_call.1} parent=1 // pred_check
      _
    $region27: #{tpu_custom_call.1} parent=1 // pred_check_branch
      %98 = sbr.rel (0) target = $region29
    $region28: #{tpu_custom_call.1} parent=1 // pred_region
      %s100 = ssub.s32 2048, 2048
      %101 = vsyncadd [#allocation13], %s100
      %s102 = sshll.u32 [#allocation14], 4
      %s103 = int_to_ptr.vmem [resolvable:$true] %s102
      %108 = dma.hbm_to_vmem [thread:$0]  %s6, 2048, %s103, [#allocation13], 64, 64, 4
    $region29: #{tpu_custom_call.1} parent=1 // pred_fallthru
      _
    // Predicated region
    $region30: #{tpu_custom_call.1} parent=1 // pred_check
      _
    $region31: #{tpu_custom_call.1} parent=1 // pred_check_branch
      %110 = sbr.rel (0) target = $region33
    $region32: #{tpu_custom_call.1} parent=1 // pred_region
      %s112 = ssub.s32 7168, 7168
      %113 = vsyncadd [#allocation16], %s112
      %s114 = sshll.u32 [#allocation15], 4
      %s115 = int_to_ptr.vmem [resolvable:$true] %s114
      %120 = dma.hbm_to_vmem [thread:$0]  %s7, 7168, %s115, [#allocation16], 64, 64, 4
    $region33: #{tpu_custom_call.1} parent=1 // pred_fallthru
      _
    // Predicated region
    $region34: #{tpu_custom_call.1} parent=1 // pred_check
      _
    $region35: #{tpu_custom_call.1} parent=1 // pred_check_branch
      %122 = sbr.rel (0) target = $region37
    $region36: #{tpu_custom_call.1} parent=1 // pred_region
      _
    $region37: #{tpu_custom_call.1} parent=1 // pred_fallthru
      _
    // Predicated region
    $region38: #{tpu_custom_call.1} parent=1 // pred_check
      _
    $region39: #{tpu_custom_call.1} parent=1 // pred_check_branch
      %124 = sbr.rel (0) target = $region41
    $region40: #{tpu_custom_call.1} parent=1 // pred_region
      %s126 = ssub.s32 1024, 1024
      %127 = vsyncadd [#allocation16], %s126
      %s128 = sshll.u32 [#allocation17], 4
      %s129 = int_to_ptr.vmem [resolvable:$true] %s128
      %134 = dma.hbm_to_vmem [thread:$0]  %s9, 1024, %s129, [#allocation16], 64, 64, 4
    $region41: #{tpu_custom_call.1} parent=1 // pred_fallthru
      _
    // Predicated region
    $region42: #{tpu_custom_call.1} parent=1 // pred_check
      _
    $region43: #{tpu_custom_call.1} parent=1 // pred_check_branch
      %136 = sbr.rel (0) target = $region45
    $region44: #{tpu_custom_call.1} parent=1 // pred_region
      _
    $region45: #{tpu_custom_call.1} parent=1 // pred_fallthru
      _
    // Predicated region
    $region46: #{tpu_custom_call.1} parent=1 // pred_check
      _
    $region47: #{tpu_custom_call.1} parent=1 // pred_check_branch
      %138 = sbr.rel (0) target = $region49
    $region48: #{tpu_custom_call.1} parent=1 // pred_region
      _
    $region49: #{tpu_custom_call.1} parent=1 // pred_fallthru
      _
    // Predicated region
    $region50: #{tpu_custom_call.1} parent=1 // pred_check
      _
    $region51: #{tpu_custom_call.1} parent=1 // pred_check_branch
      %140 = sbr.rel (0) target = $region53
    $region52: #{tpu_custom_call.1} parent=1 // pred_region
      _
    $region53: #{tpu_custom_call.1} parent=1 // pred_fallthru
      _
    // Predicated region
    $region54: #{tpu_custom_call.1} parent=1 // pred_check
      _
    $region55: #{tpu_custom_call.1} parent=1 // pred_check_branch
      %142 = sbr.rel (0) target = $region57
    $region56: #{tpu_custom_call.1} parent=1 // pred_region
      %143 = dma.done [#allocation4], 2048
    $region57: #{tpu_custom_call.1} parent=1 // pred_fallthru
      _
    // Predicated region
    $region58: #{tpu_custom_call.1} parent=1 // pred_check
      _
    $region59: #{tpu_custom_call.1} parent=1 // pred_check_branch
      %145 = sbr.rel (0) target = $region61
    $region60: #{tpu_custom_call.1} parent=1 // pred_region
      %146 = dma.done [#allocation7], 2048
    $region61: #{tpu_custom_call.1} parent=1 // pred_fallthru
      _
    // Predicated region
    $region62: #{tpu_custom_call.1} parent=1 // pred_check
      _
    $region63: #{tpu_custom_call.1} parent=1 // pred_check_branch
      %148 = sbr.rel (0) target = $region65
    $region64: #{tpu_custom_call.1} parent=1 // pred_region
      %149 = dma.done [#allocation7], 2048
    $region65: #{tpu_custom_call.1} parent=1 // pred_fallthru
      _
    // Predicated region
    $region66: #{tpu_custom_call.1} parent=1 // pred_check
      _
    $region67: #{tpu_custom_call.1} parent=1 // pred_check_branch
      %151 = sbr.rel (0) target = $region69
    $region68: #{tpu_custom_call.1} parent=1 // pred_region
      %152 = dma.done [#allocation10], 2048
    $region69: #{tpu_custom_call.1} parent=1 // pred_fallthru
      _
    // Predicated region
    $region70: #{tpu_custom_call.1} parent=1 // pred_check
      _
    $region71: #{tpu_custom_call.1} parent=1 // pred_check_branch
      %154 = sbr.rel (0) target = $region73
    $region72: #{tpu_custom_call.1} parent=1 // pred_region
      %155 = dma.done [#allocation10], 2048
    $region73: #{tpu_custom_call.1} parent=1 // pred_fallthru
      _
    // Predicated region
    $region74: #{tpu_custom_call.1} parent=1 // pred_check
      _
    $region75: #{tpu_custom_call.1} parent=1 // pred_check_branch
      %157 = sbr.rel (0) target = $region77
    $region76: #{tpu_custom_call.1} parent=1 // pred_region
      %158 = dma.done [#allocation13], 2048
    $region77: #{tpu_custom_call.1} parent=1 // pred_fallthru
      _
    // Predicated region
    $region78: #{tpu_custom_call.1} parent=1 // pred_check
      _
    $region79: #{tpu_custom_call.1} parent=1 // pred_check_branch
      %160 = sbr.rel (0) target = $region81
    $region80: #{tpu_custom_call.1} parent=1 // pred_region
      %161 = dma.done [#allocation13], 2048
    $region81: #{tpu_custom_call.1} parent=1 // pred_fallthru
      _
    // Predicated region
    $region82: #{tpu_custom_call.1} parent=1 // pred_check
      _
    $region83: #{tpu_custom_call.1} parent=1 // pred_check_branch
      %163 = sbr.rel (0) target = $region85
    $region84: #{tpu_custom_call.1} parent=1 // pred_region
      %164 = dma.done [#allocation16], 7168
    $region85: #{tpu_custom_call.1} parent=1 // pred_fallthru
      _
    // Predicated region
    $region86: #{tpu_custom_call.1} parent=1 // pred_check
      _
    $region87: #{tpu_custom_call.1} parent=1 // pred_check_branch
      %166 = sbr.rel (0) target = $region89
    $region88: #{tpu_custom_call.1} parent=1 // pred_region
      %167 = dma.done [#allocation16], 1024
    $region89: #{tpu_custom_call.1} parent=1 // pred_fallthru
      _
    %v169 = vld [vmem:[#allocation3] sm:$0xf]
    %v170 = vld [vmem:[#allocation3 + $0x4] sm:$0xf]
    %v171 = vld [vmem:[#allocation3 + $0x8] sm:$0xf]
    %v172 = vld [vmem:[#allocation3 + $0xc] sm:$0xf]
    %v173 = vld [vmem:[#allocation3 + $0x10] sm:$0xf]
    %v174 = vld [vmem:[#allocation3 + $0x14] sm:$0xf]
    %v175 = vld [vmem:[#allocation3 + $0x18] sm:$0xf]
    %v176 = vld [vmem:[#allocation3 + $0x1c] sm:$0xf]
    %v177 = vld [vmem:[#allocation3 + $0x20] sm:$0xf]
    %v178 = vld [vmem:[#allocation3 + $0x24] sm:$0xf]
    %v179 = vld [vmem:[#allocation3 + $0x28] sm:$0xf]
    %v180 = vld [vmem:[#allocation3 + $0x2c] sm:$0xf]
    %v181 = vld [vmem:[#allocation3 + $0x30] sm:$0xf]
    %v182 = vld [vmem:[#allocation3 + $0x34] sm:$0xf]
    %v183 = vld [vmem:[#allocation3 + $0x38] sm:$0xf]
    %v184 = vld [vmem:[#allocation3 + $0x3c] sm:$0xf]
    %v185 = vld [vmem:[#allocation3 + $0x40] sm:$0xf]
    %v186 = vld [vmem:[#allocation3 + $0x44] sm:$0xf]
    %v187 = vld [vmem:[#allocation3 + $0x48] sm:$0xf]
    %v188 = vld [vmem:[#allocation3 + $0x4c] sm:$0xf]
    %v189 = vld [vmem:[#allocation3 + $0x50] sm:$0xf]
    %v190 = vld [vmem:[#allocation3 + $0x54] sm:$0xf]
    %v191 = vld [vmem:[#allocation3 + $0x58] sm:$0xf]
    %v192 = vld [vmem:[#allocation3 + $0x5c] sm:$0xf]
    %v193 = vld [vmem:[#allocation3 + $0x60] sm:$0xf]
    %v194 = vld [vmem:[#allocation3 + $0x64] sm:$0xf]
    %v195 = vld [vmem:[#allocation3 + $0x68] sm:$0xf]
    %v196 = vld [vmem:[#allocation3 + $0x6c] sm:$0xf]
    %v197 = vld [vmem:[#allocation3 + $0x70] sm:$0xf]
    %v198 = vld [vmem:[#allocation3 + $0x74] sm:$0xf]
    %v199 = vld [vmem:[#allocation3 + $0x78] sm:$0xf]
    %v200 = vld [vmem:[#allocation3 + $0x7c] sm:$0xf]
    %v201 = vld [vmem:[#allocation15] sm:$0xf]
    %v202 = vld [vmem:[#allocation15 + $0x4] sm:$0xf]
    %v203 = vld [vmem:[#allocation15 + $0x8] sm:$0xf]
    %v204 = vld [vmem:[#allocation15 + $0xc] sm:$0xf]
    %v205 = vld [vmem:[#allocation15 + $0x10] sm:$0xf]
    %v206 = vld [vmem:[#allocation15 + $0x14] sm:$0xf]
    %v207 = vld [vmem:[#allocation15 + $0x18] sm:$0xf]
    %v208 = vld [vmem:[#allocation15 + $0x1c] sm:$0xf]
    %v209 = vld [vmem:[#allocation15 + $0x20] sm:$0xf]
    %v210 = vld [vmem:[#allocation15 + $0x24] sm:$0xf]
    %v211 = vld [vmem:[#allocation15 + $0x28] sm:$0xf]
    %v212 = vld [vmem:[#allocation15 + $0x2c] sm:$0xf]
    %v213 = vld [vmem:[#allocation15 + $0x30] sm:$0xf]
    %v214 = vld [vmem:[#allocation15 + $0x34] sm:$0xf]
    %v215 = vld [vmem:[#allocation15 + $0x38] sm:$0xf]
    %v216 = vld [vmem:[#allocation15 + $0x3c] sm:$0xf]
    %v217 = vld [vmem:[#allocation6] sm:$0xf]
    %v218 = vld [vmem:[#allocation6 + $0x4] sm:$0xf]
    %v219 = vld [vmem:[#allocation6 + $0x8] sm:$0xf]
    %v220 = vld [vmem:[#allocation6 + $0xc] sm:$0xf]
    %v221 = vld [vmem:[#allocation6 + $0x10] sm:$0xf]
    %v222 = vld [vmem:[#allocation6 + $0x14] sm:$0xf]
    %v223 = vld [vmem:[#allocation6 + $0x18] sm:$0xf]
    %v224 = vld [vmem:[#allocation6 + $0x1c] sm:$0xf]
    %v225 = vld [vmem:[#allocation6 + $0x20] sm:$0xf]
    %v226 = vld [vmem:[#allocation6 + $0x24] sm:$0xf]
    %v227 = vld [vmem:[#allocation6 + $0x28] sm:$0xf]
    %v228 = vld [vmem:[#allocation6 + $0x2c] sm:$0xf]
    %v229 = vld [vmem:[#allocation6 + $0x30] sm:$0xf]
    %v230 = vld [vmem:[#allocation6 + $0x34] sm:$0xf]
    %v231 = vld [vmem:[#allocation6 + $0x38] sm:$0xf]
    %v232 = vld [vmem:[#allocation6 + $0x3c] sm:$0xf]
    %v233 = vld [vmem:[#allocation6 + $0x40] sm:$0xf]
    %v234 = vld [vmem:[#allocation6 + $0x44] sm:$0xf]
    %v235 = vld [vmem:[#allocation6 + $0x48] sm:$0xf]
    %v236 = vld [vmem:[#allocation6 + $0x4c] sm:$0xf]
    %v237 = vld [vmem:[#allocation6 + $0x50] sm:$0xf]
    %v238 = vld [vmem:[#allocation6 + $0x54] sm:$0xf]
    %v239 = vld [vmem:[#allocation6 + $0x58] sm:$0xf]
    %v240 = vld [vmem:[#allocation6 + $0x5c] sm:$0xf]
    %v241 = vld [vmem:[#allocation6 + $0x60] sm:$0xf]
    %v242 = vld [vmem:[#allocation6 + $0x64] sm:$0xf]
    %v243 = vld [vmem:[#allocation6 + $0x68] sm:$0xf]
    %v244 = vld [vmem:[#allocation6 + $0x6c] sm:$0xf]
    %v245 = vld [vmem:[#allocation6 + $0x70] sm:$0xf]
    %v246 = vld [vmem:[#allocation6 + $0x74] sm:$0xf]
    %v247 = vld [vmem:[#allocation6 + $0x78] sm:$0xf]
    %v248 = vld [vmem:[#allocation6 + $0x7c] sm:$0xf]
    %v249 = vld [vmem:[#allocation15 + $0x40] sm:$0xf]
    %v250 = vld [vmem:[#allocation15 + $0x44] sm:$0xf]
    %v251 = vld [vmem:[#allocation15 + $0x48] sm:$0xf]
    %v252 = vld [vmem:[#allocation15 + $0x4c] sm:$0xf]
    %v253 = vld [vmem:[#allocation15 + $0x50] sm:$0xf]
    %v254 = vld [vmem:[#allocation15 + $0x54] sm:$0xf]
    %v255 = vld [vmem:[#allocation15 + $0x58] sm:$0xf]
    %v256 = vld [vmem:[#allocation15 + $0x5c] sm:$0xf]
    %v257 = vld [vmem:[#allocation15 + $0x60] sm:$0xf]
    %v258 = vld [vmem:[#allocation15 + $0x64] sm:$0xf]
    %v259 = vld [vmem:[#allocation15 + $0x68] sm:$0xf]
    %v260 = vld [vmem:[#allocation15 + $0x6c] sm:$0xf]
    %v261 = vld [vmem:[#allocation15 + $0x70] sm:$0xf]
    %v262 = vld [vmem:[#allocation15 + $0x74] sm:$0xf]
    %v263 = vld [vmem:[#allocation15 + $0x78] sm:$0xf]
    %v264 = vld [vmem:[#allocation15 + $0x7c] sm:$0xf]
    %v297 = vunpack.c.l.b16 %v217
    %v298 = vunpack.c.l.b16 %v218
    %v299 = vunpack.c.l.b16 %v219
    %v300 = vunpack.c.l.b16 %v220
    %v301 = vunpack.c.l.b16 %v221
    %v302 = vunpack.c.l.b16 %v222
    %v303 = vunpack.c.l.b16 %v223
    %v304 = vunpack.c.l.b16 %v224
    %v305 = vunpack.c.l.b16 %v225
    %v306 = vunpack.c.l.b16 %v226
    %v307 = vunpack.c.l.b16 %v227
    %v308 = vunpack.c.l.b16 %v228
    %v309 = vunpack.c.l.b16 %v229
    %v310 = vunpack.c.l.b16 %v230
    %v311 = vunpack.c.l.b16 %v231
    %v312 = vunpack.c.l.b16 %v232
    %v313 = vunpack.c.l.b16 %v233
    %v314 = vunpack.c.l.b16 %v234
    %v315 = vunpack.c.l.b16 %v235
    %v316 = vunpack.c.l.b16 %v236
    %v317 = vunpack.c.l.b16 %v237
    %v318 = vunpack.c.l.b16 %v238
    %v319 = vunpack.c.l.b16 %v239
    %v320 = vunpack.c.l.b16 %v240
    %v321 = vunpack.c.l.b16 %v241
    %v322 = vunpack.c.l.b16 %v242
    %v323 = vunpack.c.l.b16 %v243
    %v324 = vunpack.c.l.b16 %v244
    %v325 = vunpack.c.l.b16 %v245
    %v326 = vunpack.c.l.b16 %v246
    %v327 = vunpack.c.l.b16 %v247
    %v328 = vunpack.c.l.b16 %v248
    %v329 = vpack.c.b16 %v298, %v297
    %v330 = vpack.c.b16 %v300, %v299
    %v331 = vpack.c.b16 %v302, %v301
    %v332 = vpack.c.b16 %v304, %v303
    %v333 = vpack.c.b16 %v306, %v305
    %v334 = vpack.c.b16 %v308, %v307
    %v335 = vpack.c.b16 %v310, %v309
    %v336 = vpack.c.b16 %v312, %v311
    %v337 = vpack.c.b16 %v314, %v313
    %v338 = vpack.c.b16 %v316, %v315
    %v339 = vpack.c.b16 %v318, %v317
    %v340 = vpack.c.b16 %v320, %v319
    %v341 = vpack.c.b16 %v322, %v321
    %v342 = vpack.c.b16 %v324, %v323
    %v343 = vpack.c.b16 %v326, %v325
    %v344 = vpack.c.b16 %v328, %v327
    %v377 = vunpack.c.l.b16 %v249
    %v378 = vunpack.c.l.b16 %v250
    %v379 = vunpack.c.l.b16 %v251
    %v380 = vunpack.c.l.b16 %v252
    %v381 = vunpack.c.l.b16 %v253
    %v382 = vunpack.c.l.b16 %v254
    %v383 = vunpack.c.l.b16 %v255
    %v384 = vunpack.c.l.b16 %v256
    %v385 = vunpack.c.l.b16 %v257
    %v386 = vunpack.c.l.b16 %v258
    %v387 = vunpack.c.l.b16 %v259
    %v388 = vunpack.c.l.b16 %v260
    %v389 = vunpack.c.l.b16 %v261
    %v390 = vunpack.c.l.b16 %v262
    %v391 = vunpack.c.l.b16 %v263
    %v392 = vunpack.c.l.b16 %v264
    %v393 = vpack.c.b16 %v378, %v377
    %v394 = vpack.c.b16 %v380, %v379
    %v395 = vpack.c.b16 %v382, %v381
    %v396 = vpack.c.b16 %v384, %v383
    %v397 = vpack.c.b16 %v386, %v385
    %v398 = vpack.c.b16 %v388, %v387
    %v399 = vpack.c.b16 %v390, %v389
    %v400 = vpack.c.b16 %v392, %v391
    %409 = vmatprep.subr.bf16.mxu0 0
    %410 = vmatpush1.bf16.msra.mxu0 %v393
    %411 = vmatprep.subr.bf16.mxu0 0
    %412 = vmatpush1.bf16.msra.mxu0 %v394
    %413 = vmatprep.subr.bf16.mxu0 0
    %414 = vmatpush1.bf16.msra.mxu0 %v395
    %415 = vmatprep.subr.bf16.mxu0 0
    %416 = vmatpush1.bf16.msra.mxu0 %v396
    %417 = vmatprep.subr.bf16.mxu0 0
    %418 = vmatpush1.bf16.msra.mxu0 %v397
    %419 = vmatprep.subr.bf16.mxu0 0
    %420 = vmatpush1.bf16.msra.mxu0 %v398
    %421 = vmatprep.subr.bf16.mxu0 0
    %422 = vmatpush1.bf16.msra.mxu0 %v399
    %423 = vmatprep.subr.bf16.mxu0 0
    %424 = vmatpush1.bf16.msra.mxu0 %v400
    %425 = vmatprep.subr.bf16.mxu0 0
    %426 = vmatpush1.bf16.msra.mxu0 0
    %427 = vmatprep.subr.bf16.mxu0 0
    %428 = vmatpush1.bf16.msra.mxu0 0
    %429 = vmatprep.subr.bf16.mxu0 0
    %430 = vmatpush1.bf16.msra.mxu0 0
    %431 = vmatprep.subr.bf16.mxu0 0
    %432 = vmatpush1.bf16.msra.mxu0 0
    %433 = vmatprep.subr.bf16.mxu0 0
    %434 = vmatpush1.bf16.msra.mxu0 0
    %435 = vmatprep.subr.bf16.mxu0 0
    %436 = vmatpush1.bf16.msra.mxu0 0
    %437 = vmatprep.subr.bf16.mxu0 0
    %438 = vmatpush1.bf16.msra.mxu0 0
    %439 = vmatprep.subr.bf16.mxu0 0
    %440 = vmatpush1.bf16.msra.mxu0 0
    %441 = vmatprep.mubr.bf16.mxu0 0
    %442 = vmatmul.mubr.bf16.gmra.mrb[0].mxu0 %v329
    %v443 = vpop.f32.mrb[0].mxu0
    %v444 = vadd.f32 0.0, %v443
    %v445 = vpop.f32.mrb[0].mxu0
    %v446 = vpop.f32.mrb[0].mxu0
    %v447 = vadd.f32 0.0, %v446
    %v448 = vpop.f32.mrb[0].mxu0
    %449 = vmatprep.mubr.bf16.mxu0 0
    %450 = vmatmul.mubr.bf16.gmra.mrb[0].mxu0 %v330
    %v451 = vpop.f32.mrb[0].mxu0
    %v452 = vadd.f32 0.0, %v451
    %v453 = vpop.f32.mrb[0].mxu0
    %v454 = vpop.f32.mrb[0].mxu0
    %v455 = vadd.f32 0.0, %v454
    %v456 = vpop.f32.mrb[0].mxu0
    %457 = vmatprep.mubr.bf16.mxu0 0
    %458 = vmatmul.mubr.bf16.gmra.mrb[0].mxu0 %v331
    %v459 = vpop.f32.mrb[0].mxu0
    %v460 = vadd.f32 0.0, %v459
    %v461 = vpop.f32.mrb[0].mxu0
    %v462 = vpop.f32.mrb[0].mxu0
    %v463 = vadd.f32 0.0, %v462
    %v464 = vpop.f32.mrb[0].mxu0
    %465 = vmatprep.mubr.bf16.mxu0 0
    %466 = vmatmul.mubr.bf16.gmra.mrb[0].mxu0 %v332
    %v467 = vpop.f32.mrb[0].mxu0
    %v468 = vadd.f32 0.0, %v467
    %v469 = vpop.f32.mrb[0].mxu0
    %v470 = vpop.f32.mrb[0].mxu0
    %v471 = vadd.f32 0.0, %v470
    %v472 = vpop.f32.mrb[0].mxu0
    %473 = vmatprep.mubr.bf16.mxu0 0
    %474 = vmatmul.mubr.bf16.gmra.mrb[0].mxu0 %v333
    %v475 = vpop.f32.mrb[0].mxu0
    %v476 = vadd.f32 0.0, %v475
    %v477 = vpop.f32.mrb[0].mxu0
    %v478 = vpop.f32.mrb[0].mxu0
    %v479 = vadd.f32 0.0, %v478
    %v480 = vpop.f32.mrb[0].mxu0
    %481 = vmatprep.mubr.bf16.mxu0 0
    %482 = vmatmul.mubr.bf16.gmra.mrb[0].mxu0 %v334
    %v483 = vpop.f32.mrb[0].mxu0
    %v484 = vadd.f32 0.0, %v483
    %v485 = vpop.f32.mrb[0].mxu0
    %v486 = vpop.f32.mrb[0].mxu0
    %v487 = vadd.f32 0.0, %v486
    %v488 = vpop.f32.mrb[0].mxu0
    %489 = vmatprep.mubr.bf16.mxu0 0
    %490 = vmatmul.mubr.bf16.gmra.mrb[0].mxu0 %v335
    %v491 = vpop.f32.mrb[0].mxu0
    %v492 = vadd.f32 0.0, %v491
    %v493 = vpop.f32.mrb[0].mxu0
    %v494 = vpop.f32.mrb[0].mxu0
    %v495 = vadd.f32 0.0, %v494
    %v496 = vpop.f32.mrb[0].mxu0
    %497 = vmatprep.mubr.bf16.mxu0 0
    %498 = vmatmul.mubr.bf16.gmra.mrb[0].mxu0 %v336
    %v499 = vpop.f32.mrb[0].mxu0
    %v500 = vadd.f32 0.0, %v499
    %v501 = vpop.f32.mrb[0].mxu0
    %v502 = vpop.f32.mrb[0].mxu0
    %v503 = vadd.f32 0.0, %v502
    %v504 = vpop.f32.mrb[0].mxu0
    %505 = vmatprep.mubr.bf16.mxu0 0
    %506 = vmatmul.mubr.bf16.gmra.mrb[0].mxu0 %v337
    %v507 = vpop.f32.mrb[0].mxu0
    %v508 = vadd.f32 0.0, %v507
    %v509 = vpop.f32.mrb[0].mxu0
    %v510 = vpop.f32.mrb[0].mxu0
    %v511 = vadd.f32 0.0, %v510
    %v512 = vpop.f32.mrb[0].mxu0
    %513 = vmatprep.mubr.bf16.mxu0 0
    %514 = vmatmul.mubr.bf16.gmra.mrb[0].mxu0 %v338
    %v515 = vpop.f32.mrb[0].mxu0
    %v516 = vadd.f32 0.0, %v515
    %v517 = vpop.f32.mrb[0].mxu0
    %v518 = vpop.f32.mrb[0].mxu0
    %v519 = vadd.f32 0.0, %v518
    %v520 = vpop.f32.mrb[0].mxu0
    %521 = vmatprep.mubr.bf16.mxu0 0
    %522 = vmatmul.mubr.bf16.gmra.mrb[0].mxu0 %v339
    %v523 = vpop.f32.mrb[0].mxu0
    %v524 = vadd.f32 0.0, %v523
    %v525 = vpop.f32.mrb[0].mxu0
    %v526 = vpop.f32.mrb[0].mxu0
    %v527 = vadd.f32 0.0, %v526
    %v528 = vpop.f32.mrb[0].mxu0
    %529 = vmatprep.mubr.bf16.mxu0 0
    %530 = vmatmul.mubr.bf16.gmra.mrb[0].mxu0 %v340
    %v531 = vpop.f32.mrb[0].mxu0
    %v532 = vadd.f32 0.0, %v531
    %v533 = vpop.f32.mrb[0].mxu0
    %v534 = vpop.f32.mrb[0].mxu0
    %v535 = vadd.f32 0.0, %v534
    %v536 = vpop.f32.mrb[0].mxu0
    %537 = vmatprep.mubr.bf16.mxu0 0
    %538 = vmatmul.mubr.bf16.gmra.mrb[0].mxu0 %v341
    %v539 = vpop.f32.mrb[0].mxu0
    %v540 = vadd.f32 0.0, %v539
    %v541 = vpop.f32.mrb[0].mxu0
    %v542 = vpop.f32.mrb[0].mxu0
    %v543 = vadd.f32 0.0, %v542
    %v544 = vpop.f32.mrb[0].mxu0
    %545 = vmatprep.mubr.bf16.mxu0 0
    %546 = vmatmul.mubr.bf16.gmra.mrb[0].mxu0 %v342
    %v547 = vpop.f32.mrb[0].mxu0
    %v548 = vadd.f32 0.0, %v547
    %v549 = vpop.f32.mrb[0].mxu0
    %v550 = vpop.f32.mrb[0].mxu0
    %v551 = vadd.f32 0.0, %v550
    %v552 = vpop.f32.mrb[0].mxu0
    %553 = vmatprep.mubr.bf16.mxu0 0
    %554 = vmatmul.mubr.bf16.gmra.mrb[0].mxu0 %v343
    %v555 = vpop.f32.mrb[0].mxu0
    %v556 = vadd.f32 0.0, %v555
    %v557 = vpop.f32.mrb[0].mxu0
    %v558 = vpop.f32.mrb[0].mxu0
    %v559 = vadd.f32 0.0, %v558
    %v560 = vpop.f32.mrb[0].mxu0
    %561 = vmatprep.mubr.bf16.mxu0 0
    %562 = vmatmul.mubr.bf16.gmra.mrb[0].mxu0 %v344
    %v563 = vpop.f32.mrb[0].mxu0
    %v564 = vadd.f32 0.0, %v563
    %v565 = vpop.f32.mrb[0].mxu0
    %v566 = vpop.f32.mrb[0].mxu0
    %v567 = vadd.f32 0.0, %v566
    %v568 = vpop.f32.mrb[0].mxu0
    %569 = vdwg.mxu0
    %v602 = vunpack.c.l.b16 %v169
    %v603 = vunpack.c.l.b16 %v170
    %v604 = vunpack.c.l.b16 %v171
    %v605 = vunpack.c.l.b16 %v172
    %v606 = vunpack.c.l.b16 %v173
    %v607 = vunpack.c.l.b16 %v174
    %v608 = vunpack.c.l.b16 %v175
    %v609 = vunpack.c.l.b16 %v176
    %v610 = vunpack.c.l.b16 %v177
    %v611 = vunpack.c.l.b16 %v178
    %v612 = vunpack.c.l.b16 %v179
    %v613 = vunpack.c.l.b16 %v180
    %v614 = vunpack.c.l.b16 %v181
    %v615 = vunpack.c.l.b16 %v182
    %v616 = vunpack.c.l.b16 %v183
    %v617 = vunpack.c.l.b16 %v184
    %v618 = vunpack.c.l.b16 %v185
    %v619 = vunpack.c.l.b16 %v186
    %v620 = vunpack.c.l.b16 %v187
    %v621 = vunpack.c.l.b16 %v188
    %v622 = vunpack.c.l.b16 %v189
    %v623 = vunpack.c.l.b16 %v190
    %v624 = vunpack.c.l.b16 %v191
    %v625 = vunpack.c.l.b16 %v192
    %v626 = vunpack.c.l.b16 %v193
    %v627 = vunpack.c.l.b16 %v194
    %v628 = vunpack.c.l.b16 %v195
    %v629 = vunpack.c.l.b16 %v196
    %v630 = vunpack.c.l.b16 %v197
    %v631 = vunpack.c.l.b16 %v198
    %v632 = vunpack.c.l.b16 %v199
    %v633 = vunpack.c.l.b16 %v200
    %v634 = vpack.c.b16 %v603, %v602
    %v635 = vpack.c.b16 %v605, %v604
    %v636 = vpack.c.b16 %v607, %v606
    %v637 = vpack.c.b16 %v609, %v608
    %v638 = vpack.c.b16 %v611, %v610
    %v639 = vpack.c.b16 %v613, %v612
    %v640 = vpack.c.b16 %v615, %v614
    %v641 = vpack.c.b16 %v617, %v616
    %v642 = vpack.c.b16 %v619, %v618
    %v643 = vpack.c.b16 %v621, %v620
    %v644 = vpack.c.b16 %v623, %v622
    %v645 = vpack.c.b16 %v625, %v624
    %v646 = vpack.c.b16 %v627, %v626
    %v647 = vpack.c.b16 %v629, %v628
    %v648 = vpack.c.b16 %v631, %v630
    %v649 = vpack.c.b16 %v633, %v632
    %v682 = vunpack.c.l.b16 %v201
    %v683 = vunpack.c.l.b16 %v202
    %v684 = vunpack.c.l.b16 %v203
    %v685 = vunpack.c.l.b16 %v204
    %v686 = vunpack.c.l.b16 %v205
    %v687 = vunpack.c.l.b16 %v206
    %v688 = vunpack.c.l.b16 %v207
    %v689 = vunpack.c.l.b16 %v208
    %v690 = vunpack.c.l.b16 %v209
    %v691 = vunpack.c.l.b16 %v210
    %v692 = vunpack.c.l.b16 %v211
    %v693 = vunpack.c.l.b16 %v212
    %v694 = vunpack.c.l.b16 %v213
    %v695 = vunpack.c.l.b16 %v214
    %v696 = vunpack.c.l.b16 %v215
    %v697 = vunpack.c.l.b16 %v216
    %v698 = vpack.c.b16 %v683, %v682
    %v699 = vpack.c.b16 %v685, %v684
    %v700 = vpack.c.b16 %v687, %v686
    %v701 = vpack.c.b16 %v689, %v688
    %v702 = vpack.c.b16 %v691, %v690
    %v703 = vpack.c.b16 %v693, %v692
    %v704 = vpack.c.b16 %v695, %v694
    %v705 = vpack.c.b16 %v697, %v696
    %714 = vmatprep.subr.bf16.mxu0 0
    %715 = vmatpush1.bf16.msra.mxu0 %v698
    %716 = vmatprep.subr.bf16.mxu0 0
    %717 = vmatpush1.bf16.msra.mxu0 %v699
    %718 = vmatprep.subr.bf16.mxu0 0
    %719 = vmatpush1.bf16.msra.mxu0 %v700
    %720 = vmatprep.subr.bf16.mxu0 0
    %721 = vmatpush1.bf16.msra.mxu0 %v701
    %722 = vmatprep.subr.bf16.mxu0 0
    %723 = vmatpush1.bf16.msra.mxu0 %v702
    %724 = vmatprep.subr.bf16.mxu0 0
    %725 = vmatpush1.bf16.msra.mxu0 %v703
    %726 = vmatprep.subr.bf16.mxu0 0
    %727 = vmatpush1.bf16.msra.mxu0 %v704
    %728 = vmatprep.subr.bf16.mxu0 0
    %729 = vmatpush1.bf16.msra.mxu0 %v705
    %730 = vmatprep.subr.bf16.mxu0 0
    %731 = vmatpush1.bf16.msra.mxu0 0
    %732 = vmatprep.subr.bf16.mxu0 0
    %733 = vmatpush1.bf16.msra.mxu0 0
    %734 = vmatprep.subr.bf16.mxu0 0
    %735 = vmatpush1.bf16.msra.mxu0 0
    %736 = vmatprep.subr.bf16.mxu0 0
    %737 = vmatpush1.bf16.msra.mxu0 0
    %738 = vmatprep.subr.bf16.mxu0 0
    %739 = vmatpush1.bf16.msra.mxu0 0
    %740 = vmatprep.subr.bf16.mxu0 0
    %741 = vmatpush1.bf16.msra.mxu0 0
    %742 = vmatprep.subr.bf16.mxu0 0
    %743 = vmatpush1.bf16.msra.mxu0 0
    %744 = vmatprep.subr.bf16.mxu0 0
    %745 = vmatpush1.bf16.msra.mxu0 0
    %746 = vmatprep.mubr.bf16.mxu0 0
    %747 = vmatmul.mubr.bf16.gmra.mrb[0].mxu0 %v634
    %v748 = vpop.f32.mrb[0].mxu0
    %v749 = vadd.f32 %v444, %v748
    %v750 = vpop.f32.mrb[0].mxu0
    %v751 = vpop.f32.mrb[0].mxu0
    %v752 = vadd.f32 %v447, %v751
    %v753 = vpop.f32.mrb[0].mxu0
    %754 = vmatprep.mubr.bf16.mxu0 0
    %755 = vmatmul.mubr.bf16.gmra.mrb[0].mxu0 %v635
    %v756 = vpop.f32.mrb[0].mxu0
    %v757 = vadd.f32 %v452, %v756
    %v758 = vpop.f32.mrb[0].mxu0
    %v759 = vpop.f32.mrb[0].mxu0
    %v760 = vadd.f32 %v455, %v759
    %v761 = vpop.f32.mrb[0].mxu0
    %762 = vmatprep.mubr.bf16.mxu0 0
    %763 = vmatmul.mubr.bf16.gmra.mrb[0].mxu0 %v636
    %v764 = vpop.f32.mrb[0].mxu0
    %v765 = vadd.f32 %v460, %v764
    %v766 = vpop.f32.mrb[0].mxu0
    %v767 = vpop.f32.mrb[0].mxu0
    %v768 = vadd.f32 %v463, %v767
    %v769 = vpop.f32.mrb[0].mxu0
    %770 = vmatprep.mubr.bf16.mxu0 0
    %771 = vmatmul.mubr.bf16.gmra.mrb[0].mxu0 %v637
    %v772 = vpop.f32.mrb[0].mxu0
    %v773 = vadd.f32 %v468, %v772
    %v774 = vpop.f32.mrb[0].mxu0
    %v775 = vpop.f32.mrb[0].mxu0
    %v776 = vadd.f32 %v471, %v775
    %v777 = vpop.f32.mrb[0].mxu0
    %778 = vmatprep.mubr.bf16.mxu0 0
    %779 = vmatmul.mubr.bf16.gmra.mrb[0].mxu0 %v638
    %v780 = vpop.f32.mrb[0].mxu0
    %v781 = vadd.f32 %v476, %v780
    %v782 = vpop.f32.mrb[0].mxu0
    %v783 = vpop.f32.mrb[0].mxu0
    %v784 = vadd.f32 %v479, %v783
    %v785 = vpop.f32.mrb[0].mxu0
    %786 = vmatprep.mubr.bf16.mxu0 0
    %787 = vmatmul.mubr.bf16.gmra.mrb[0].mxu0 %v639
    %v788 = vpop.f32.mrb[0].mxu0
    %v789 = vadd.f32 %v484, %v788
    %v790 = vpop.f32.mrb[0].mxu0
    %v791 = vpop.f32.mrb[0].mxu0
    %v792 = vadd.f32 %v487, %v791
    %v793 = vpop.f32.mrb[0].mxu0
    %794 = vmatprep.mubr.bf16.mxu0 0
    %795 = vmatmul.mubr.bf16.gmra.mrb[0].mxu0 %v640
    %v796 = vpop.f32.mrb[0].mxu0
    %v797 = vadd.f32 %v492, %v796
    %v798 = vpop.f32.mrb[0].mxu0
    %v799 = vpop.f32.mrb[0].mxu0
    %v800 = vadd.f32 %v495, %v799
    %v801 = vpop.f32.mrb[0].mxu0
    %802 = vmatprep.mubr.bf16.mxu0 0
    %803 = vmatmul.mubr.bf16.gmra.mrb[0].mxu0 %v641
    %v804 = vpop.f32.mrb[0].mxu0
    %v805 = vadd.f32 %v500, %v804
    %v806 = vpop.f32.mrb[0].mxu0
    %v807 = vpop.f32.mrb[0].mxu0
    %v808 = vadd.f32 %v503, %v807
    %v809 = vpop.f32.mrb[0].mxu0
    %810 = vmatprep.mubr.bf16.mxu0 0
    %811 = vmatmul.mubr.bf16.gmra.mrb[0].mxu0 %v642
    %v812 = vpop.f32.mrb[0].mxu0
    %v813 = vadd.f32 %v508, %v812
    %v814 = vpop.f32.mrb[0].mxu0
    %v815 = vpop.f32.mrb[0].mxu0
    %v816 = vadd.f32 %v511, %v815
    %v817 = vpop.f32.mrb[0].mxu0
    %818 = vmatprep.mubr.bf16.mxu0 0
    %819 = vmatmul.mubr.bf16.gmra.mrb[0].mxu0 %v643
    %v820 = vpop.f32.mrb[0].mxu0
    %v821 = vadd.f32 %v516, %v820
    %v822 = vpop.f32.mrb[0].mxu0
    %v823 = vpop.f32.mrb[0].mxu0
    %v824 = vadd.f32 %v519, %v823
    %v825 = vpop.f32.mrb[0].mxu0
    %826 = vmatprep.mubr.bf16.mxu0 0
    %827 = vmatmul.mubr.bf16.gmra.mrb[0].mxu0 %v644
    %v828 = vpop.f32.mrb[0].mxu0
    %v829 = vadd.f32 %v524, %v828
    %v830 = vpop.f32.mrb[0].mxu0
    %v831 = vpop.f32.mrb[0].mxu0
    %v832 = vadd.f32 %v527, %v831
    %v833 = vpop.f32.mrb[0].mxu0
    %834 = vmatprep.mubr.bf16.mxu0 0
    %835 = vmatmul.mubr.bf16.gmra.mrb[0].mxu0 %v645
    %v836 = vpop.f32.mrb[0].mxu0
    %v837 = vadd.f32 %v532, %v836
    %v838 = vpop.f32.mrb[0].mxu0
    %v839 = vpop.f32.mrb[0].mxu0
    %v840 = vadd.f32 %v535, %v839
    %v841 = vpop.f32.mrb[0].mxu0
    %842 = vmatprep.mubr.bf16.mxu0 0
    %843 = vmatmul.mubr.bf16.gmra.mrb[0].mxu0 %v646
    %v844 = vpop.f32.mrb[0].mxu0
    %v845 = vadd.f32 %v540, %v844
    %v846 = vpop.f32.mrb[0].mxu0
    %v847 = vpop.f32.mrb[0].mxu0
    %v848 = vadd.f32 %v543, %v847
    %v849 = vpop.f32.mrb[0].mxu0
    %850 = vmatprep.mubr.bf16.mxu0 0
    %851 = vmatmul.mubr.bf16.gmra.mrb[0].mxu0 %v647
    %v852 = vpop.f32.mrb[0].mxu0
    %v853 = vadd.f32 %v548, %v852
    %v854 = vpop.f32.mrb[0].mxu0
    %v855 = vpop.f32.mrb[0].mxu0
    %v856 = vadd.f32 %v551, %v855
    %v857 = vpop.f32.mrb[0].mxu0
    %858 = vmatprep.mubr.bf16.mxu0 0
    %859 = vmatmul.mubr.bf16.gmra.mrb[0].mxu0 %v648
    %v860 = vpop.f32.mrb[0].mxu0
    %v861 = vadd.f32 %v556, %v860
    %v862 = vpop.f32.mrb[0].mxu0
    %v863 = vpop.f32.mrb[0].mxu0
    %v864 = vadd.f32 %v559, %v863
    %v865 = vpop.f32.mrb[0].mxu0
    %866 = vmatprep.mubr.bf16.mxu0 0
    %867 = vmatmul.mubr.bf16.gmra.mrb[0].mxu0 %v649
    %v868 = vpop.f32.mrb[0].mxu0
    %v869 = vadd.f32 %v564, %v868
    %v870 = vpop.f32.mrb[0].mxu0
    %v871 = vpop.f32.mrb[0].mxu0
    %v872 = vadd.f32 %v567, %v871
    %v873 = vpop.f32.mrb[0].mxu0
    %874 = vdwg.mxu0
    %v875 = vld [vmem:[#allocation8] sm:$0xf]
    %v876 = vld [vmem:[#allocation8 + $0x4] sm:$0xf]
    %v877 = vld [vmem:[#allocation8 + $0x8] sm:$0xf]
    %v878 = vld [vmem:[#allocation8 + $0xc] sm:$0xf]
    %v879 = vld [vmem:[#allocation8 + $0x10] sm:$0xf]
    %v880 = vld [vmem:[#allocation8 + $0x14] sm:$0xf]
    %v881 = vld [vmem:[#allocation8 + $0x18] sm:$0xf]
    %v882 = vld [vmem:[#allocation8 + $0x1c] sm:$0xf]
    %v883 = vld [vmem:[#allocation8 + $0x20] sm:$0xf]
    %v884 = vld [vmem:[#allocation8 + $0x24] sm:$0xf]
    %v885 = vld [vmem:[#allocation8 + $0x28] sm:$0xf]
    %v886 = vld [vmem:[#allocation8 + $0x2c] sm:$0xf]
    %v887 = vld [vmem:[#allocation8 + $0x30] sm:$0xf]
    %v888 = vld [vmem:[#allocation8 + $0x34] sm:$0xf]
    %v889 = vld [vmem:[#allocation8 + $0x38] sm:$0xf]
    %v890 = vld [vmem:[#allocation8 + $0x3c] sm:$0xf]
    %v891 = vld [vmem:[#allocation8 + $0x40] sm:$0xf]
    %v892 = vld [vmem:[#allocation8 + $0x44] sm:$0xf]
    %v893 = vld [vmem:[#allocation8 + $0x48] sm:$0xf]
    %v894 = vld [vmem:[#allocation8 + $0x4c] sm:$0xf]
    %v895 = vld [vmem:[#allocation8 + $0x50] sm:$0xf]
    %v896 = vld [vmem:[#allocation8 + $0x54] sm:$0xf]
    %v897 = vld [vmem:[#allocation8 + $0x58] sm:$0xf]
    %v898 = vld [vmem:[#allocation8 + $0x5c] sm:$0xf]
    %v899 = vld [vmem:[#allocation8 + $0x60] sm:$0xf]
    %v900 = vld [vmem:[#allocation8 + $0x64] sm:$0xf]
    %v901 = vld [vmem:[#allocation8 + $0x68] sm:$0xf]
    %v902 = vld [vmem:[#allocation8 + $0x6c] sm:$0xf]
    %v903 = vld [vmem:[#allocation8 + $0x70] sm:$0xf]
    %v904 = vld [vmem:[#allocation8 + $0x74] sm:$0xf]
    %v905 = vld [vmem:[#allocation8 + $0x78] sm:$0xf]
    %v906 = vld [vmem:[#allocation8 + $0x7c] sm:$0xf]
    %v907 = vld [vmem:[#allocation15 + $0x80] sm:$0xf]
    %v908 = vld [vmem:[#allocation15 + $0x84] sm:$0xf]
    %v909 = vld [vmem:[#allocation15 + $0x88] sm:$0xf]
    %v910 = vld [vmem:[#allocation15 + $0x8c] sm:$0xf]
    %v911 = vld [vmem:[#allocation15 + $0x90] sm:$0xf]
    %v912 = vld [vmem:[#allocation15 + $0x94] sm:$0xf]
    %v913 = vld [vmem:[#allocation15 + $0x98] sm:$0xf]
    %v914 = vld [vmem:[#allocation15 + $0x9c] sm:$0xf]
    %v915 = vld [vmem:[#allocation15 + $0xa0] sm:$0xf]
    %v916 = vld [vmem:[#allocation15 + $0xa4] sm:$0xf]
    %v917 = vld [vmem:[#allocation15 + $0xa8] sm:$0xf]
    %v918 = vld [vmem:[#allocation15 + $0xac] sm:$0xf]
    %v919 = vld [vmem:[#allocation15 + $0xb0] sm:$0xf]
    %v920 = vld [vmem:[#allocation15 + $0xb4] sm:$0xf]
    %v921 = vld [vmem:[#allocation15 + $0xb8] sm:$0xf]
    %v922 = vld [vmem:[#allocation15 + $0xbc] sm:$0xf]
    %v955 = vunpack.c.l.b16 %v875
    %v956 = vunpack.c.l.b16 %v876
    %v957 = vunpack.c.l.b16 %v877
    %v958 = vunpack.c.l.b16 %v878
    %v959 = vunpack.c.l.b16 %v879
    %v960 = vunpack.c.l.b16 %v880
    %v961 = vunpack.c.l.b16 %v881
    %v962 = vunpack.c.l.b16 %v882
    %v963 = vunpack.c.l.b16 %v883
    %v964 = vunpack.c.l.b16 %v884
    %v965 = vunpack.c.l.b16 %v885
    %v966 = vunpack.c.l.b16 %v886
    %v967 = vunpack.c.l.b16 %v887
    %v968 = vunpack.c.l.b16 %v888
    %v969 = vunpack.c.l.b16 %v889
    %v970 = vunpack.c.l.b16 %v890
    %v971 = vunpack.c.l.b16 %v891
    %v972 = vunpack.c.l.b16 %v892
    %v973 = vunpack.c.l.b16 %v893
    %v974 = vunpack.c.l.b16 %v894
    %v975 = vunpack.c.l.b16 %v895
    %v976 = vunpack.c.l.b16 %v896
    %v977 = vunpack.c.l.b16 %v897
    %v978 = vunpack.c.l.b16 %v898
    %v979 = vunpack.c.l.b16 %v899
    %v980 = vunpack.c.l.b16 %v900
    %v981 = vunpack.c.l.b16 %v901
    %v982 = vunpack.c.l.b16 %v902
    %v983 = vunpack.c.l.b16 %v903
    %v984 = vunpack.c.l.b16 %v904
    %v985 = vunpack.c.l.b16 %v905
    %v986 = vunpack.c.l.b16 %v906
    %v987 = vpack.c.b16 %v956, %v955
    %v988 = vpack.c.b16 %v958, %v957
    %v989 = vpack.c.b16 %v960, %v959
    %v990 = vpack.c.b16 %v962, %v961
    %v991 = vpack.c.b16 %v964, %v963
    %v992 = vpack.c.b16 %v966, %v965
    %v993 = vpack.c.b16 %v968, %v967
    %v994 = vpack.c.b16 %v970, %v969
    %v995 = vpack.c.b16 %v972, %v971
    %v996 = vpack.c.b16 %v974, %v973
    %v997 = vpack.c.b16 %v976, %v975
    %v998 = vpack.c.b16 %v978, %v977
    %v999 = vpack.c.b16 %v980, %v979
    %v1000 = vpack.c.b16 %v982, %v981
    %v1001 = vpack.c.b16 %v984, %v983
    %v1002 = vpack.c.b16 %v986, %v985
    %v1035 = vunpack.c.l.b16 %v907
    %v1036 = vunpack.c.l.b16 %v908
    %v1037 = vunpack.c.l.b16 %v909
    %v1038 = vunpack.c.l.b16 %v910
    %v1039 = vunpack.c.l.b16 %v911
    %v1040 = vunpack.c.l.b16 %v912
    %v1041 = vunpack.c.l.b16 %v913
    %v1042 = vunpack.c.l.b16 %v914
    %v1043 = vunpack.c.l.b16 %v915
    %v1044 = vunpack.c.l.b16 %v916
    %v1045 = vunpack.c.l.b16 %v917
    %v1046 = vunpack.c.l.b16 %v918
    %v1047 = vunpack.c.l.b16 %v919
    %v1048 = vunpack.c.l.b16 %v920
    %v1049 = vunpack.c.l.b16 %v921
    %v1050 = vunpack.c.l.b16 %v922
    %v1051 = vpack.c.b16 %v1036, %v1035
    %v1052 = vpack.c.b16 %v1038, %v1037
    %v1053 = vpack.c.b16 %v1040, %v1039
    %v1054 = vpack.c.b16 %v1042, %v1041
    %v1055 = vpack.c.b16 %v1044, %v1043
    %v1056 = vpack.c.b16 %v1046, %v1045
    %v1057 = vpack.c.b16 %v1048, %v1047
    %v1058 = vpack.c.b16 %v1050, %v1049
    %1067 = vmatprep.subr.bf16.mxu0 0
    %1068 = vmatpush1.bf16.msra.mxu0 %v1051
    %1069 = vmatprep.subr.bf16.mxu0 0
    %1070 = vmatpush1.bf16.msra.mxu0 %v1052
    %1071 = vmatprep.subr.bf16.mxu0 0
    %1072 = vmatpush1.bf16.msra.mxu0 %v1053
    %1073 = vmatprep.subr.bf16.mxu0 0
    %1074 = vmatpush1.bf16.msra.mxu0 %v1054
    %1075 = vmatprep.subr.bf16.mxu0 0
    %1076 = vmatpush1.bf16.msra.mxu0 %v1055
    %1077 = vmatprep.subr.bf16.mxu0 0
    %1078 = vmatpush1.bf16.msra.mxu0 %v1056
    %1079 = vmatprep.subr.bf16.mxu0 0
    %1080 = vmatpush1.bf16.msra.mxu0 %v1057
    %1081 = vmatprep.subr.bf16.mxu0 0
    %1082 = vmatpush1.bf16.msra.mxu0 %v1058
    %1083 = vmatprep.subr.bf16.mxu0 0
    %1084 = vmatpush1.bf16.msra.mxu0 0
    %1085 = vmatprep.subr.bf16.mxu0 0
    %1086 = vmatpush1.bf16.msra.mxu0 0
    %1087 = vmatprep.subr.bf16.mxu0 0
    %1088 = vmatpush1.bf16.msra.mxu0 0
    %1089 = vmatprep.subr.bf16.mxu0 0
    %1090 = vmatpush1.bf16.msra.mxu0 0
    %1091 = vmatprep.subr.bf16.mxu0 0
    %1092 = vmatpush1.bf16.msra.mxu0 0
    %1093 = vmatprep.subr.bf16.mxu0 0
    %1094 = vmatpush1.bf16.msra.mxu0 0
    %1095 = vmatprep.subr.bf16.mxu0 0
    %1096 = vmatpush1.bf16.msra.mxu0 0
    %1097 = vmatprep.subr.bf16.mxu0 0
    %1098 = vmatpush1.bf16.msra.mxu0 0
    %1099 = vmatprep.mubr.bf16.mxu0 0
    %1100 = vmatmul.mubr.bf16.gmra.mrb[0].mxu0 %v987
    %v1101 = vpop.f32.mrb[0].mxu0
    %v1102 = vadd.f32 0.0, %v1101
    %v1103 = vpop.f32.mrb[0].mxu0
    %v1104 = vpop.f32.mrb[0].mxu0
    %v1105 = vadd.f32 0.0, %v1104
    %v1106 = vpop.f32.mrb[0].mxu0
    %1107 = vmatprep.mubr.bf16.mxu0 0
    %1108 = vmatmul.mubr.bf16.gmra.mrb[0].mxu0 %v988
    %v1109 = vpop.f32.mrb[0].mxu0
    %v1110 = vadd.f32 0.0, %v1109
    %v1111 = vpop.f32.mrb[0].mxu0
    %v1112 = vpop.f32.mrb[0].mxu0
    %v1113 = vadd.f32 0.0, %v1112
    %v1114 = vpop.f32.mrb[0].mxu0
    %1115 = vmatprep.mubr.bf16.mxu0 0
    %1116 = vmatmul.mubr.bf16.gmra.mrb[0].mxu0 %v989
    %v1117 = vpop.f32.mrb[0].mxu0
    %v1118 = vadd.f32 0.0, %v1117
    %v1119 = vpop.f32.mrb[0].mxu0
    %v1120 = vpop.f32.mrb[0].mxu0
    %v1121 = vadd.f32 0.0, %v1120
    %v1122 = vpop.f32.mrb[0].mxu0
    %1123 = vmatprep.mubr.bf16.mxu0 0
    %1124 = vmatmul.mubr.bf16.gmra.mrb[0].mxu0 %v990
    %v1125 = vpop.f32.mrb[0].mxu0
    %v1126 = vadd.f32 0.0, %v1125
    %v1127 = vpop.f32.mrb[0].mxu0
    %v1128 = vpop.f32.mrb[0].mxu0
    %v1129 = vadd.f32 0.0, %v1128
    %v1130 = vpop.f32.mrb[0].mxu0
    %1131 = vmatprep.mubr.bf16.mxu0 0
    %1132 = vmatmul.mubr.bf16.gmra.mrb[0].mxu0 %v991
    %v1133 = vpop.f32.mrb[0].mxu0
    %v1134 = vadd.f32 0.0, %v1133
    %v1135 = vpop.f32.mrb[0].mxu0
    %v1136 = vpop.f32.mrb[0].mxu0
    %v1137 = vadd.f32 0.0, %v1136
    %v1138 = vpop.f32.mrb[0].mxu0
    %1139 = vmatprep.mubr.bf16.mxu0 0
    %1140 = vmatmul.mubr.bf16.gmra.mrb[0].mxu0 %v992
    %v1141 = vpop.f32.mrb[0].mxu0
    %v1142 = vadd.f32 0.0, %v1141
    %v1143 = vpop.f32.mrb[0].mxu0
    %v1144 = vpop.f32.mrb[0].mxu0
    %v1145 = vadd.f32 0.0, %v1144
    %v1146 = vpop.f32.mrb[0].mxu0
    %1147 = vmatprep.mubr.bf16.mxu0 0
    %1148 = vmatmul.mubr.bf16.gmra.mrb[0].mxu0 %v993
    %v1149 = vpop.f32.mrb[0].mxu0
    %v1150 = vadd.f32 0.0, %v1149
    %v1151 = vpop.f32.mrb[0].mxu0
    %v1152 = vpop.f32.mrb[0].mxu0
    %v1153 = vadd.f32 0.0, %v1152
    %v1154 = vpop.f32.mrb[0].mxu0
    %1155 = vmatprep.mubr.bf16.mxu0 0
    %1156 = vmatmul.mubr.bf16.gmra.mrb[0].mxu0 %v994
    %v1157 = vpop.f32.mrb[0].mxu0
    %v1158 = vadd.f32 0.0, %v1157
    %v1159 = vpop.f32.mrb[0].mxu0
    %v1160 = vpop.f32.mrb[0].mxu0
    %v1161 = vadd.f32 0.0, %v1160
    %v1162 = vpop.f32.mrb[0].mxu0
    %1163 = vmatprep.mubr.bf16.mxu0 0
    %1164 = vmatmul.mubr.bf16.gmra.mrb[0].mxu0 %v995
    %v1165 = vpop.f32.mrb[0].mxu0
    %v1166 = vadd.f32 0.0, %v1165
    %v1167 = vpop.f32.mrb[0].mxu0
    %v1168 = vpop.f32.mrb[0].mxu0
    %v1169 = vadd.f32 0.0, %v1168
    %v1170 = vpop.f32.mrb[0].mxu0
    %1171 = vmatprep.mubr.bf16.mxu0 0
    %1172 = vmatmul.mubr.bf16.gmra.mrb[0].mxu0 %v996
    %v1173 = vpop.f32.mrb[0].mxu0
    %v1174 = vadd.f32 0.0, %v1173
    %v1175 = vpop.f32.mrb[0].mxu0
    %v1176 = vpop.f32.mrb[0].mxu0
    %v1177 = vadd.f32 0.0, %v1176
    %v1178 = vpop.f32.mrb[0].mxu0
    %1179 = vmatprep.mubr.bf16.mxu0 0
    %1180 = vmatmul.mubr.bf16.gmra.mrb[0].mxu0 %v997
    %v1181 = vpop.f32.mrb[0].mxu0
    %v1182 = vadd.f32 0.0, %v1181
    %v1183 = vpop.f32.mrb[0].mxu0
    %v1184 = vpop.f32.mrb[0].mxu0
    %v1185 = vadd.f32 0.0, %v1184
    %v1186 = vpop.f32.mrb[0].mxu0
    %1187 = vmatprep.mubr.bf16.mxu0 0
    %1188 = vmatmul.mubr.bf16.gmra.mrb[0].mxu0 %v998
    %v1189 = vpop.f32.mrb[0].mxu0
    %v1190 = vadd.f32 0.0, %v1189
    %v1191 = vpop.f32.mrb[0].mxu0
    %v1192 = vpop.f32.mrb[0].mxu0
    %v1193 = vadd.f32 0.0, %v1192
    %v1194 = vpop.f32.mrb[0].mxu0
    %1195 = vmatprep.mubr.bf16.mxu0 0
    %1196 = vmatmul.mubr.bf16.gmra.mrb[0].mxu0 %v999
    %v1197 = vpop.f32.mrb[0].mxu0
    %v1198 = vadd.f32 0.0, %v1197
    %v1199 = vpop.f32.mrb[0].mxu0
    %v1200 = vpop.f32.mrb[0].mxu0
    %v1201 = vadd.f32 0.0, %v1200
    %v1202 = vpop.f32.mrb[0].mxu0
    %1203 = vmatprep.mubr.bf16.mxu0 0
    %1204 = vmatmul.mubr.bf16.gmra.mrb[0].mxu0 %v1000
    %v1205 = vpop.f32.mrb[0].mxu0
    %v1206 = vadd.f32 0.0, %v1205
    %v1207 = vpop.f32.mrb[0].mxu0
    %v1208 = vpop.f32.mrb[0].mxu0
    %v1209 = vadd.f32 0.0, %v1208
    %v1210 = vpop.f32.mrb[0].mxu0
    %1211 = vmatprep.mubr.bf16.mxu0 0
    %1212 = vmatmul.mubr.bf16.gmra.mrb[0].mxu0 %v1001
    %v1213 = vpop.f32.mrb[0].mxu0
    %v1214 = vadd.f32 0.0, %v1213
    %v1215 = vpop.f32.mrb[0].mxu0
    %v1216 = vpop.f32.mrb[0].mxu0
    %v1217 = vadd.f32 0.0, %v1216
    %v1218 = vpop.f32.mrb[0].mxu0
    %1219 = vmatprep.mubr.bf16.mxu0 0
    %1220 = vmatmul.mubr.bf16.gmra.mrb[0].mxu0 %v1002
    %v1221 = vpop.f32.mrb[0].mxu0
    %v1222 = vadd.f32 0.0, %v1221
    %v1223 = vpop.f32.mrb[0].mxu0
    %v1224 = vpop.f32.mrb[0].mxu0
    %v1225 = vadd.f32 0.0, %v1224
    %v1226 = vpop.f32.mrb[0].mxu0
    %1227 = vdwg.mxu0
    %v1228 = vadd.f32 %v749, %v1102
    %v1229 = vadd.f32 %v752, %v1105
    %v1230 = vadd.f32 %v757, %v1110
    %v1231 = vadd.f32 %v760, %v1113
    %v1232 = vadd.f32 %v765, %v1118
    %v1233 = vadd.f32 %v768, %v1121
    %v1234 = vadd.f32 %v773, %v1126
    %v1235 = vadd.f32 %v776, %v1129
    %v1236 = vadd.f32 %v781, %v1134
    %v1237 = vadd.f32 %v784, %v1137
    %v1238 = vadd.f32 %v789, %v1142
    %v1239 = vadd.f32 %v792, %v1145
    %v1240 = vadd.f32 %v797, %v1150
    %v1241 = vadd.f32 %v800, %v1153
    %v1242 = vadd.f32 %v805, %v1158
    %v1243 = vadd.f32 %v808, %v1161
    %v1244 = vadd.f32 %v813, %v1166
    %v1245 = vadd.f32 %v816, %v1169
    %v1246 = vadd.f32 %v821, %v1174
    %v1247 = vadd.f32 %v824, %v1177
    %v1248 = vadd.f32 %v829, %v1182
    %v1249 = vadd.f32 %v832, %v1185
    %v1250 = vadd.f32 %v837, %v1190
    %v1251 = vadd.f32 %v840, %v1193
    %v1252 = vadd.f32 %v845, %v1198
    %v1253 = vadd.f32 %v848, %v1201
    %v1254 = vadd.f32 %v853, %v1206
    %v1255 = vadd.f32 %v856, %v1209
    %v1256 = vadd.f32 %v861, %v1214
    %v1257 = vadd.f32 %v864, %v1217
    %v1258 = vadd.f32 %v869, %v1222
    %v1259 = vadd.f32 %v872, %v1225
    %v1260 = vld [vmem:[#allocation9] sm:$0xf]
    %v1261 = vld [vmem:[#allocation9 + $0x4] sm:$0xf]
    %v1262 = vld [vmem:[#allocation9 + $0x8] sm:$0xf]
    %v1263 = vld [vmem:[#allocation9 + $0xc] sm:$0xf]
    %v1264 = vld [vmem:[#allocation9 + $0x10] sm:$0xf]
    %v1265 = vld [vmem:[#allocation9 + $0x14] sm:$0xf]
    %v1266 = vld [vmem:[#allocation9 + $0x18] sm:$0xf]
    %v1267 = vld [vmem:[#allocation9 + $0x1c] sm:$0xf]
    %v1268 = vld [vmem:[#allocation9 + $0x20] sm:$0xf]
    %v1269 = vld [vmem:[#allocation9 + $0x24] sm:$0xf]
    %v1270 = vld [vmem:[#allocation9 + $0x28] sm:$0xf]
    %v1271 = vld [vmem:[#allocation9 + $0x2c] sm:$0xf]
    %v1272 = vld [vmem:[#allocation9 + $0x30] sm:$0xf]
    %v1273 = vld [vmem:[#allocation9 + $0x34] sm:$0xf]
    %v1274 = vld [vmem:[#allocation9 + $0x38] sm:$0xf]
    %v1275 = vld [vmem:[#allocation9 + $0x3c] sm:$0xf]
    %v1276 = vld [vmem:[#allocation9 + $0x40] sm:$0xf]
    %v1277 = vld [vmem:[#allocation9 + $0x44] sm:$0xf]
    %v1278 = vld [vmem:[#allocation9 + $0x48] sm:$0xf]
    %v1279 = vld [vmem:[#allocation9 + $0x4c] sm:$0xf]
    %v1280 = vld [vmem:[#allocation9 + $0x50] sm:$0xf]
    %v1281 = vld [vmem:[#allocation9 + $0x54] sm:$0xf]
    %v1282 = vld [vmem:[#allocation9 + $0x58] sm:$0xf]
    %v1283 = vld [vmem:[#allocation9 + $0x5c] sm:$0xf]
    %v1284 = vld [vmem:[#allocation9 + $0x60] sm:$0xf]
    %v1285 = vld [vmem:[#allocation9 + $0x64] sm:$0xf]
    %v1286 = vld [vmem:[#allocation9 + $0x68] sm:$0xf]
    %v1287 = vld [vmem:[#allocation9 + $0x6c] sm:$0xf]
    %v1288 = vld [vmem:[#allocation9 + $0x70] sm:$0xf]
    %v1289 = vld [vmem:[#allocation9 + $0x74] sm:$0xf]
    %v1290 = vld [vmem:[#allocation9 + $0x78] sm:$0xf]
    %v1291 = vld [vmem:[#allocation9 + $0x7c] sm:$0xf]
    %v1292 = vld [vmem:[#allocation15 + $0xc0] sm:$0xf]
    %v1293 = vld [vmem:[#allocation15 + $0xc4] sm:$0xf]
    %v1294 = vld [vmem:[#allocation15 + $0xc8] sm:$0xf]
    %v1295 = vld [vmem:[#allocation15 + $0xcc] sm:$0xf]
    %v1296 = vld [vmem:[#allocation15 + $0xd0] sm:$0xf]
    %v1297 = vld [vmem:[#allocation15 + $0xd4] sm:$0xf]
    %v1298 = vld [vmem:[#allocation15 + $0xd8] sm:$0xf]
    %v1299 = vld [vmem:[#allocation15 + $0xdc] sm:$0xf]
    %v1300 = vld [vmem:[#allocation15 + $0xe0] sm:$0xf]
    %v1301 = vld [vmem:[#allocation15 + $0xe4] sm:$0xf]
    %v1302 = vld [vmem:[#allocation15 + $0xe8] sm:$0xf]
    %v1303 = vld [vmem:[#allocation15 + $0xec] sm:$0xf]
    %v1304 = vld [vmem:[#allocation15 + $0xf0] sm:$0xf]
    %v1305 = vld [vmem:[#allocation15 + $0xf4] sm:$0xf]
    %v1306 = vld [vmem:[#allocation15 + $0xf8] sm:$0xf]
    %v1307 = vld [vmem:[#allocation15 + $0xfc] sm:$0xf]
    %v1340 = vunpack.c.l.b16 %v1260
    %v1341 = vunpack.c.l.b16 %v1261
    %v1342 = vunpack.c.l.b16 %v1262
    %v1343 = vunpack.c.l.b16 %v1263
    %v1344 = vunpack.c.l.b16 %v1264
    %v1345 = vunpack.c.l.b16 %v1265
    %v1346 = vunpack.c.l.b16 %v1266
    %v1347 = vunpack.c.l.b16 %v1267
    %v1348 = vunpack.c.l.b16 %v1268
    %v1349 = vunpack.c.l.b16 %v1269
    %v1350 = vunpack.c.l.b16 %v1270
    %v1351 = vunpack.c.l.b16 %v1271
    %v1352 = vunpack.c.l.b16 %v1272
    %v1353 = vunpack.c.l.b16 %v1273
    %v1354 = vunpack.c.l.b16 %v1274
    %v1355 = vunpack.c.l.b16 %v1275
    %v1356 = vunpack.c.l.b16 %v1276
    %v1357 = vunpack.c.l.b16 %v1277
    %v1358 = vunpack.c.l.b16 %v1278
    %v1359 = vunpack.c.l.b16 %v1279
    %v1360 = vunpack.c.l.b16 %v1280
    %v1361 = vunpack.c.l.b16 %v1281
    %v1362 = vunpack.c.l.b16 %v1282
    %v1363 = vunpack.c.l.b16 %v1283
    %v1364 = vunpack.c.l.b16 %v1284
    %v1365 = vunpack.c.l.b16 %v1285
    %v1366 = vunpack.c.l.b16 %v1286
    %v1367 = vunpack.c.l.b16 %v1287
    %v1368 = vunpack.c.l.b16 %v1288
    %v1369 = vunpack.c.l.b16 %v1289
    %v1370 = vunpack.c.l.b16 %v1290
    %v1371 = vunpack.c.l.b16 %v1291
    %v1372 = vpack.c.b16 %v1341, %v1340
    %v1373 = vpack.c.b16 %v1343, %v1342
    %v1374 = vpack.c.b16 %v1345, %v1344
    %v1375 = vpack.c.b16 %v1347, %v1346
    %v1376 = vpack.c.b16 %v1349, %v1348
    %v1377 = vpack.c.b16 %v1351, %v1350
    %v1378 = vpack.c.b16 %v1353, %v1352
    %v1379 = vpack.c.b16 %v1355, %v1354
    %v1380 = vpack.c.b16 %v1357, %v1356
    %v1381 = vpack.c.b16 %v1359, %v1358
    %v1382 = vpack.c.b16 %v1361, %v1360
    %v1383 = vpack.c.b16 %v1363, %v1362
    %v1384 = vpack.c.b16 %v1365, %v1364
    %v1385 = vpack.c.b16 %v1367, %v1366
    %v1386 = vpack.c.b16 %v1369, %v1368
    %v1387 = vpack.c.b16 %v1371, %v1370
    %v1420 = vunpack.c.l.b16 %v1292
    %v1421 = vunpack.c.l.b16 %v1293
    %v1422 = vunpack.c.l.b16 %v1294
    %v1423 = vunpack.c.l.b16 %v1295
    %v1424 = vunpack.c.l.b16 %v1296
    %v1425 = vunpack.c.l.b16 %v1297
    %v1426 = vunpack.c.l.b16 %v1298
    %v1427 = vunpack.c.l.b16 %v1299
    %v1428 = vunpack.c.l.b16 %v1300
    %v1429 = vunpack.c.l.b16 %v1301
    %v1430 = vunpack.c.l.b16 %v1302
    %v1431 = vunpack.c.l.b16 %v1303
    %v1432 = vunpack.c.l.b16 %v1304
    %v1433 = vunpack.c.l.b16 %v1305
    %v1434 = vunpack.c.l.b16 %v1306
    %v1435 = vunpack.c.l.b16 %v1307
    %v1436 = vpack.c.b16 %v1421, %v1420
    %v1437 = vpack.c.b16 %v1423, %v1422
    %v1438 = vpack.c.b16 %v1425, %v1424
    %v1439 = vpack.c.b16 %v1427, %v1426
    %v1440 = vpack.c.b16 %v1429, %v1428
    %v1441 = vpack.c.b16 %v1431, %v1430
    %v1442 = vpack.c.b16 %v1433, %v1432
    %v1443 = vpack.c.b16 %v1435, %v1434
    %1452 = vmatprep.subr.bf16.mxu0 0
    %1453 = vmatpush1.bf16.msra.mxu0 %v1436
    %1454 = vmatprep.subr.bf16.mxu0 0
    %1455 = vmatpush1.bf16.msra.mxu0 %v1437
    %1456 = vmatprep.subr.bf16.mxu0 0
    %1457 = vmatpush1.bf16.msra.mxu0 %v1438
    %1458 = vmatprep.subr.bf16.mxu0 0
    %1459 = vmatpush1.bf16.msra.mxu0 %v1439
    %1460 = vmatprep.subr.bf16.mxu0 0
    %1461 = vmatpush1.bf16.msra.mxu0 %v1440
    %1462 = vmatprep.subr.bf16.mxu0 0
    %1463 = vmatpush1.bf16.msra.mxu0 %v1441
    %1464 = vmatprep.subr.bf16.mxu0 0
    %1465 = vmatpush1.bf16.msra.mxu0 %v1442
    %1466 = vmatprep.subr.bf16.mxu0 0
    %1467 = vmatpush1.bf16.msra.mxu0 %v1443
    %1468 = vmatprep.subr.bf16.mxu0 0
    %1469 = vmatpush1.bf16.msra.mxu0 0
    %1470 = vmatprep.subr.bf16.mxu0 0
    %1471 = vmatpush1.bf16.msra.mxu0 0
    %1472 = vmatprep.subr.bf16.mxu0 0
    %1473 = vmatpush1.bf16.msra.mxu0 0
    %1474 = vmatprep.subr.bf16.mxu0 0
    %1475 = vmatpush1.bf16.msra.mxu0 0
    %1476 = vmatprep.subr.bf16.mxu0 0
    %1477 = vmatpush1.bf16.msra.mxu0 0
    %1478 = vmatprep.subr.bf16.mxu0 0
    %1479 = vmatpush1.bf16.msra.mxu0 0
    %1480 = vmatprep.subr.bf16.mxu0 0
    %1481 = vmatpush1.bf16.msra.mxu0 0
    %1482 = vmatprep.subr.bf16.mxu0 0
    %1483 = vmatpush1.bf16.msra.mxu0 0
    %1484 = vmatprep.mubr.bf16.mxu0 0
    %1485 = vmatmul.mubr.bf16.gmra.mrb[0].mxu0 %v1372
    %v1486 = vpop.f32.mrb[0].mxu0
    %v1487 = vadd.f32 0.0, %v1486
    %v1488 = vpop.f32.mrb[0].mxu0
    %v1489 = vpop.f32.mrb[0].mxu0
    %v1490 = vadd.f32 0.0, %v1489
    %v1491 = vpop.f32.mrb[0].mxu0
    %1492 = vmatprep.mubr.bf16.mxu0 0
    %1493 = vmatmul.mubr.bf16.gmra.mrb[0].mxu0 %v1373
    %v1494 = vpop.f32.mrb[0].mxu0
    %v1495 = vadd.f32 0.0, %v1494
    %v1496 = vpop.f32.mrb[0].mxu0
    %v1497 = vpop.f32.mrb[0].mxu0
    %v1498 = vadd.f32 0.0, %v1497
    %v1499 = vpop.f32.mrb[0].mxu0
    %1500 = vmatprep.mubr.bf16.mxu0 0
    %1501 = vmatmul.mubr.bf16.gmra.mrb[0].mxu0 %v1374
    %v1502 = vpop.f32.mrb[0].mxu0
    %v1503 = vadd.f32 0.0, %v1502
    %v1504 = vpop.f32.mrb[0].mxu0
    %v1505 = vpop.f32.mrb[0].mxu0
    %v1506 = vadd.f32 0.0, %v1505
    %v1507 = vpop.f32.mrb[0].mxu0
    %1508 = vmatprep.mubr.bf16.mxu0 0
    %1509 = vmatmul.mubr.bf16.gmra.mrb[0].mxu0 %v1375
    %v1510 = vpop.f32.mrb[0].mxu0
    %v1511 = vadd.f32 0.0, %v1510
    %v1512 = vpop.f32.mrb[0].mxu0
    %v1513 = vpop.f32.mrb[0].mxu0
    %v1514 = vadd.f32 0.0, %v1513
    %v1515 = vpop.f32.mrb[0].mxu0
    %1516 = vmatprep.mubr.bf16.mxu0 0
    %1517 = vmatmul.mubr.bf16.gmra.mrb[0].mxu0 %v1376
    %v1518 = vpop.f32.mrb[0].mxu0
    %v1519 = vadd.f32 0.0, %v1518
    %v1520 = vpop.f32.mrb[0].mxu0
    %v1521 = vpop.f32.mrb[0].mxu0
    %v1522 = vadd.f32 0.0, %v1521
    %v1523 = vpop.f32.mrb[0].mxu0
    %1524 = vmatprep.mubr.bf16.mxu0 0
    %1525 = vmatmul.mubr.bf16.gmra.mrb[0].mxu0 %v1377
    %v1526 = vpop.f32.mrb[0].mxu0
    %v1527 = vadd.f32 0.0, %v1526
    %v1528 = vpop.f32.mrb[0].mxu0
    %v1529 = vpop.f32.mrb[0].mxu0
    %v1530 = vadd.f32 0.0, %v1529
    %v1531 = vpop.f32.mrb[0].mxu0
    %1532 = vmatprep.mubr.bf16.mxu0 0
    %1533 = vmatmul.mubr.bf16.gmra.mrb[0].mxu0 %v1378
    %v1534 = vpop.f32.mrb[0].mxu0
    %v1535 = vadd.f32 0.0, %v1534
    %v1536 = vpop.f32.mrb[0].mxu0
    %v1537 = vpop.f32.mrb[0].mxu0
    %v1538 = vadd.f32 0.0, %v1537
    %v1539 = vpop.f32.mrb[0].mxu0
    %1540 = vmatprep.mubr.bf16.mxu0 0
    %1541 = vmatmul.mubr.bf16.gmra.mrb[0].mxu0 %v1379
    %v1542 = vpop.f32.mrb[0].mxu0
    %v1543 = vadd.f32 0.0, %v1542
    %v1544 = vpop.f32.mrb[0].mxu0
    %v1545 = vpop.f32.mrb[0].mxu0
    %v1546 = vadd.f32 0.0, %v1545
    %v1547 = vpop.f32.mrb[0].mxu0
    %1548 = vmatprep.mubr.bf16.mxu0 0
    %1549 = vmatmul.mubr.bf16.gmra.mrb[0].mxu0 %v1380
    %v1550 = vpop.f32.mrb[0].mxu0
    %v1551 = vadd.f32 0.0, %v1550
    %v1552 = vpop.f32.mrb[0].mxu0
    %v1553 = vpop.f32.mrb[0].mxu0
    %v1554 = vadd.f32 0.0, %v1553
    %v1555 = vpop.f32.mrb[0].mxu0
    %1556 = vmatprep.mubr.bf16.mxu0 0
    %1557 = vmatmul.mubr.bf16.gmra.mrb[0].mxu0 %v1381
    %v1558 = vpop.f32.mrb[0].mxu0
    %v1559 = vadd.f32 0.0, %v1558
    %v1560 = vpop.f32.mrb[0].mxu0
    %v1561 = vpop.f32.mrb[0].mxu0
    %v1562 = vadd.f32 0.0, %v1561
    %v1563 = vpop.f32.mrb[0].mxu0
    %1564 = vmatprep.mubr.bf16.mxu0 0
    %1565 = vmatmul.mubr.bf16.gmra.mrb[0].mxu0 %v1382
    %v1566 = vpop.f32.mrb[0].mxu0
    %v1567 = vadd.f32 0.0, %v1566
    %v1568 = vpop.f32.mrb[0].mxu0
    %v1569 = vpop.f32.mrb[0].mxu0
    %v1570 = vadd.f32 0.0, %v1569
    %v1571 = vpop.f32.mrb[0].mxu0
    %1572 = vmatprep.mubr.bf16.mxu0 0
    %1573 = vmatmul.mubr.bf16.gmra.mrb[0].mxu0 %v1383
    %v1574 = vpop.f32.mrb[0].mxu0
    %v1575 = vadd.f32 0.0, %v1574
    %v1576 = vpop.f32.mrb[0].mxu0
    %v1577 = vpop.f32.mrb[0].mxu0
    %v1578 = vadd.f32 0.0, %v1577
    %v1579 = vpop.f32.mrb[0].mxu0
    %1580 = vmatprep.mubr.bf16.mxu0 0
    %1581 = vmatmul.mubr.bf16.gmra.mrb[0].mxu0 %v1384
    %v1582 = vpop.f32.mrb[0].mxu0
    %v1583 = vadd.f32 0.0, %v1582
    %v1584 = vpop.f32.mrb[0].mxu0
    %v1585 = vpop.f32.mrb[0].mxu0
    %v1586 = vadd.f32 0.0, %v1585
    %v1587 = vpop.f32.mrb[0].mxu0
    %1588 = vmatprep.mubr.bf16.mxu0 0
    %1589 = vmatmul.mubr.bf16.gmra.mrb[0].mxu0 %v1385
    %v1590 = vpop.f32.mrb[0].mxu0
    %v1591 = vadd.f32 0.0, %v1590
    %v1592 = vpop.f32.mrb[0].mxu0
    %v1593 = vpop.f32.mrb[0].mxu0
    %v1594 = vadd.f32 0.0, %v1593
    %v1595 = vpop.f32.mrb[0].mxu0
    %1596 = vmatprep.mubr.bf16.mxu0 0
    %1597 = vmatmul.mubr.bf16.gmra.mrb[0].mxu0 %v1386
    %v1598 = vpop.f32.mrb[0].mxu0
    %v1599 = vadd.f32 0.0, %v1598
    %v1600 = vpop.f32.mrb[0].mxu0
    %v1601 = vpop.f32.mrb[0].mxu0
    %v1602 = vadd.f32 0.0, %v1601
    %v1603 = vpop.f32.mrb[0].mxu0
    %1604 = vmatprep.mubr.bf16.mxu0 0
    %1605 = vmatmul.mubr.bf16.gmra.mrb[0].mxu0 %v1387
    %v1606 = vpop.f32.mrb[0].mxu0
    %v1607 = vadd.f32 0.0, %v1606
    %v1608 = vpop.f32.mrb[0].mxu0
    %v1609 = vpop.f32.mrb[0].mxu0
    %v1610 = vadd.f32 0.0, %v1609
    %v1611 = vpop.f32.mrb[0].mxu0
    %1612 = vdwg.mxu0
    %v1613 = vadd.f32 %v1228, %v1487
    %v1614 = vadd.f32 %v1229, %v1490
    %v1615 = vadd.f32 %v1230, %v1495
    %v1616 = vadd.f32 %v1231, %v1498
    %v1617 = vadd.f32 %v1232, %v1503
    %v1618 = vadd.f32 %v1233, %v1506
    %v1619 = vadd.f32 %v1234, %v1511
    %v1620 = vadd.f32 %v1235, %v1514
    %v1621 = vadd.f32 %v1236, %v1519
    %v1622 = vadd.f32 %v1237, %v1522
    %v1623 = vadd.f32 %v1238, %v1527
    %v1624 = vadd.f32 %v1239, %v1530
    %v1625 = vadd.f32 %v1240, %v1535
    %v1626 = vadd.f32 %v1241, %v1538
    %v1627 = vadd.f32 %v1242, %v1543
    %v1628 = vadd.f32 %v1243, %v1546
    %v1629 = vadd.f32 %v1244, %v1551
    %v1630 = vadd.f32 %v1245, %v1554
    %v1631 = vadd.f32 %v1246, %v1559
    %v1632 = vadd.f32 %v1247, %v1562
    %v1633 = vadd.f32 %v1248, %v1567
    %v1634 = vadd.f32 %v1249, %v1570
    %v1635 = vadd.f32 %v1250, %v1575
    %v1636 = vadd.f32 %v1251, %v1578
    %v1637 = vadd.f32 %v1252, %v1583
    %v1638 = vadd.f32 %v1253, %v1586
    %v1639 = vadd.f32 %v1254, %v1591
    %v1640 = vadd.f32 %v1255, %v1594
    %v1641 = vadd.f32 %v1256, %v1599
    %v1642 = vadd.f32 %v1257, %v1602
    %v1643 = vadd.f32 %v1258, %v1607
    %v1644 = vadd.f32 %v1259, %v1610
    %v1645 = vld [vmem:[#allocation11] sm:$0xf]
    %v1646 = vld [vmem:[#allocation11 + $0x4] sm:$0xf]
    %v1647 = vld [vmem:[#allocation11 + $0x8] sm:$0xf]
    %v1648 = vld [vmem:[#allocation11 + $0xc] sm:$0xf]
    %v1649 = vld [vmem:[#allocation11 + $0x10] sm:$0xf]
    %v1650 = vld [vmem:[#allocation11 + $0x14] sm:$0xf]
    %v1651 = vld [vmem:[#allocation11 + $0x18] sm:$0xf]
    %v1652 = vld [vmem:[#allocation11 + $0x1c] sm:$0xf]
    %v1653 = vld [vmem:[#allocation11 + $0x20] sm:$0xf]
    %v1654 = vld [vmem:[#allocation11 + $0x24] sm:$0xf]
    %v1655 = vld [vmem:[#allocation11 + $0x28] sm:$0xf]
    %v1656 = vld [vmem:[#allocation11 + $0x2c] sm:$0xf]
    %v1657 = vld [vmem:[#allocation11 + $0x30] sm:$0xf]
    %v1658 = vld [vmem:[#allocation11 + $0x34] sm:$0xf]
    %v1659 = vld [vmem:[#allocation11 + $0x38] sm:$0xf]
    %v1660 = vld [vmem:[#allocation11 + $0x3c] sm:$0xf]
    %v1661 = vld [vmem:[#allocation11 + $0x40] sm:$0xf]
    %v1662 = vld [vmem:[#allocation11 + $0x44] sm:$0xf]
    %v1663 = vld [vmem:[#allocation11 + $0x48] sm:$0xf]
    %v1664 = vld [vmem:[#allocation11 + $0x4c] sm:$0xf]
    %v1665 = vld [vmem:[#allocation11 + $0x50] sm:$0xf]
    %v1666 = vld [vmem:[#allocation11 + $0x54] sm:$0xf]
    %v1667 = vld [vmem:[#allocation11 + $0x58] sm:$0xf]
    %v1668 = vld [vmem:[#allocation11 + $0x5c] sm:$0xf]
    %v1669 = vld [vmem:[#allocation11 + $0x60] sm:$0xf]
    %v1670 = vld [vmem:[#allocation11 + $0x64] sm:$0xf]
    %v1671 = vld [vmem:[#allocation11 + $0x68] sm:$0xf]
    %v1672 = vld [vmem:[#allocation11 + $0x6c] sm:$0xf]
    %v1673 = vld [vmem:[#allocation11 + $0x70] sm:$0xf]
    %v1674 = vld [vmem:[#allocation11 + $0x74] sm:$0xf]
    %v1675 = vld [vmem:[#allocation11 + $0x78] sm:$0xf]
    %v1676 = vld [vmem:[#allocation11 + $0x7c] sm:$0xf]
    %v1677 = vld [vmem:[#allocation15 + $0x100] sm:$0xf]
    %v1678 = vld [vmem:[#allocation15 + $0x104] sm:$0xf]
    %v1679 = vld [vmem:[#allocation15 + $0x108] sm:$0xf]
    %v1680 = vld [vmem:[#allocation15 + $0x10c] sm:$0xf]
    %v1681 = vld [vmem:[#allocation15 + $0x110] sm:$0xf]
    %v1682 = vld [vmem:[#allocation15 + $0x114] sm:$0xf]
    %v1683 = vld [vmem:[#allocation15 + $0x118] sm:$0xf]
    %v1684 = vld [vmem:[#allocation15 + $0x11c] sm:$0xf]
    %v1685 = vld [vmem:[#allocation15 + $0x120] sm:$0xf]
    %v1686 = vld [vmem:[#allocation15 + $0x124] sm:$0xf]
    %v1687 = vld [vmem:[#allocation15 + $0x128] sm:$0xf]
    %v1688 = vld [vmem:[#allocation15 + $0x12c] sm:$0xf]
    %v1689 = vld [vmem:[#allocation15 + $0x130] sm:$0xf]
    %v1690 = vld [vmem:[#allocation15 + $0x134] sm:$0xf]
    %v1691 = vld [vmem:[#allocation15 + $0x138] sm:$0xf]
    %v1692 = vld [vmem:[#allocation15 + $0x13c] sm:$0xf]
    %v1725 = vunpack.c.l.b16 %v1645
    %v1726 = vunpack.c.l.b16 %v1646
    %v1727 = vunpack.c.l.b16 %v1647
    %v1728 = vunpack.c.l.b16 %v1648
    %v1729 = vunpack.c.l.b16 %v1649
    %v1730 = vunpack.c.l.b16 %v1650
    %v1731 = vunpack.c.l.b16 %v1651
    %v1732 = vunpack.c.l.b16 %v1652
    %v1733 = vunpack.c.l.b16 %v1653
    %v1734 = vunpack.c.l.b16 %v1654
    %v1735 = vunpack.c.l.b16 %v1655
    %v1736 = vunpack.c.l.b16 %v1656
    %v1737 = vunpack.c.l.b16 %v1657
    %v1738 = vunpack.c.l.b16 %v1658
    %v1739 = vunpack.c.l.b16 %v1659
    %v1740 = vunpack.c.l.b16 %v1660
    %v1741 = vunpack.c.l.b16 %v1661
    %v1742 = vunpack.c.l.b16 %v1662
    %v1743 = vunpack.c.l.b16 %v1663
    %v1744 = vunpack.c.l.b16 %v1664
    %v1745 = vunpack.c.l.b16 %v1665
    %v1746 = vunpack.c.l.b16 %v1666
    %v1747 = vunpack.c.l.b16 %v1667
    %v1748 = vunpack.c.l.b16 %v1668
    %v1749 = vunpack.c.l.b16 %v1669
    %v1750 = vunpack.c.l.b16 %v1670
    %v1751 = vunpack.c.l.b16 %v1671
    %v1752 = vunpack.c.l.b16 %v1672
    %v1753 = vunpack.c.l.b16 %v1673
    %v1754 = vunpack.c.l.b16 %v1674
    %v1755 = vunpack.c.l.b16 %v1675
    %v1756 = vunpack.c.l.b16 %v1676
    %v1757 = vpack.c.b16 %v1726, %v1725
    %v1758 = vpack.c.b16 %v1728, %v1727
    %v1759 = vpack.c.b16 %v1730, %v1729
    %v1760 = vpack.c.b16 %v1732, %v1731
    %v1761 = vpack.c.b16 %v1734, %v1733
    %v1762 = vpack.c.b16 %v1736, %v1735
    %v1763 = vpack.c.b16 %v1738, %v1737
    %v1764 = vpack.c.b16 %v1740, %v1739
    %v1765 = vpack.c.b16 %v1742, %v1741
    %v1766 = vpack.c.b16 %v1744, %v1743
    %v1767 = vpack.c.b16 %v1746, %v1745
    %v1768 = vpack.c.b16 %v1748, %v1747
    %v1769 = vpack.c.b16 %v1750, %v1749
    %v1770 = vpack.c.b16 %v1752, %v1751
    %v1771 = vpack.c.b16 %v1754, %v1753
    %v1772 = vpack.c.b16 %v1756, %v1755
    %v1805 = vunpack.c.l.b16 %v1677
    %v1806 = vunpack.c.l.b16 %v1678
    %v1807 = vunpack.c.l.b16 %v1679
    %v1808 = vunpack.c.l.b16 %v1680
    %v1809 = vunpack.c.l.b16 %v1681
    %v1810 = vunpack.c.l.b16 %v1682
    %v1811 = vunpack.c.l.b16 %v1683
    %v1812 = vunpack.c.l.b16 %v1684
    %v1813 = vunpack.c.l.b16 %v1685
    %v1814 = vunpack.c.l.b16 %v1686
    %v1815 = vunpack.c.l.b16 %v1687
    %v1816 = vunpack.c.l.b16 %v1688
    %v1817 = vunpack.c.l.b16 %v1689
    %v1818 = vunpack.c.l.b16 %v1690
    %v1819 = vunpack.c.l.b16 %v1691
    %v1820 = vunpack.c.l.b16 %v1692
    %v1821 = vpack.c.b16 %v1806, %v1805
    %v1822 = vpack.c.b16 %v1808, %v1807
    %v1823 = vpack.c.b16 %v1810, %v1809
    %v1824 = vpack.c.b16 %v1812, %v1811
    %v1825 = vpack.c.b16 %v1814, %v1813
    %v1826 = vpack.c.b16 %v1816, %v1815
    %v1827 = vpack.c.b16 %v1818, %v1817
    %v1828 = vpack.c.b16 %v1820, %v1819
    %1837 = vmatprep.subr.bf16.mxu0 0
    %1838 = vmatpush1.bf16.msra.mxu0 %v1821
    %1839 = vmatprep.subr.bf16.mxu0 0
    %1840 = vmatpush1.bf16.msra.mxu0 %v1822
    %1841 = vmatprep.subr.bf16.mxu0 0
    %1842 = vmatpush1.bf16.msra.mxu0 %v1823
    %1843 = vmatprep.subr.bf16.mxu0 0
    %1844 = vmatpush1.bf16.msra.mxu0 %v1824
    %1845 = vmatprep.subr.bf16.mxu0 0
    %1846 = vmatpush1.bf16.msra.mxu0 %v1825
    %1847 = vmatprep.subr.bf16.mxu0 0
    %1848 = vmatpush1.bf16.msra.mxu0 %v1826
    %1849 = vmatprep.subr.bf16.mxu0 0
    %1850 = vmatpush1.bf16.msra.mxu0 %v1827
    %1851 = vmatprep.subr.bf16.mxu0 0
    %1852 = vmatpush1.bf16.msra.mxu0 %v1828
    %1853 = vmatprep.subr.bf16.mxu0 0
    %1854 = vmatpush1.bf16.msra.mxu0 0
    %1855 = vmatprep.subr.bf16.mxu0 0
    %1856 = vmatpush1.bf16.msra.mxu0 0
    %1857 = vmatprep.subr.bf16.mxu0 0
    %1858 = vmatpush1.bf16.msra.mxu0 0
    %1859 = vmatprep.subr.bf16.mxu0 0
    %1860 = vmatpush1.bf16.msra.mxu0 0
    %1861 = vmatprep.subr.bf16.mxu0 0
    %1862 = vmatpush1.bf16.msra.mxu0 0
    %1863 = vmatprep.subr.bf16.mxu0 0
    %1864 = vmatpush1.bf16.msra.mxu0 0
    %1865 = vmatprep.subr.bf16.mxu0 0
    %1866 = vmatpush1.bf16.msra.mxu0 0
    %1867 = vmatprep.subr.bf16.mxu0 0
    %1868 = vmatpush1.bf16.msra.mxu0 0
    %1869 = vmatprep.mubr.bf16.mxu0 0
    %1870 = vmatmul.mubr.bf16.gmra.mrb[0].mxu0 %v1757
    %v1871 = vpop.f32.mrb[0].mxu0
    %v1872 = vadd.f32 0.0, %v1871
    %v1873 = vpop.f32.mrb[0].mxu0
    %v1874 = vpop.f32.mrb[0].mxu0
    %v1875 = vadd.f32 0.0, %v1874
    %v1876 = vpop.f32.mrb[0].mxu0
    %1877 = vmatprep.mubr.bf16.mxu0 0
    %1878 = vmatmul.mubr.bf16.gmra.mrb[0].mxu0 %v1758
    %v1879 = vpop.f32.mrb[0].mxu0
    %v1880 = vadd.f32 0.0, %v1879
    %v1881 = vpop.f32.mrb[0].mxu0
    %v1882 = vpop.f32.mrb[0].mxu0
    %v1883 = vadd.f32 0.0, %v1882
    %v1884 = vpop.f32.mrb[0].mxu0
    %1885 = vmatprep.mubr.bf16.mxu0 0
    %1886 = vmatmul.mubr.bf16.gmra.mrb[0].mxu0 %v1759
    %v1887 = vpop.f32.mrb[0].mxu0
    %v1888 = vadd.f32 0.0, %v1887
    %v1889 = vpop.f32.mrb[0].mxu0
    %v1890 = vpop.f32.mrb[0].mxu0
    %v1891 = vadd.f32 0.0, %v1890
    %v1892 = vpop.f32.mrb[0].mxu0
    %1893 = vmatprep.mubr.bf16.mxu0 0
    %1894 = vmatmul.mubr.bf16.gmra.mrb[0].mxu0 %v1760
    %v1895 = vpop.f32.mrb[0].mxu0
    %v1896 = vadd.f32 0.0, %v1895
    %v1897 = vpop.f32.mrb[0].mxu0
    %v1898 = vpop.f32.mrb[0].mxu0
    %v1899 = vadd.f32 0.0, %v1898
    %v1900 = vpop.f32.mrb[0].mxu0
    %1901 = vmatprep.mubr.bf16.mxu0 0
    %1902 = vmatmul.mubr.bf16.gmra.mrb[0].mxu0 %v1761
    %v1903 = vpop.f32.mrb[0].mxu0
    %v1904 = vadd.f32 0.0, %v1903
    %v1905 = vpop.f32.mrb[0].mxu0
    %v1906 = vpop.f32.mrb[0].mxu0
    %v1907 = vadd.f32 0.0, %v1906
    %v1908 = vpop.f32.mrb[0].mxu0
    %1909 = vmatprep.mubr.bf16.mxu0 0
    %1910 = vmatmul.mubr.bf16.gmra.mrb[0].mxu0 %v1762
    %v1911 = vpop.f32.mrb[0].mxu0
    %v1912 = vadd.f32 0.0, %v1911
    %v1913 = vpop.f32.mrb[0].mxu0
    %v1914 = vpop.f32.mrb[0].mxu0
    %v1915 = vadd.f32 0.0, %v1914
    %v1916 = vpop.f32.mrb[0].mxu0
    %1917 = vmatprep.mubr.bf16.mxu0 0
    %1918 = vmatmul.mubr.bf16.gmra.mrb[0].mxu0 %v1763
    %v1919 = vpop.f32.mrb[0].mxu0
    %v1920 = vadd.f32 0.0, %v1919
    %v1921 = vpop.f32.mrb[0].mxu0
    %v1922 = vpop.f32.mrb[0].mxu0
    %v1923 = vadd.f32 0.0, %v1922
    %v1924 = vpop.f32.mrb[0].mxu0
    %1925 = vmatprep.mubr.bf16.mxu0 0
    %1926 = vmatmul.mubr.bf16.gmra.mrb[0].mxu0 %v1764
    %v1927 = vpop.f32.mrb[0].mxu0
    %v1928 = vadd.f32 0.0, %v1927
    %v1929 = vpop.f32.mrb[0].mxu0
    %v1930 = vpop.f32.mrb[0].mxu0
    %v1931 = vadd.f32 0.0, %v1930
    %v1932 = vpop.f32.mrb[0].mxu0
    %1933 = vmatprep.mubr.bf16.mxu0 0
    %1934 = vmatmul.mubr.bf16.gmra.mrb[0].mxu0 %v1765
    %v1935 = vpop.f32.mrb[0].mxu0
    %v1936 = vadd.f32 0.0, %v1935
    %v1937 = vpop.f32.mrb[0].mxu0
    %v1938 = vpop.f32.mrb[0].mxu0
    %v1939 = vadd.f32 0.0, %v1938
    %v1940 = vpop.f32.mrb[0].mxu0
    %1941 = vmatprep.mubr.bf16.mxu0 0
    %1942 = vmatmul.mubr.bf16.gmra.mrb[0].mxu0 %v1766
    %v1943 = vpop.f32.mrb[0].mxu0
    %v1944 = vadd.f32 0.0, %v1943
    %v1945 = vpop.f32.mrb[0].mxu0
    %v1946 = vpop.f32.mrb[0].mxu0
    %v1947 = vadd.f32 0.0, %v1946
    %v1948 = vpop.f32.mrb[0].mxu0
    %1949 = vmatprep.mubr.bf16.mxu0 0
    %1950 = vmatmul.mubr.bf16.gmra.mrb[0].mxu0 %v1767
    %v1951 = vpop.f32.mrb[0].mxu0
    %v1952 = vadd.f32 0.0, %v1951
    %v1953 = vpop.f32.mrb[0].mxu0
    %v1954 = vpop.f32.mrb[0].mxu0
    %v1955 = vadd.f32 0.0, %v1954
    %v1956 = vpop.f32.mrb[0].mxu0
    %1957 = vmatprep.mubr.bf16.mxu0 0
    %1958 = vmatmul.mubr.bf16.gmra.mrb[0].mxu0 %v1768
    %v1959 = vpop.f32.mrb[0].mxu0
    %v1960 = vadd.f32 0.0, %v1959
    %v1961 = vpop.f32.mrb[0].mxu0
    %v1962 = vpop.f32.mrb[0].mxu0
    %v1963 = vadd.f32 0.0, %v1962
    %v1964 = vpop.f32.mrb[0].mxu0
    %1965 = vmatprep.mubr.bf16.mxu0 0
    %1966 = vmatmul.mubr.bf16.gmra.mrb[0].mxu0 %v1769
    %v1967 = vpop.f32.mrb[0].mxu0
    %v1968 = vadd.f32 0.0, %v1967
    %v1969 = vpop.f32.mrb[0].mxu0
    %v1970 = vpop.f32.mrb[0].mxu0
    %v1971 = vadd.f32 0.0, %v1970
    %v1972 = vpop.f32.mrb[0].mxu0
    %1973 = vmatprep.mubr.bf16.mxu0 0
    %1974 = vmatmul.mubr.bf16.gmra.mrb[0].mxu0 %v1770
    %v1975 = vpop.f32.mrb[0].mxu0
    %v1976 = vadd.f32 0.0, %v1975
    %v1977 = vpop.f32.mrb[0].mxu0
    %v1978 = vpop.f32.mrb[0].mxu0
    %v1979 = vadd.f32 0.0, %v1978
    %v1980 = vpop.f32.mrb[0].mxu0
    %1981 = vmatprep.mubr.bf16.mxu0 0
    %1982 = vmatmul.mubr.bf16.gmra.mrb[0].mxu0 %v1771
    %v1983 = vpop.f32.mrb[0].mxu0
    %v1984 = vadd.f32 0.0, %v1983
    %v1985 = vpop.f32.mrb[0].mxu0
    %v1986 = vpop.f32.mrb[0].mxu0
    %v1987 = vadd.f32 0.0, %v1986
    %v1988 = vpop.f32.mrb[0].mxu0
    %1989 = vmatprep.mubr.bf16.mxu0 0
    %1990 = vmatmul.mubr.bf16.gmra.mrb[0].mxu0 %v1772
    %v1991 = vpop.f32.mrb[0].mxu0
    %v1992 = vadd.f32 0.0, %v1991
    %v1993 = vpop.f32.mrb[0].mxu0
    %v1994 = vpop.f32.mrb[0].mxu0
    %v1995 = vadd.f32 0.0, %v1994
    %v1996 = vpop.f32.mrb[0].mxu0
    %1997 = vdwg.mxu0
    %v1998 = vadd.f32 %v1613, %v1872
    %v1999 = vadd.f32 %v1614, %v1875
    %v2000 = vadd.f32 %v1615, %v1880
    %v2001 = vadd.f32 %v1616, %v1883
    %v2002 = vadd.f32 %v1617, %v1888
    %v2003 = vadd.f32 %v1618, %v1891
    %v2004 = vadd.f32 %v1619, %v1896
    %v2005 = vadd.f32 %v1620, %v1899
    %v2006 = vadd.f32 %v1621, %v1904
    %v2007 = vadd.f32 %v1622, %v1907
    %v2008 = vadd.f32 %v1623, %v1912
    %v2009 = vadd.f32 %v1624, %v1915
    %v2010 = vadd.f32 %v1625, %v1920
    %v2011 = vadd.f32 %v1626, %v1923
    %v2012 = vadd.f32 %v1627, %v1928
    %v2013 = vadd.f32 %v1628, %v1931
    %v2014 = vadd.f32 %v1629, %v1936
    %v2015 = vadd.f32 %v1630, %v1939
    %v2016 = vadd.f32 %v1631, %v1944
    %v2017 = vadd.f32 %v1632, %v1947
    %v2018 = vadd.f32 %v1633, %v1952
    %v2019 = vadd.f32 %v1634, %v1955
    %v2020 = vadd.f32 %v1635, %v1960
    %v2021 = vadd.f32 %v1636, %v1963
    %v2022 = vadd.f32 %v1637, %v1968
    %v2023 = vadd.f32 %v1638, %v1971
    %v2024 = vadd.f32 %v1639, %v1976
    %v2025 = vadd.f32 %v1640, %v1979
    %v2026 = vadd.f32 %v1641, %v1984
    %v2027 = vadd.f32 %v1642, %v1987
    %v2028 = vadd.f32 %v1643, %v1992
    %v2029 = vadd.f32 %v1644, %v1995
    %v2030 = vld [vmem:[#allocation12] sm:$0xf]
    %v2031 = vld [vmem:[#allocation12 + $0x4] sm:$0xf]
    %v2032 = vld [vmem:[#allocation12 + $0x8] sm:$0xf]
    %v2033 = vld [vmem:[#allocation12 + $0xc] sm:$0xf]
    %v2034 = vld [vmem:[#allocation12 + $0x10] sm:$0xf]
    %v2035 = vld [vmem:[#allocation12 + $0x14] sm:$0xf]
    %v2036 = vld [vmem:[#allocation12 + $0x18] sm:$0xf]
    %v2037 = vld [vmem:[#allocation12 + $0x1c] sm:$0xf]
    %v2038 = vld [vmem:[#allocation12 + $0x20] sm:$0xf]
    %v2039 = vld [vmem:[#allocation12 + $0x24] sm:$0xf]
    %v2040 = vld [vmem:[#allocation12 + $0x28] sm:$0xf]
    %v2041 = vld [vmem:[#allocation12 + $0x2c] sm:$0xf]
    %v2042 = vld [vmem:[#allocation12 + $0x30] sm:$0xf]
    %v2043 = vld [vmem:[#allocation12 + $0x34] sm:$0xf]
    %v2044 = vld [vmem:[#allocation12 + $0x38] sm:$0xf]
    %v2045 = vld [vmem:[#allocation12 + $0x3c] sm:$0xf]
    %v2046 = vld [vmem:[#allocation12 + $0x40] sm:$0xf]
    %v2047 = vld [vmem:[#allocation12 + $0x44] sm:$0xf]
    %v2048 = vld [vmem:[#allocation12 + $0x48] sm:$0xf]
    %v2049 = vld [vmem:[#allocation12 + $0x4c] sm:$0xf]
    %v2050 = vld [vmem:[#allocation12 + $0x50] sm:$0xf]
    %v2051 = vld [vmem:[#allocation12 + $0x54] sm:$0xf]
    %v2052 = vld [vmem:[#allocation12 + $0x58] sm:$0xf]
    %v2053 = vld [vmem:[#allocation12 + $0x5c] sm:$0xf]
    %v2054 = vld [vmem:[#allocation12 + $0x60] sm:$0xf]
    %v2055 = vld [vmem:[#allocation12 + $0x64] sm:$0xf]
    %v2056 = vld [vmem:[#allocation12 + $0x68] sm:$0xf]
    %v2057 = vld [vmem:[#allocation12 + $0x6c] sm:$0xf]
    %v2058 = vld [vmem:[#allocation12 + $0x70] sm:$0xf]
    %v2059 = vld [vmem:[#allocation12 + $0x74] sm:$0xf]
    %v2060 = vld [vmem:[#allocation12 + $0x78] sm:$0xf]
    %v2061 = vld [vmem:[#allocation12 + $0x7c] sm:$0xf]
    %v2062 = vld [vmem:[#allocation15 + $0x140] sm:$0xf]
    %v2063 = vld [vmem:[#allocation15 + $0x144] sm:$0xf]
    %v2064 = vld [vmem:[#allocation15 + $0x148] sm:$0xf]
    %v2065 = vld [vmem:[#allocation15 + $0x14c] sm:$0xf]
    %v2066 = vld [vmem:[#allocation15 + $0x150] sm:$0xf]
    %v2067 = vld [vmem:[#allocation15 + $0x154] sm:$0xf]
    %v2068 = vld [vmem:[#allocation15 + $0x158] sm:$0xf]
    %v2069 = vld [vmem:[#allocation15 + $0x15c] sm:$0xf]
    %v2070 = vld [vmem:[#allocation15 + $0x160] sm:$0xf]
    %v2071 = vld [vmem:[#allocation15 + $0x164] sm:$0xf]
    %v2072 = vld [vmem:[#allocation15 + $0x168] sm:$0xf]
    %v2073 = vld [vmem:[#allocation15 + $0x16c] sm:$0xf]
    %v2074 = vld [vmem:[#allocation15 + $0x170] sm:$0xf]
    %v2075 = vld [vmem:[#allocation15 + $0x174] sm:$0xf]
    %v2076 = vld [vmem:[#allocation15 + $0x178] sm:$0xf]
    %v2077 = vld [vmem:[#allocation15 + $0x17c] sm:$0xf]
    %v2110 = vunpack.c.l.b16 %v2030
    %v2111 = vunpack.c.l.b16 %v2031
    %v2112 = vunpack.c.l.b16 %v2032
    %v2113 = vunpack.c.l.b16 %v2033
    %v2114 = vunpack.c.l.b16 %v2034
    %v2115 = vunpack.c.l.b16 %v2035
    %v2116 = vunpack.c.l.b16 %v2036
    %v2117 = vunpack.c.l.b16 %v2037
    %v2118 = vunpack.c.l.b16 %v2038
    %v2119 = vunpack.c.l.b16 %v2039
    %v2120 = vunpack.c.l.b16 %v2040
    %v2121 = vunpack.c.l.b16 %v2041
    %v2122 = vunpack.c.l.b16 %v2042
    %v2123 = vunpack.c.l.b16 %v2043
    %v2124 = vunpack.c.l.b16 %v2044
    %v2125 = vunpack.c.l.b16 %v2045
    %v2126 = vunpack.c.l.b16 %v2046
    %v2127 = vunpack.c.l.b16 %v2047
    %v2128 = vunpack.c.l.b16 %v2048
    %v2129 = vunpack.c.l.b16 %v2049
    %v2130 = vunpack.c.l.b16 %v2050
    %v2131 = vunpack.c.l.b16 %v2051
    %v2132 = vunpack.c.l.b16 %v2052
    %v2133 = vunpack.c.l.b16 %v2053
    %v2134 = vunpack.c.l.b16 %v2054
    %v2135 = vunpack.c.l.b16 %v2055
    %v2136 = vunpack.c.l.b16 %v2056
    %v2137 = vunpack.c.l.b16 %v2057
    %v2138 = vunpack.c.l.b16 %v2058
    %v2139 = vunpack.c.l.b16 %v2059
    %v2140 = vunpack.c.l.b16 %v2060
    %v2141 = vunpack.c.l.b16 %v2061
    %v2142 = vpack.c.b16 %v2111, %v2110
    %v2143 = vpack.c.b16 %v2113, %v2112
    %v2144 = vpack.c.b16 %v2115, %v2114
    %v2145 = vpack.c.b16 %v2117, %v2116
    %v2146 = vpack.c.b16 %v2119, %v2118
    %v2147 = vpack.c.b16 %v2121, %v2120
    %v2148 = vpack.c.b16 %v2123, %v2122
    %v2149 = vpack.c.b16 %v2125, %v2124
    %v2150 = vpack.c.b16 %v2127, %v2126
    %v2151 = vpack.c.b16 %v2129, %v2128
    %v2152 = vpack.c.b16 %v2131, %v2130
    %v2153 = vpack.c.b16 %v2133, %v2132
    %v2154 = vpack.c.b16 %v2135, %v2134
    %v2155 = vpack.c.b16 %v2137, %v2136
    %v2156 = vpack.c.b16 %v2139, %v2138
    %v2157 = vpack.c.b16 %v2141, %v2140
    %v2190 = vunpack.c.l.b16 %v2062
    %v2191 = vunpack.c.l.b16 %v2063
    %v2192 = vunpack.c.l.b16 %v2064
    %v2193 = vunpack.c.l.b16 %v2065
    %v2194 = vunpack.c.l.b16 %v2066
    %v2195 = vunpack.c.l.b16 %v2067
    %v2196 = vunpack.c.l.b16 %v2068
    %v2197 = vunpack.c.l.b16 %v2069
    %v2198 = vunpack.c.l.b16 %v2070
    %v2199 = vunpack.c.l.b16 %v2071
    %v2200 = vunpack.c.l.b16 %v2072
    %v2201 = vunpack.c.l.b16 %v2073
    %v2202 = vunpack.c.l.b16 %v2074
    %v2203 = vunpack.c.l.b16 %v2075
    %v2204 = vunpack.c.l.b16 %v2076
    %v2205 = vunpack.c.l.b16 %v2077
    %v2206 = vpack.c.b16 %v2191, %v2190
    %v2207 = vpack.c.b16 %v2193, %v2192
    %v2208 = vpack.c.b16 %v2195, %v2194
    %v2209 = vpack.c.b16 %v2197, %v2196
    %v2210 = vpack.c.b16 %v2199, %v2198
    %v2211 = vpack.c.b16 %v2201, %v2200
    %v2212 = vpack.c.b16 %v2203, %v2202
    %v2213 = vpack.c.b16 %v2205, %v2204
    %2222 = vmatprep.subr.bf16.mxu0 0
    %2223 = vmatpush1.bf16.msra.mxu0 %v2206
    %2224 = vmatprep.subr.bf16.mxu0 0
    %2225 = vmatpush1.bf16.msra.mxu0 %v2207
    %2226 = vmatprep.subr.bf16.mxu0 0
    %2227 = vmatpush1.bf16.msra.mxu0 %v2208
    %2228 = vmatprep.subr.bf16.mxu0 0
    %2229 = vmatpush1.bf16.msra.mxu0 %v2209
    %2230 = vmatprep.subr.bf16.mxu0 0
    %2231 = vmatpush1.bf16.msra.mxu0 %v2210
    %2232 = vmatprep.subr.bf16.mxu0 0
    %2233 = vmatpush1.bf16.msra.mxu0 %v2211
    %2234 = vmatprep.subr.bf16.mxu0 0
    %2235 = vmatpush1.bf16.msra.mxu0 %v2212
    %2236 = vmatprep.subr.bf16.mxu0 0
    %2237 = vmatpush1.bf16.msra.mxu0 %v2213
    %2238 = vmatprep.subr.bf16.mxu0 0
    %2239 = vmatpush1.bf16.msra.mxu0 0
    %2240 = vmatprep.subr.bf16.mxu0 0
    %2241 = vmatpush1.bf16.msra.mxu0 0
    %2242 = vmatprep.subr.bf16.mxu0 0
    %2243 = vmatpush1.bf16.msra.mxu0 0
    %2244 = vmatprep.subr.bf16.mxu0 0
    %2245 = vmatpush1.bf16.msra.mxu0 0
    %2246 = vmatprep.subr.bf16.mxu0 0
    %2247 = vmatpush1.bf16.msra.mxu0 0
    %2248 = vmatprep.subr.bf16.mxu0 0
    %2249 = vmatpush1.bf16.msra.mxu0 0
    %2250 = vmatprep.subr.bf16.mxu0 0
    %2251 = vmatpush1.bf16.msra.mxu0 0
    %2252 = vmatprep.subr.bf16.mxu0 0
    %2253 = vmatpush1.bf16.msra.mxu0 0
    %2254 = vmatprep.mubr.bf16.mxu0 0
    %2255 = vmatmul.mubr.bf16.gmra.mrb[0].mxu0 %v2142
    %v2256 = vpop.f32.mrb[0].mxu0
    %v2257 = vadd.f32 0.0, %v2256
    %v2258 = vpop.f32.mrb[0].mxu0
    %v2259 = vpop.f32.mrb[0].mxu0
    %v2260 = vadd.f32 0.0, %v2259
    %v2261 = vpop.f32.mrb[0].mxu0
    %2262 = vmatprep.mubr.bf16.mxu0 0
    %2263 = vmatmul.mubr.bf16.gmra.mrb[0].mxu0 %v2143
    %v2264 = vpop.f32.mrb[0].mxu0
    %v2265 = vadd.f32 0.0, %v2264
    %v2266 = vpop.f32.mrb[0].mxu0
    %v2267 = vpop.f32.mrb[0].mxu0
    %v2268 = vadd.f32 0.0, %v2267
    %v2269 = vpop.f32.mrb[0].mxu0
    %2270 = vmatprep.mubr.bf16.mxu0 0
    %2271 = vmatmul.mubr.bf16.gmra.mrb[0].mxu0 %v2144
    %v2272 = vpop.f32.mrb[0].mxu0
    %v2273 = vadd.f32 0.0, %v2272
    %v2274 = vpop.f32.mrb[0].mxu0
    %v2275 = vpop.f32.mrb[0].mxu0
    %v2276 = vadd.f32 0.0, %v2275
    %v2277 = vpop.f32.mrb[0].mxu0
    %2278 = vmatprep.mubr.bf16.mxu0 0
    %2279 = vmatmul.mubr.bf16.gmra.mrb[0].mxu0 %v2145
    %v2280 = vpop.f32.mrb[0].mxu0
    %v2281 = vadd.f32 0.0, %v2280
    %v2282 = vpop.f32.mrb[0].mxu0
    %v2283 = vpop.f32.mrb[0].mxu0
    %v2284 = vadd.f32 0.0, %v2283
    %v2285 = vpop.f32.mrb[0].mxu0
    %2286 = vmatprep.mubr.bf16.mxu0 0
    %2287 = vmatmul.mubr.bf16.gmra.mrb[0].mxu0 %v2146
    %v2288 = vpop.f32.mrb[0].mxu0
    %v2289 = vadd.f32 0.0, %v2288
    %v2290 = vpop.f32.mrb[0].mxu0
    %v2291 = vpop.f32.mrb[0].mxu0
    %v2292 = vadd.f32 0.0, %v2291
    %v2293 = vpop.f32.mrb[0].mxu0
    %2294 = vmatprep.mubr.bf16.mxu0 0
    %2295 = vmatmul.mubr.bf16.gmra.mrb[0].mxu0 %v2147
    %v2296 = vpop.f32.mrb[0].mxu0
    %v2297 = vadd.f32 0.0, %v2296
    %v2298 = vpop.f32.mrb[0].mxu0
    %v2299 = vpop.f32.mrb[0].mxu0
    %v2300 = vadd.f32 0.0, %v2299
    %v2301 = vpop.f32.mrb[0].mxu0
    %2302 = vmatprep.mubr.bf16.mxu0 0
    %2303 = vmatmul.mubr.bf16.gmra.mrb[0].mxu0 %v2148
    %v2304 = vpop.f32.mrb[0].mxu0
    %v2305 = vadd.f32 0.0, %v2304
    %v2306 = vpop.f32.mrb[0].mxu0
    %v2307 = vpop.f32.mrb[0].mxu0
    %v2308 = vadd.f32 0.0, %v2307
    %v2309 = vpop.f32.mrb[0].mxu0
    %2310 = vmatprep.mubr.bf16.mxu0 0
    %2311 = vmatmul.mubr.bf16.gmra.mrb[0].mxu0 %v2149
    %v2312 = vpop.f32.mrb[0].mxu0
    %v2313 = vadd.f32 0.0, %v2312
    %v2314 = vpop.f32.mrb[0].mxu0
    %v2315 = vpop.f32.mrb[0].mxu0
    %v2316 = vadd.f32 0.0, %v2315
    %v2317 = vpop.f32.mrb[0].mxu0
    %2318 = vmatprep.mubr.bf16.mxu0 0
    %2319 = vmatmul.mubr.bf16.gmra.mrb[0].mxu0 %v2150
    %v2320 = vpop.f32.mrb[0].mxu0
    %v2321 = vadd.f32 0.0, %v2320
    %v2322 = vpop.f32.mrb[0].mxu0
    %v2323 = vpop.f32.mrb[0].mxu0
    %v2324 = vadd.f32 0.0, %v2323
    %v2325 = vpop.f32.mrb[0].mxu0
    %2326 = vmatprep.mubr.bf16.mxu0 0
    %2327 = vmatmul.mubr.bf16.gmra.mrb[0].mxu0 %v2151
    %v2328 = vpop.f32.mrb[0].mxu0
    %v2329 = vadd.f32 0.0, %v2328
    %v2330 = vpop.f32.mrb[0].mxu0
    %v2331 = vpop.f32.mrb[0].mxu0
    %v2332 = vadd.f32 0.0, %v2331
    %v2333 = vpop.f32.mrb[0].mxu0
    %2334 = vmatprep.mubr.bf16.mxu0 0
    %2335 = vmatmul.mubr.bf16.gmra.mrb[0].mxu0 %v2152
    %v2336 = vpop.f32.mrb[0].mxu0
    %v2337 = vadd.f32 0.0, %v2336
    %v2338 = vpop.f32.mrb[0].mxu0
    %v2339 = vpop.f32.mrb[0].mxu0
    %v2340 = vadd.f32 0.0, %v2339
    %v2341 = vpop.f32.mrb[0].mxu0
    %2342 = vmatprep.mubr.bf16.mxu0 0
    %2343 = vmatmul.mubr.bf16.gmra.mrb[0].mxu0 %v2153
    %v2344 = vpop.f32.mrb[0].mxu0
    %v2345 = vadd.f32 0.0, %v2344
    %v2346 = vpop.f32.mrb[0].mxu0
    %v2347 = vpop.f32.mrb[0].mxu0
    %v2348 = vadd.f32 0.0, %v2347
    %v2349 = vpop.f32.mrb[0].mxu0
    %2350 = vmatprep.mubr.bf16.mxu0 0
    %2351 = vmatmul.mubr.bf16.gmra.mrb[0].mxu0 %v2154
    %v2352 = vpop.f32.mrb[0].mxu0
    %v2353 = vadd.f32 0.0, %v2352
    %v2354 = vpop.f32.mrb[0].mxu0
    %v2355 = vpop.f32.mrb[0].mxu0
    %v2356 = vadd.f32 0.0, %v2355
    %v2357 = vpop.f32.mrb[0].mxu0
    %2358 = vmatprep.mubr.bf16.mxu0 0
    %2359 = vmatmul.mubr.bf16.gmra.mrb[0].mxu0 %v2155
    %v2360 = vpop.f32.mrb[0].mxu0
    %v2361 = vadd.f32 0.0, %v2360
    %v2362 = vpop.f32.mrb[0].mxu0
    %v2363 = vpop.f32.mrb[0].mxu0
    %v2364 = vadd.f32 0.0, %v2363
    %v2365 = vpop.f32.mrb[0].mxu0
    %2366 = vmatprep.mubr.bf16.mxu0 0
    %2367 = vmatmul.mubr.bf16.gmra.mrb[0].mxu0 %v2156
    %v2368 = vpop.f32.mrb[0].mxu0
    %v2369 = vadd.f32 0.0, %v2368
    %v2370 = vpop.f32.mrb[0].mxu0
    %v2371 = vpop.f32.mrb[0].mxu0
    %v2372 = vadd.f32 0.0, %v2371
    %v2373 = vpop.f32.mrb[0].mxu0
    %2374 = vmatprep.mubr.bf16.mxu0 0
    %2375 = vmatmul.mubr.bf16.gmra.mrb[0].mxu0 %v2157
    %v2376 = vpop.f32.mrb[0].mxu0
    %v2377 = vadd.f32 0.0, %v2376
    %v2378 = vpop.f32.mrb[0].mxu0
    %v2379 = vpop.f32.mrb[0].mxu0
    %v2380 = vadd.f32 0.0, %v2379
    %v2381 = vpop.f32.mrb[0].mxu0
    %2382 = vdwg.mxu0
    %v2383 = vadd.f32 %v1998, %v2257
    %v2384 = vadd.f32 %v1999, %v2260
    %v2385 = vadd.f32 %v2000, %v2265
    %v2386 = vadd.f32 %v2001, %v2268
    %v2387 = vadd.f32 %v2002, %v2273
    %v2388 = vadd.f32 %v2003, %v2276
    %v2389 = vadd.f32 %v2004, %v2281
    %v2390 = vadd.f32 %v2005, %v2284
    %v2391 = vadd.f32 %v2006, %v2289
    %v2392 = vadd.f32 %v2007, %v2292
    %v2393 = vadd.f32 %v2008, %v2297
    %v2394 = vadd.f32 %v2009, %v2300
    %v2395 = vadd.f32 %v2010, %v2305
    %v2396 = vadd.f32 %v2011, %v2308
    %v2397 = vadd.f32 %v2012, %v2313
    %v2398 = vadd.f32 %v2013, %v2316
    %v2399 = vadd.f32 %v2014, %v2321
    %v2400 = vadd.f32 %v2015, %v2324
    %v2401 = vadd.f32 %v2016, %v2329
    %v2402 = vadd.f32 %v2017, %v2332
    %v2403 = vadd.f32 %v2018, %v2337
    %v2404 = vadd.f32 %v2019, %v2340
    %v2405 = vadd.f32 %v2020, %v2345
    %v2406 = vadd.f32 %v2021, %v2348
    %v2407 = vadd.f32 %v2022, %v2353
    %v2408 = vadd.f32 %v2023, %v2356
    %v2409 = vadd.f32 %v2024, %v2361
    %v2410 = vadd.f32 %v2025, %v2364
    %v2411 = vadd.f32 %v2026, %v2369
    %v2412 = vadd.f32 %v2027, %v2372
    %v2413 = vadd.f32 %v2028, %v2377
    %v2414 = vadd.f32 %v2029, %v2380
    %v2415 = vld [vmem:[#allocation14] sm:$0xf]
    %v2416 = vld [vmem:[#allocation14 + $0x4] sm:$0xf]
    %v2417 = vld [vmem:[#allocation14 + $0x8] sm:$0xf]
    %v2418 = vld [vmem:[#allocation14 + $0xc] sm:$0xf]
    %v2419 = vld [vmem:[#allocation14 + $0x10] sm:$0xf]
    %v2420 = vld [vmem:[#allocation14 + $0x14] sm:$0xf]
    %v2421 = vld [vmem:[#allocation14 + $0x18] sm:$0xf]
    %v2422 = vld [vmem:[#allocation14 + $0x1c] sm:$0xf]
    %v2423 = vld [vmem:[#allocation14 + $0x20] sm:$0xf]
    %v2424 = vld [vmem:[#allocation14 + $0x24] sm:$0xf]
    %v2425 = vld [vmem:[#allocation14 + $0x28] sm:$0xf]
    %v2426 = vld [vmem:[#allocation14 + $0x2c] sm:$0xf]
    %v2427 = vld [vmem:[#allocation14 + $0x30] sm:$0xf]
    %v2428 = vld [vmem:[#allocation14 + $0x34] sm:$0xf]
    %v2429 = vld [vmem:[#allocation14 + $0x38] sm:$0xf]
    %v2430 = vld [vmem:[#allocation14 + $0x3c] sm:$0xf]
    %v2431 = vld [vmem:[#allocation14 + $0x40] sm:$0xf]
    %v2432 = vld [vmem:[#allocation14 + $0x44] sm:$0xf]
    %v2433 = vld [vmem:[#allocation14 + $0x48] sm:$0xf]
    %v2434 = vld [vmem:[#allocation14 + $0x4c] sm:$0xf]
    %v2435 = vld [vmem:[#allocation14 + $0x50] sm:$0xf]
    %v2436 = vld [vmem:[#allocation14 + $0x54] sm:$0xf]
    %v2437 = vld [vmem:[#allocation14 + $0x58] sm:$0xf]
    %v2438 = vld [vmem:[#allocation14 + $0x5c] sm:$0xf]
    %v2439 = vld [vmem:[#allocation14 + $0x60] sm:$0xf]
    %v2440 = vld [vmem:[#allocation14 + $0x64] sm:$0xf]
    %v2441 = vld [vmem:[#allocation14 + $0x68] sm:$0xf]
    %v2442 = vld [vmem:[#allocation14 + $0x6c] sm:$0xf]
    %v2443 = vld [vmem:[#allocation14 + $0x70] sm:$0xf]
    %v2444 = vld [vmem:[#allocation14 + $0x74] sm:$0xf]
    %v2445 = vld [vmem:[#allocation14 + $0x78] sm:$0xf]
    %v2446 = vld [vmem:[#allocation14 + $0x7c] sm:$0xf]
    %v2447 = vld [vmem:[#allocation15 + $0x180] sm:$0xf]
    %v2448 = vld [vmem:[#allocation15 + $0x184] sm:$0xf]
    %v2449 = vld [vmem:[#allocation15 + $0x188] sm:$0xf]
    %v2450 = vld [vmem:[#allocation15 + $0x18c] sm:$0xf]
    %v2451 = vld [vmem:[#allocation15 + $0x190] sm:$0xf]
    %v2452 = vld [vmem:[#allocation15 + $0x194] sm:$0xf]
    %v2453 = vld [vmem:[#allocation15 + $0x198] sm:$0xf]
    %v2454 = vld [vmem:[#allocation15 + $0x19c] sm:$0xf]
    %v2455 = vld [vmem:[#allocation15 + $0x1a0] sm:$0xf]
    %v2456 = vld [vmem:[#allocation15 + $0x1a4] sm:$0xf]
    %v2457 = vld [vmem:[#allocation15 + $0x1a8] sm:$0xf]
    %v2458 = vld [vmem:[#allocation15 + $0x1ac] sm:$0xf]
    %v2459 = vld [vmem:[#allocation15 + $0x1b0] sm:$0xf]
    %v2460 = vld [vmem:[#allocation15 + $0x1b4] sm:$0xf]
    %v2461 = vld [vmem:[#allocation15 + $0x1b8] sm:$0xf]
    %v2462 = vld [vmem:[#allocation15 + $0x1bc] sm:$0xf]
    %v2495 = vunpack.c.l.b16 %v2415
    %v2496 = vunpack.c.l.b16 %v2416
    %v2497 = vunpack.c.l.b16 %v2417
    %v2498 = vunpack.c.l.b16 %v2418
    %v2499 = vunpack.c.l.b16 %v2419
    %v2500 = vunpack.c.l.b16 %v2420
    %v2501 = vunpack.c.l.b16 %v2421
    %v2502 = vunpack.c.l.b16 %v2422
    %v2503 = vunpack.c.l.b16 %v2423
    %v2504 = vunpack.c.l.b16 %v2424
    %v2505 = vunpack.c.l.b16 %v2425
    %v2506 = vunpack.c.l.b16 %v2426
    %v2507 = vunpack.c.l.b16 %v2427
    %v2508 = vunpack.c.l.b16 %v2428
    %v2509 = vunpack.c.l.b16 %v2429
    %v2510 = vunpack.c.l.b16 %v2430
    %v2511 = vunpack.c.l.b16 %v2431
    %v2512 = vunpack.c.l.b16 %v2432
    %v2513 = vunpack.c.l.b16 %v2433
    %v2514 = vunpack.c.l.b16 %v2434
    %v2515 = vunpack.c.l.b16 %v2435
    %v2516 = vunpack.c.l.b16 %v2436
    %v2517 = vunpack.c.l.b16 %v2437
    %v2518 = vunpack.c.l.b16 %v2438
    %v2519 = vunpack.c.l.b16 %v2439
    %v2520 = vunpack.c.l.b16 %v2440
    %v2521 = vunpack.c.l.b16 %v2441
    %v2522 = vunpack.c.l.b16 %v2442
    %v2523 = vunpack.c.l.b16 %v2443
    %v2524 = vunpack.c.l.b16 %v2444
    %v2525 = vunpack.c.l.b16 %v2445
    %v2526 = vunpack.c.l.b16 %v2446
    %v2527 = vpack.c.b16 %v2496, %v2495
    %v2528 = vpack.c.b16 %v2498, %v2497
    %v2529 = vpack.c.b16 %v2500, %v2499
    %v2530 = vpack.c.b16 %v2502, %v2501
    %v2531 = vpack.c.b16 %v2504, %v2503
    %v2532 = vpack.c.b16 %v2506, %v2505
    %v2533 = vpack.c.b16 %v2508, %v2507
    %v2534 = vpack.c.b16 %v2510, %v2509
    %v2535 = vpack.c.b16 %v2512, %v2511
    %v2536 = vpack.c.b16 %v2514, %v2513
    %v2537 = vpack.c.b16 %v2516, %v2515
    %v2538 = vpack.c.b16 %v2518, %v2517
    %v2539 = vpack.c.b16 %v2520, %v2519
    %v2540 = vpack.c.b16 %v2522, %v2521
    %v2541 = vpack.c.b16 %v2524, %v2523
    %v2542 = vpack.c.b16 %v2526, %v2525
    %v2575 = vunpack.c.l.b16 %v2447
    %v2576 = vunpack.c.l.b16 %v2448
    %v2577 = vunpack.c.l.b16 %v2449
    %v2578 = vunpack.c.l.b16 %v2450
    %v2579 = vunpack.c.l.b16 %v2451
    %v2580 = vunpack.c.l.b16 %v2452
    %v2581 = vunpack.c.l.b16 %v2453
    %v2582 = vunpack.c.l.b16 %v2454
    %v2583 = vunpack.c.l.b16 %v2455
    %v2584 = vunpack.c.l.b16 %v2456
    %v2585 = vunpack.c.l.b16 %v2457
    %v2586 = vunpack.c.l.b16 %v2458
    %v2587 = vunpack.c.l.b16 %v2459
    %v2588 = vunpack.c.l.b16 %v2460
    %v2589 = vunpack.c.l.b16 %v2461
    %v2590 = vunpack.c.l.b16 %v2462
    %v2591 = vpack.c.b16 %v2576, %v2575
    %v2592 = vpack.c.b16 %v2578, %v2577
    %v2593 = vpack.c.b16 %v2580, %v2579
    %v2594 = vpack.c.b16 %v2582, %v2581
    %v2595 = vpack.c.b16 %v2584, %v2583
    %v2596 = vpack.c.b16 %v2586, %v2585
    %v2597 = vpack.c.b16 %v2588, %v2587
    %v2598 = vpack.c.b16 %v2590, %v2589
    %2607 = vmatprep.subr.bf16.mxu0 0
    %2608 = vmatpush1.bf16.msra.mxu0 %v2591
    %2609 = vmatprep.subr.bf16.mxu0 0
    %2610 = vmatpush1.bf16.msra.mxu0 %v2592
    %2611 = vmatprep.subr.bf16.mxu0 0
    %2612 = vmatpush1.bf16.msra.mxu0 %v2593
    %2613 = vmatprep.subr.bf16.mxu0 0
    %2614 = vmatpush1.bf16.msra.mxu0 %v2594
    %2615 = vmatprep.subr.bf16.mxu0 0
    %2616 = vmatpush1.bf16.msra.mxu0 %v2595
    %2617 = vmatprep.subr.bf16.mxu0 0
    %2618 = vmatpush1.bf16.msra.mxu0 %v2596
    %2619 = vmatprep.subr.bf16.mxu0 0
    %2620 = vmatpush1.bf16.msra.mxu0 %v2597
    %2621 = vmatprep.subr.bf16.mxu0 0
    %2622 = vmatpush1.bf16.msra.mxu0 %v2598
    %2623 = vmatprep.subr.bf16.mxu0 0
    %2624 = vmatpush1.bf16.msra.mxu0 0
    %2625 = vmatprep.subr.bf16.mxu0 0
    %2626 = vmatpush1.bf16.msra.mxu0 0
    %2627 = vmatprep.subr.bf16.mxu0 0
    %2628 = vmatpush1.bf16.msra.mxu0 0
    %2629 = vmatprep.subr.bf16.mxu0 0
    %2630 = vmatpush1.bf16.msra.mxu0 0
    %2631 = vmatprep.subr.bf16.mxu0 0
    %2632 = vmatpush1.bf16.msra.mxu0 0
    %2633 = vmatprep.subr.bf16.mxu0 0
    %2634 = vmatpush1.bf16.msra.mxu0 0
    %2635 = vmatprep.subr.bf16.mxu0 0
    %2636 = vmatpush1.bf16.msra.mxu0 0
    %2637 = vmatprep.subr.bf16.mxu0 0
    %2638 = vmatpush1.bf16.msra.mxu0 0
    %2639 = vmatprep.mubr.bf16.mxu0 0
    %2640 = vmatmul.mubr.bf16.gmra.mrb[0].mxu0 %v2527
    %v2641 = vpop.f32.mrb[0].mxu0
    %v2642 = vadd.f32 0.0, %v2641
    %v2643 = vpop.f32.mrb[0].mxu0
    %v2644 = vpop.f32.mrb[0].mxu0
    %v2645 = vadd.f32 0.0, %v2644
    %v2646 = vpop.f32.mrb[0].mxu0
    %2647 = vmatprep.mubr.bf16.mxu0 0
    %2648 = vmatmul.mubr.bf16.gmra.mrb[0].mxu0 %v2528
    %v2649 = vpop.f32.mrb[0].mxu0
    %v2650 = vadd.f32 0.0, %v2649
    %v2651 = vpop.f32.mrb[0].mxu0
    %v2652 = vpop.f32.mrb[0].mxu0
    %v2653 = vadd.f32 0.0, %v2652
    %v2654 = vpop.f32.mrb[0].mxu0
    %2655 = vmatprep.mubr.bf16.mxu0 0
    %2656 = vmatmul.mubr.bf16.gmra.mrb[0].mxu0 %v2529
    %v2657 = vpop.f32.mrb[0].mxu0
    %v2658 = vadd.f32 0.0, %v2657
    %v2659 = vpop.f32.mrb[0].mxu0
    %v2660 = vpop.f32.mrb[0].mxu0
    %v2661 = vadd.f32 0.0, %v2660
    %v2662 = vpop.f32.mrb[0].mxu0
    %2663 = vmatprep.mubr.bf16.mxu0 0
    %2664 = vmatmul.mubr.bf16.gmra.mrb[0].mxu0 %v2530
    %v2665 = vpop.f32.mrb[0].mxu0
    %v2666 = vadd.f32 0.0, %v2665
    %v2667 = vpop.f32.mrb[0].mxu0
    %v2668 = vpop.f32.mrb[0].mxu0
    %v2669 = vadd.f32 0.0, %v2668
    %v2670 = vpop.f32.mrb[0].mxu0
    %2671 = vmatprep.mubr.bf16.mxu0 0
    %2672 = vmatmul.mubr.bf16.gmra.mrb[0].mxu0 %v2531
    %v2673 = vpop.f32.mrb[0].mxu0
    %v2674 = vadd.f32 0.0, %v2673
    %v2675 = vpop.f32.mrb[0].mxu0
    %v2676 = vpop.f32.mrb[0].mxu0
    %v2677 = vadd.f32 0.0, %v2676
    %v2678 = vpop.f32.mrb[0].mxu0
    %2679 = vmatprep.mubr.bf16.mxu0 0
    %2680 = vmatmul.mubr.bf16.gmra.mrb[0].mxu0 %v2532
    %v2681 = vpop.f32.mrb[0].mxu0
    %v2682 = vadd.f32 0.0, %v2681
    %v2683 = vpop.f32.mrb[0].mxu0
    %v2684 = vpop.f32.mrb[0].mxu0
    %v2685 = vadd.f32 0.0, %v2684
    %v2686 = vpop.f32.mrb[0].mxu0
    %2687 = vmatprep.mubr.bf16.mxu0 0
    %2688 = vmatmul.mubr.bf16.gmra.mrb[0].mxu0 %v2533
    %v2689 = vpop.f32.mrb[0].mxu0
    %v2690 = vadd.f32 0.0, %v2689
    %v2691 = vpop.f32.mrb[0].mxu0
    %v2692 = vpop.f32.mrb[0].mxu0
    %v2693 = vadd.f32 0.0, %v2692
    %v2694 = vpop.f32.mrb[0].mxu0
    %2695 = vmatprep.mubr.bf16.mxu0 0
    %2696 = vmatmul.mubr.bf16.gmra.mrb[0].mxu0 %v2534
    %v2697 = vpop.f32.mrb[0].mxu0
    %v2698 = vadd.f32 0.0, %v2697
    %v2699 = vpop.f32.mrb[0].mxu0
    %v2700 = vpop.f32.mrb[0].mxu0
    %v2701 = vadd.f32 0.0, %v2700
    %v2702 = vpop.f32.mrb[0].mxu0
    %2703 = vmatprep.mubr.bf16.mxu0 0
    %2704 = vmatmul.mubr.bf16.gmra.mrb[0].mxu0 %v2535
    %v2705 = vpop.f32.mrb[0].mxu0
    %v2706 = vadd.f32 0.0, %v2705
    %v2707 = vpop.f32.mrb[0].mxu0
    %v2708 = vpop.f32.mrb[0].mxu0
    %v2709 = vadd.f32 0.0, %v2708
    %v2710 = vpop.f32.mrb[0].mxu0
    %2711 = vmatprep.mubr.bf16.mxu0 0
    %2712 = vmatmul.mubr.bf16.gmra.mrb[0].mxu0 %v2536
    %v2713 = vpop.f32.mrb[0].mxu0
    %v2714 = vadd.f32 0.0, %v2713
    %v2715 = vpop.f32.mrb[0].mxu0
    %v2716 = vpop.f32.mrb[0].mxu0
    %v2717 = vadd.f32 0.0, %v2716
    %v2718 = vpop.f32.mrb[0].mxu0
    %2719 = vmatprep.mubr.bf16.mxu0 0
    %2720 = vmatmul.mubr.bf16.gmra.mrb[0].mxu0 %v2537
    %v2721 = vpop.f32.mrb[0].mxu0
    %v2722 = vadd.f32 0.0, %v2721
    %v2723 = vpop.f32.mrb[0].mxu0
    %v2724 = vpop.f32.mrb[0].mxu0
    %v2725 = vadd.f32 0.0, %v2724
    %v2726 = vpop.f32.mrb[0].mxu0
    %2727 = vmatprep.mubr.bf16.mxu0 0
    %2728 = vmatmul.mubr.bf16.gmra.mrb[0].mxu0 %v2538
    %v2729 = vpop.f32.mrb[0].mxu0
    %v2730 = vadd.f32 0.0, %v2729
    %v2731 = vpop.f32.mrb[0].mxu0
    %v2732 = vpop.f32.mrb[0].mxu0
    %v2733 = vadd.f32 0.0, %v2732
    %v2734 = vpop.f32.mrb[0].mxu0
    %2735 = vmatprep.mubr.bf16.mxu0 0
    %2736 = vmatmul.mubr.bf16.gmra.mrb[0].mxu0 %v2539
    %v2737 = vpop.f32.mrb[0].mxu0
    %v2738 = vadd.f32 0.0, %v2737
    %v2739 = vpop.f32.mrb[0].mxu0
    %v2740 = vpop.f32.mrb[0].mxu0
    %v2741 = vadd.f32 0.0, %v2740
    %v2742 = vpop.f32.mrb[0].mxu0
    %2743 = vmatprep.mubr.bf16.mxu0 0
    %2744 = vmatmul.mubr.bf16.gmra.mrb[0].mxu0 %v2540
    %v2745 = vpop.f32.mrb[0].mxu0
    %v2746 = vadd.f32 0.0, %v2745
    %v2747 = vpop.f32.mrb[0].mxu0
    %v2748 = vpop.f32.mrb[0].mxu0
    %v2749 = vadd.f32 0.0, %v2748
    %v2750 = vpop.f32.mrb[0].mxu0
    %2751 = vmatprep.mubr.bf16.mxu0 0
    %2752 = vmatmul.mubr.bf16.gmra.mrb[0].mxu0 %v2541
    %v2753 = vpop.f32.mrb[0].mxu0
    %v2754 = vadd.f32 0.0, %v2753
    %v2755 = vpop.f32.mrb[0].mxu0
    %v2756 = vpop.f32.mrb[0].mxu0
    %v2757 = vadd.f32 0.0, %v2756
    %v2758 = vpop.f32.mrb[0].mxu0
    %2759 = vmatprep.mubr.bf16.mxu0 0
    %2760 = vmatmul.mubr.bf16.gmra.mrb[0].mxu0 %v2542
    %v2761 = vpop.f32.mrb[0].mxu0
    %v2762 = vadd.f32 0.0, %v2761
    %v2763 = vpop.f32.mrb[0].mxu0
    %v2764 = vpop.f32.mrb[0].mxu0
    %v2765 = vadd.f32 0.0, %v2764
    %v2766 = vpop.f32.mrb[0].mxu0
    %2767 = vdwg.mxu0
    %v2768 = vadd.f32 %v2383, %v2642
    %v2769 = vadd.f32 %v2384, %v2645
    %v2770 = vadd.f32 %v2385, %v2650
    %v2771 = vadd.f32 %v2386, %v2653
    %v2772 = vadd.f32 %v2387, %v2658
    %v2773 = vadd.f32 %v2388, %v2661
    %v2774 = vadd.f32 %v2389, %v2666
    %v2775 = vadd.f32 %v2390, %v2669
    %v2776 = vadd.f32 %v2391, %v2674
    %v2777 = vadd.f32 %v2392, %v2677
    %v2778 = vadd.f32 %v2393, %v2682
    %v2779 = vadd.f32 %v2394, %v2685
    %v2780 = vadd.f32 %v2395, %v2690
    %v2781 = vadd.f32 %v2396, %v2693
    %v2782 = vadd.f32 %v2397, %v2698
    %v2783 = vadd.f32 %v2398, %v2701
    %v2784 = vadd.f32 %v2399, %v2706
    %v2785 = vadd.f32 %v2400, %v2709
    %v2786 = vadd.f32 %v2401, %v2714
    %v2787 = vadd.f32 %v2402, %v2717
    %v2788 = vadd.f32 %v2403, %v2722
    %v2789 = vadd.f32 %v2404, %v2725
    %v2790 = vadd.f32 %v2405, %v2730
    %v2791 = vadd.f32 %v2406, %v2733
    %v2792 = vadd.f32 %v2407, %v2738
    %v2793 = vadd.f32 %v2408, %v2741
    %v2794 = vadd.f32 %v2409, %v2746
    %v2795 = vadd.f32 %v2410, %v2749
    %v2796 = vadd.f32 %v2411, %v2754
    %v2797 = vadd.f32 %v2412, %v2757
    %v2798 = vadd.f32 %v2413, %v2762
    %v2799 = vadd.f32 %v2414, %v2765
    %v2800 = vld [vmem:[%s8] sm:$0x1]
    %v2802 = vlaneseq
    %v2803 = vshrl.u32 %v2802, 7
    %v2804 = vsub.s32 0, %v2803
    %v2805 = vrot.slane %v2800, %v2804
    %v2807 = vadd.f32 %v2768, %v2805
    %v2808 = vadd.f32 %v2769, %v2805
    %v2809 = vadd.f32 %v2770, %v2805
    %v2810 = vadd.f32 %v2771, %v2805
    %v2811 = vadd.f32 %v2772, %v2805
    %v2812 = vadd.f32 %v2773, %v2805
    %v2813 = vadd.f32 %v2774, %v2805
    %v2814 = vadd.f32 %v2775, %v2805
    %v2815 = vadd.f32 %v2776, %v2805
    %v2816 = vadd.f32 %v2777, %v2805
    %v2817 = vadd.f32 %v2778, %v2805
    %v2818 = vadd.f32 %v2779, %v2805
    %v2819 = vadd.f32 %v2780, %v2805
    %v2820 = vadd.f32 %v2781, %v2805
    %v2821 = vadd.f32 %v2782, %v2805
    %v2822 = vadd.f32 %v2783, %v2805
    %v2823 = vadd.f32 %v2784, %v2805
    %v2824 = vadd.f32 %v2785, %v2805
    %v2825 = vadd.f32 %v2786, %v2805
    %v2826 = vadd.f32 %v2787, %v2805
    %v2827 = vadd.f32 %v2788, %v2805
    %v2828 = vadd.f32 %v2789, %v2805
    %v2829 = vadd.f32 %v2790, %v2805
    %v2830 = vadd.f32 %v2791, %v2805
    %v2831 = vadd.f32 %v2792, %v2805
    %v2832 = vadd.f32 %v2793, %v2805
    %v2833 = vadd.f32 %v2794, %v2805
    %v2834 = vadd.f32 %v2795, %v2805
    %v2835 = vadd.f32 %v2796, %v2805
    %v2836 = vadd.f32 %v2797, %v2805
    %v2837 = vadd.f32 %v2798, %v2805
    %v2838 = vadd.f32 %v2799, %v2805
    %v2839 = vmax.f32 %v2807, 0.0
    %v2840 = vmax.f32 %v2808, 0.0
    %v2841 = vmax.f32 %v2809, 0.0
    %v2842 = vmax.f32 %v2810, 0.0
    %v2843 = vmax.f32 %v2811, 0.0
    %v2844 = vmax.f32 %v2812, 0.0
    %v2845 = vmax.f32 %v2813, 0.0
    %v2846 = vmax.f32 %v2814, 0.0
    %v2847 = vmax.f32 %v2815, 0.0
    %v2848 = vmax.f32 %v2816, 0.0
    %v2849 = vmax.f32 %v2817, 0.0
    %v2850 = vmax.f32 %v2818, 0.0
    %v2851 = vmax.f32 %v2819, 0.0
    %v2852 = vmax.f32 %v2820, 0.0
    %v2853 = vmax.f32 %v2821, 0.0
    %v2854 = vmax.f32 %v2822, 0.0
    %v2855 = vmax.f32 %v2823, 0.0
    %v2856 = vmax.f32 %v2824, 0.0
    %v2857 = vmax.f32 %v2825, 0.0
    %v2858 = vmax.f32 %v2826, 0.0
    %v2859 = vmax.f32 %v2827, 0.0
    %v2860 = vmax.f32 %v2828, 0.0
    %v2861 = vmax.f32 %v2829, 0.0
    %v2862 = vmax.f32 %v2830, 0.0
    %v2863 = vmax.f32 %v2831, 0.0
    %v2864 = vmax.f32 %v2832, 0.0
    %v2865 = vmax.f32 %v2833, 0.0
    %v2866 = vmax.f32 %v2834, 0.0
    %v2867 = vmax.f32 %v2835, 0.0
    %v2868 = vmax.f32 %v2836, 0.0
    %v2869 = vmax.f32 %v2837, 0.0
    %v2870 = vmax.f32 %v2838, 0.0
    %v2871 = vpack.c.bf16 %v2840, %v2839
    %v2872 = vpack.c.bf16 %v2842, %v2841
    %v2873 = vpack.c.bf16 %v2844, %v2843
    %v2874 = vpack.c.bf16 %v2846, %v2845
    %v2875 = vpack.c.bf16 %v2848, %v2847
    %v2876 = vpack.c.bf16 %v2850, %v2849
    %v2877 = vpack.c.bf16 %v2852, %v2851
    %v2878 = vpack.c.bf16 %v2854, %v2853
    %v2879 = vpack.c.bf16 %v2856, %v2855
    %v2880 = vpack.c.bf16 %v2858, %v2857
    %v2881 = vpack.c.bf16 %v2860, %v2859
    %v2882 = vpack.c.bf16 %v2862, %v2861
    %v2883 = vpack.c.bf16 %v2864, %v2863
    %v2884 = vpack.c.bf16 %v2866, %v2865
    %v2885 = vpack.c.bf16 %v2868, %v2867
    %v2886 = vpack.c.bf16 %v2870, %v2869
    %v2887 = vld [vmem:[#allocation17] sm:$0xf]
    %v2888 = vld [vmem:[#allocation17 + $0x4] sm:$0xf]
    %v2889 = vld [vmem:[#allocation17 + $0x8] sm:$0xf]
    %v2890 = vld [vmem:[#allocation17 + $0xc] sm:$0xf]
    %v2891 = vld [vmem:[#allocation17 + $0x10] sm:$0xf]
    %v2892 = vld [vmem:[#allocation17 + $0x14] sm:$0xf]
    %v2893 = vld [vmem:[#allocation17 + $0x18] sm:$0xf]
    %v2894 = vld [vmem:[#allocation17 + $0x1c] sm:$0xf]
    %v2895 = vld [vmem:[#allocation17 + $0x20] sm:$0xf]
    %v2896 = vld [vmem:[#allocation17 + $0x24] sm:$0xf]
    %v2897 = vld [vmem:[#allocation17 + $0x28] sm:$0xf]
    %v2898 = vld [vmem:[#allocation17 + $0x2c] sm:$0xf]
    %v2899 = vld [vmem:[#allocation17 + $0x30] sm:$0xf]
    %v2900 = vld [vmem:[#allocation17 + $0x34] sm:$0xf]
    %v2901 = vld [vmem:[#allocation17 + $0x38] sm:$0xf]
    %v2902 = vld [vmem:[#allocation17 + $0x3c] sm:$0xf]
    %v2903 = vld [vmem:[%s10] sm:$0x1]
    %v2905 = vlaneseq
    %v2906 = vshrl.u32 %v2905, 7
    %v2907 = vsub.s32 0, %v2906
    %v2908 = vrot.slane %v2903, %v2907
    %v2926 = vunpack.c.l.b16 %v2887
    %v2927 = vunpack.c.l.b16 %v2888
    %v2928 = vunpack.c.l.b16 %v2889
    %v2929 = vunpack.c.l.b16 %v2890
    %v2930 = vunpack.c.l.b16 %v2891
    %v2931 = vunpack.c.l.b16 %v2892
    %v2932 = vunpack.c.l.b16 %v2893
    %v2933 = vunpack.c.l.b16 %v2894
    %v2934 = vunpack.c.l.b16 %v2895
    %v2935 = vunpack.c.l.b16 %v2896
    %v2936 = vunpack.c.l.b16 %v2897
    %v2937 = vunpack.c.l.b16 %v2898
    %v2938 = vunpack.c.l.b16 %v2899
    %v2939 = vunpack.c.l.b16 %v2900
    %v2940 = vunpack.c.l.b16 %v2901
    %v2941 = vunpack.c.l.b16 %v2902
    %v2942 = vpack.c.b16 %v2927, %v2926
    %v2943 = vpack.c.b16 %v2929, %v2928
    %v2944 = vpack.c.b16 %v2931, %v2930
    %v2945 = vpack.c.b16 %v2933, %v2932
    %v2946 = vpack.c.b16 %v2935, %v2934
    %v2947 = vpack.c.b16 %v2937, %v2936
    %v2948 = vpack.c.b16 %v2939, %v2938
    %v2949 = vpack.c.b16 %v2941, %v2940
    %2958 = vmatprep.subr.bf16.mxu0 0
    %2959 = vmatpush1.bf16.msra.mxu0 %v2942
    %2960 = vmatprep.subr.bf16.mxu0 0
    %2961 = vmatpush1.bf16.msra.mxu0 %v2943
    %2962 = vmatprep.subr.bf16.mxu0 0
    %2963 = vmatpush1.bf16.msra.mxu0 %v2944
    %2964 = vmatprep.subr.bf16.mxu0 0
    %2965 = vmatpush1.bf16.msra.mxu0 %v2945
    %2966 = vmatprep.subr.bf16.mxu0 0
    %2967 = vmatpush1.bf16.msra.mxu0 %v2946
    %2968 = vmatprep.subr.bf16.mxu0 0
    %2969 = vmatpush1.bf16.msra.mxu0 %v2947
    %2970 = vmatprep.subr.bf16.mxu0 0
    %2971 = vmatpush1.bf16.msra.mxu0 %v2948
    %2972 = vmatprep.subr.bf16.mxu0 0
    %2973 = vmatpush1.bf16.msra.mxu0 %v2949
    %2974 = vmatprep.subr.bf16.mxu0 0
    %2975 = vmatpush1.bf16.msra.mxu0 0
    %2976 = vmatprep.subr.bf16.mxu0 0
    %2977 = vmatpush1.bf16.msra.mxu0 0
    %2978 = vmatprep.subr.bf16.mxu0 0
    %2979 = vmatpush1.bf16.msra.mxu0 0
    %2980 = vmatprep.subr.bf16.mxu0 0
    %2981 = vmatpush1.bf16.msra.mxu0 0
    %2982 = vmatprep.subr.bf16.mxu0 0
    %2983 = vmatpush1.bf16.msra.mxu0 0
    %2984 = vmatprep.subr.bf16.mxu0 0
    %2985 = vmatpush1.bf16.msra.mxu0 0
    %2986 = vmatprep.subr.bf16.mxu0 0
    %2987 = vmatpush1.bf16.msra.mxu0 0
    %2988 = vmatprep.subr.bf16.mxu0 0
    %2989 = vmatpush1.bf16.msra.mxu0 0
    %2990 = vmatprep.mubr.bf16.mxu0 0
    %2991 = vmatmul.mubr.bf16.gmra.mrb[0].mxu0 %v2871
    %v2992 = vpop.f32.mrb[0].mxu0
    %v2993 = vadd.f32 %v2908, %v2992
    %v2994 = vpop.f32.mrb[0].mxu0
    %v2995 = vpop.f32.mrb[0].mxu0
    %v2996 = vadd.f32 %v2908, %v2995
    %v2997 = vpop.f32.mrb[0].mxu0
    %2998 = vmatprep.mubr.bf16.mxu0 0
    %2999 = vmatmul.mubr.bf16.gmra.mrb[0].mxu0 %v2872
    %v3000 = vpop.f32.mrb[0].mxu0
    %v3001 = vadd.f32 %v2908, %v3000
    %v3002 = vpop.f32.mrb[0].mxu0
    %v3003 = vpop.f32.mrb[0].mxu0
    %v3004 = vadd.f32 %v2908, %v3003
    %v3005 = vpop.f32.mrb[0].mxu0
    %3006 = vmatprep.mubr.bf16.mxu0 0
    %3007 = vmatmul.mubr.bf16.gmra.mrb[0].mxu0 %v2873
    %v3008 = vpop.f32.mrb[0].mxu0
    %v3009 = vadd.f32 %v2908, %v3008
    %v3010 = vpop.f32.mrb[0].mxu0
    %v3011 = vpop.f32.mrb[0].mxu0
    %v3012 = vadd.f32 %v2908, %v3011
    %v3013 = vpop.f32.mrb[0].mxu0
    %3014 = vmatprep.mubr.bf16.mxu0 0
    %3015 = vmatmul.mubr.bf16.gmra.mrb[0].mxu0 %v2874
    %v3016 = vpop.f32.mrb[0].mxu0
    %v3017 = vadd.f32 %v2908, %v3016
    %v3018 = vpop.f32.mrb[0].mxu0
    %v3019 = vpop.f32.mrb[0].mxu0
    %v3020 = vadd.f32 %v2908, %v3019
    %v3021 = vpop.f32.mrb[0].mxu0
    %3022 = vmatprep.mubr.bf16.mxu0 0
    %3023 = vmatmul.mubr.bf16.gmra.mrb[0].mxu0 %v2875
    %v3024 = vpop.f32.mrb[0].mxu0
    %v3025 = vadd.f32 %v2908, %v3024
    %v3026 = vpop.f32.mrb[0].mxu0
    %v3027 = vpop.f32.mrb[0].mxu0
    %v3028 = vadd.f32 %v2908, %v3027
    %v3029 = vpop.f32.mrb[0].mxu0
    %3030 = vmatprep.mubr.bf16.mxu0 0
    %3031 = vmatmul.mubr.bf16.gmra.mrb[0].mxu0 %v2876
    %v3032 = vpop.f32.mrb[0].mxu0
    %v3033 = vadd.f32 %v2908, %v3032
    %v3034 = vpop.f32.mrb[0].mxu0
    %v3035 = vpop.f32.mrb[0].mxu0
    %v3036 = vadd.f32 %v2908, %v3035
    %v3037 = vpop.f32.mrb[0].mxu0
    %3038 = vmatprep.mubr.bf16.mxu0 0
    %3039 = vmatmul.mubr.bf16.gmra.mrb[0].mxu0 %v2877
    %v3040 = vpop.f32.mrb[0].mxu0
    %v3041 = vadd.f32 %v2908, %v3040
    %v3042 = vpop.f32.mrb[0].mxu0
    %v3043 = vpop.f32.mrb[0].mxu0
    %v3044 = vadd.f32 %v2908, %v3043
    %v3045 = vpop.f32.mrb[0].mxu0
    %3046 = vmatprep.mubr.bf16.mxu0 0
    %3047 = vmatmul.mubr.bf16.gmra.mrb[0].mxu0 %v2878
    %v3048 = vpop.f32.mrb[0].mxu0
    %v3049 = vadd.f32 %v2908, %v3048
    %v3050 = vpop.f32.mrb[0].mxu0
    %v3051 = vpop.f32.mrb[0].mxu0
    %v3052 = vadd.f32 %v2908, %v3051
    %v3053 = vpop.f32.mrb[0].mxu0
    %3054 = vmatprep.mubr.bf16.mxu0 0
    %3055 = vmatmul.mubr.bf16.gmra.mrb[0].mxu0 %v2879
    %v3056 = vpop.f32.mrb[0].mxu0
    %v3057 = vadd.f32 %v2908, %v3056
    %v3058 = vpop.f32.mrb[0].mxu0
    %v3059 = vpop.f32.mrb[0].mxu0
    %v3060 = vadd.f32 %v2908, %v3059
    %v3061 = vpop.f32.mrb[0].mxu0
    %3062 = vmatprep.mubr.bf16.mxu0 0
    %3063 = vmatmul.mubr.bf16.gmra.mrb[0].mxu0 %v2880
    %v3064 = vpop.f32.mrb[0].mxu0
    %v3065 = vadd.f32 %v2908, %v3064
    %v3066 = vpop.f32.mrb[0].mxu0
    %v3067 = vpop.f32.mrb[0].mxu0
    %v3068 = vadd.f32 %v2908, %v3067
    %v3069 = vpop.f32.mrb[0].mxu0
    %3070 = vmatprep.mubr.bf16.mxu0 0
    %3071 = vmatmul.mubr.bf16.gmra.mrb[0].mxu0 %v2881
    %v3072 = vpop.f32.mrb[0].mxu0
    %v3073 = vadd.f32 %v2908, %v3072
    %v3074 = vpop.f32.mrb[0].mxu0
    %v3075 = vpop.f32.mrb[0].mxu0
    %v3076 = vadd.f32 %v2908, %v3075
    %v3077 = vpop.f32.mrb[0].mxu0
    %3078 = vmatprep.mubr.bf16.mxu0 0
    %3079 = vmatmul.mubr.bf16.gmra.mrb[0].mxu0 %v2882
    %v3080 = vpop.f32.mrb[0].mxu0
    %v3081 = vadd.f32 %v2908, %v3080
    %v3082 = vpop.f32.mrb[0].mxu0
    %v3083 = vpop.f32.mrb[0].mxu0
    %v3084 = vadd.f32 %v2908, %v3083
    %v3085 = vpop.f32.mrb[0].mxu0
    %3086 = vmatprep.mubr.bf16.mxu0 0
    %3087 = vmatmul.mubr.bf16.gmra.mrb[0].mxu0 %v2883
    %v3088 = vpop.f32.mrb[0].mxu0
    %v3089 = vadd.f32 %v2908, %v3088
    %v3090 = vpop.f32.mrb[0].mxu0
    %v3091 = vpop.f32.mrb[0].mxu0
    %v3092 = vadd.f32 %v2908, %v3091
    %v3093 = vpop.f32.mrb[0].mxu0
    %3094 = vmatprep.mubr.bf16.mxu0 0
    %3095 = vmatmul.mubr.bf16.gmra.mrb[0].mxu0 %v2884
    %v3096 = vpop.f32.mrb[0].mxu0
    %v3097 = vadd.f32 %v2908, %v3096
    %v3098 = vpop.f32.mrb[0].mxu0
    %v3099 = vpop.f32.mrb[0].mxu0
    %v3100 = vadd.f32 %v2908, %v3099
    %v3101 = vpop.f32.mrb[0].mxu0
    %3102 = vmatprep.mubr.bf16.mxu0 0
    %3103 = vmatmul.mubr.bf16.gmra.mrb[0].mxu0 %v2885
    %v3104 = vpop.f32.mrb[0].mxu0
    %v3105 = vadd.f32 %v2908, %v3104
    %v3106 = vpop.f32.mrb[0].mxu0
    %v3107 = vpop.f32.mrb[0].mxu0
    %v3108 = vadd.f32 %v2908, %v3107
    %v3109 = vpop.f32.mrb[0].mxu0
    %3110 = vmatprep.mubr.bf16.mxu0 0
    %3111 = vmatmul.mubr.bf16.gmra.mrb[0].mxu0 %v2886
    %v3112 = vpop.f32.mrb[0].mxu0
    %v3113 = vadd.f32 %v2908, %v3112
    %v3114 = vpop.f32.mrb[0].mxu0
    %v3115 = vpop.f32.mrb[0].mxu0
    %v3116 = vadd.f32 %v2908, %v3115
    %v3117 = vpop.f32.mrb[0].mxu0
    %3118 = vdwg.mxu0
    %v3119 = vmax.f32 %v2993, 0.0
    %v3120 = vmax.f32 %v2996, 0.0
    %v3121 = vmax.f32 %v3001, 0.0
    %v3122 = vmax.f32 %v3004, 0.0
    %v3123 = vmax.f32 %v3009, 0.0
    %v3124 = vmax.f32 %v3012, 0.0
    %v3125 = vmax.f32 %v3017, 0.0
    %v3126 = vmax.f32 %v3020, 0.0
    %v3127 = vmax.f32 %v3025, 0.0
    %v3128 = vmax.f32 %v3028, 0.0
    %v3129 = vmax.f32 %v3033, 0.0
    %v3130 = vmax.f32 %v3036, 0.0
    %v3131 = vmax.f32 %v3041, 0.0
    %v3132 = vmax.f32 %v3044, 0.0
    %v3133 = vmax.f32 %v3049, 0.0
    %v3134 = vmax.f32 %v3052, 0.0
    %v3135 = vmax.f32 %v3057, 0.0
    %v3136 = vmax.f32 %v3060, 0.0
    %v3137 = vmax.f32 %v3065, 0.0
    %v3138 = vmax.f32 %v3068, 0.0
    %v3139 = vmax.f32 %v3073, 0.0
    %v3140 = vmax.f32 %v3076, 0.0
    %v3141 = vmax.f32 %v3081, 0.0
    %v3142 = vmax.f32 %v3084, 0.0
    %v3143 = vmax.f32 %v3089, 0.0
    %v3144 = vmax.f32 %v3092, 0.0
    %v3145 = vmax.f32 %v3097, 0.0
    %v3146 = vmax.f32 %v3100, 0.0
    %v3147 = vmax.f32 %v3105, 0.0
    %v3148 = vmax.f32 %v3108, 0.0
    %v3149 = vmax.f32 %v3113, 0.0
    %v3150 = vmax.f32 %v3116, 0.0
    %v3151 = vpack.c.bf16 %v3120, %v3119
    %v3152 = vpack.c.bf16 %v3122, %v3121
    %v3153 = vpack.c.bf16 %v3124, %v3123
    %v3154 = vpack.c.bf16 %v3126, %v3125
    %v3155 = vpack.c.bf16 %v3128, %v3127
    %v3156 = vpack.c.bf16 %v3130, %v3129
    %v3157 = vpack.c.bf16 %v3132, %v3131
    %v3158 = vpack.c.bf16 %v3134, %v3133
    %v3159 = vpack.c.bf16 %v3136, %v3135
    %v3160 = vpack.c.bf16 %v3138, %v3137
    %v3161 = vpack.c.bf16 %v3140, %v3139
    %v3162 = vpack.c.bf16 %v3142, %v3141
    %v3163 = vpack.c.bf16 %v3144, %v3143
    %v3164 = vpack.c.bf16 %v3146, %v3145
    %v3165 = vpack.c.bf16 %v3148, %v3147
    %v3166 = vpack.c.bf16 %v3150, %v3149
    %v3167 = vld [vmem:[%s11] sm:$0x1]
    %s3168 = sld [smem:[#allocation2]]
    %v3169 = vstv %s3168
    %3170 = vmatprep.subr.bf16.mxu0 0
    %3171 = vmatpush1.bf16.xpose.msra.mxu0 %v3151
    %3172 = vmatprep.subr.bf16.mxu0 0
    %3173 = vmatpush1.bf16.xpose.msra.mxu0 %v3152
    %3174 = vmatprep.subr.bf16.mxu0 0
    %3175 = vmatpush1.bf16.xpose.msra.mxu0 %v3153
    %3176 = vmatprep.subr.bf16.mxu0 0
    %3177 = vmatpush1.bf16.xpose.msra.mxu0 %v3154
    %3178 = vmatprep.subr.bf16.mxu0 0
    %3179 = vmatpush1.bf16.xpose.msra.mxu0 %v3155
    %3180 = vmatprep.subr.bf16.mxu0 0
    %3181 = vmatpush1.bf16.xpose.msra.mxu0 %v3156
    %3182 = vmatprep.subr.bf16.mxu0 0
    %3183 = vmatpush1.bf16.xpose.msra.mxu0 %v3157
    %3184 = vmatprep.subr.bf16.mxu0 0
    %3185 = vmatpush1.bf16.xpose.msra.mxu0 %v3158
    %3186 = vmatprep.subr.bf16.mxu0 0
    %3187 = vmatpush1.bf16.xpose.msra.mxu0 %v3159
    %3188 = vmatprep.subr.bf16.mxu0 0
    %3189 = vmatpush1.bf16.xpose.msra.mxu0 %v3160
    %3190 = vmatprep.subr.bf16.mxu0 0
    %3191 = vmatpush1.bf16.xpose.msra.mxu0 %v3161
    %3192 = vmatprep.subr.bf16.mxu0 0
    %3193 = vmatpush1.bf16.xpose.msra.mxu0 %v3162
    %3194 = vmatprep.subr.bf16.mxu0 0
    %3195 = vmatpush1.bf16.xpose.msra.mxu0 %v3163
    %3196 = vmatprep.subr.bf16.mxu0 0
    %3197 = vmatpush1.bf16.xpose.msra.mxu0 %v3164
    %3198 = vmatprep.subr.bf16.mxu0 0
    %3199 = vmatpush1.bf16.xpose.msra.mxu0 %v3165
    %3200 = vmatprep.subr.bf16.mxu0 0
    %3201 = vmatpush1.bf16.xpose.msra.mxu0 %v3166
    %3202 = vmatprep.mubr.bf16.mxu0 0
    %3203 = vmatmul.mubr.bf16.gmra.mrb[0].mxu0 %v3167
    %v3204 = vpop.f32.mrb[0].mxu0
    %v3205 = vadd.f32 %v3169, %v3204
    %v3206 = vpop.f32.mrb[0].mxu0
    %v3207 = vadd.f32 %v3169, %v3206
    %v3208 = vpop.f32.mrb[0].mxu0
    %v3209 = vpop.f32.mrb[0].mxu0
    %3210 = vdwg.mxu0
    %v3213 = vcombine.low %v3205, %v3207
    %v3215 = vunpack.c.l.s4 1966171168
    %v3216 = vunpack.c.0.s8 %v3215
    %v3217 = vlaneseq
    %v3218 = vshrl.u32 %v3217, 7
    %v3219 = vsub.s32 %v3216, %v3218
    %v3220 = vrot.slane %v3213, %v3219
    %v3222 = vunpack.c.l.s4 1966171168
    %v3223 = vunpack.c.0.s8 %v3222
    %v3224 = vlaneseq
    %v3225 = vshrl.u32 %v3224, 7
    %v3226 = vsub.s32 %v3223, %v3225
    %v3227 = vrot.slane %v3220, %v3226
    %v3229 = vlaneseq
    %vm3230 = vcmp.ge.s32.totalorder %v3229, 0
    %vm3231 = vcmp.lt.s32.totalorder %v3229, 256
    %vm3232 = vmand %vm3230, %vm3231
    %3233 = vst.msk [vmem:[#allocation18] sm:$0x3] %vm3232, %v3227
    // Predicated region
    $region90: #{tpu_custom_call.1} parent=1 // pred_check
      _
    $region91: #{tpu_custom_call.1} parent=1 // pred_check_branch
      %3235 = sbr.rel (0) target = $region93
    $region92: #{tpu_custom_call.1} parent=1 // pred_region
      %s3237 = ssub.s32 32, 32
      %3238 = vsyncadd [#allocation5], %s3237
      %s3240 = sshll.u32 [#allocation18], 4
      %s3241 = int_to_ptr.vmem [resolvable:$true] %s3240
      %3243 = dma.vmem_to_hbm [thread:$0]  %s3241, 32, %s13, [#allocation5]
    $region93: #{tpu_custom_call.1} parent=1 // pred_fallthru
      _
    // Predicated region
    $region94: #{tpu_custom_call.1} parent=1 // pred_check
      _
    $region95: #{tpu_custom_call.1} parent=1 // pred_check_branch
      %3245 = sbr.rel (0) target = $region97
    $region96: #{tpu_custom_call.1} parent=1 // pred_region
      %3246 = dma.done [#allocation5], 32
    $region97: #{tpu_custom_call.1} parent=1 // pred_fallthru
      _
    %3247 = vsyncpa [#allocation4], 1
    %3248 = vsyncpa [#allocation7], 1
    %3249 = vsyncpa [#allocation10], 1
    %3250 = vsyncpa [#allocation13], 1
    %3251 = vsyncpa [#allocation16], 1
    %3252 = vsyncpa [#allocation5], 1

</llo_original>
